<compile_context>
chip_gen: v7x
topology: tpu7x:2x2x1
jax: 0.10.0
libtpu: 0.0.40
codegen_flags: <defaults>
</compile_context>

<pallas_src>
import functools

import numpy as np
import jax
import jax.numpy as jnp
from jax.experimental import pallas as pl
from jax.experimental.pallas import tpu as pltpu

# ------------------------- small, deterministic config -------------------------
TRANS_DIM = 128                                          # config.trans_dim
NUM_QUERY = 16                                           # config.num_query
NUM_PRED = 64                                            # config.num_pred
FOLD_STEP = int((NUM_PRED // NUM_QUERY) ** 0.5 + 0.5)    # 2
NUM_SAMPLE = FOLD_STEP * FOLD_STEP                       # 4
FOLD_HIDDEN = 256                                        # Fold(hidden_dim=256)
GLOB_DIM = 1024                                          # increase_dim width
INC_CHUNK = 256                                          # streamed chunk of GLOB_DIM
BN_EPS = 1e-5
OUT_PAD = 128                                            # lane-dense padding for 3-ch outputs


# =============================== fused Pallas kernel ===========================
def _pointr_kernel(q_ref, c_ref,
                   inc_w1_ref, inc_s1_ref, inc_t1_ref, inc_w2_ref, inc_b2_ref,
                   rm_wg_ref, rm_wq_ref, rm_wc_ref, rm_b_ref,
                   f1_wf_ref, f1_s1_ref, f1_t1s_ref,
                   f1_w2_ref, f1_s2_ref, f1_t2_ref, f1_w3_ref, f1_b3_ref,
                   f2_wd_ref, f2_wf_ref, f2_s1_ref, f2_t1_ref,
                   f2_w2_ref, f2_s2_ref, f2_t2_ref, f2_w3_ref, f2_b3_ref,
                   out_ref, g_acc, fold_scr, *, B, M, S):
    bf16 = jnp.bfloat16
    f32 = jnp.float32
    BM = B * M
    C = TRANS_DIM

    k = pl.program_id(0)
    nk = pl.num_programs(0)

    qb = q_ref[...].astype(bf16)                                    # (BM, C)

    # ---- increase_dim, streamed over GLOB_DIM chunks -------------------------
    # g = LeakyReLU(BN(q @ W1)) @ W2  is accumulated chunk-by-chunk so the 2 MiB
    # inc_w2 DMA overlaps with the per-chunk matmuls.
    @pl.when(k == 0)
    def _():
        g_acc[...] = jnp.zeros_like(g_acc)

    h = jnp.dot(qb, inc_w1_ref[...], preferred_element_type=f32)    # (BM, KC)
    h = h * inc_s1_ref[...] + inc_t1_ref[...]                       # folded BN (chunk)
    h = jnp.where(h > 0, h, 0.2 * h)                                # LeakyReLU(0.2)
    g_acc[...] += jnp.dot(h.astype(bf16), inc_w2_ref[...],
                          preferred_element_type=f32)               # (BM, 1024)

    # ---- reduce_map + FoldingNet tail on the last chunk -----------------------
    @pl.when(k == nk - 1)
    def _():
        g = g_acc[...] + inc_b2_ref[...]                            # (BM, 1024)

        # per-batch max over the M queries (tile-aligned: M is a multiple of 8),
        # one (B,1024)@(1024,C) dot, then sublane-broadcast back to (BM, C).
        gf = jnp.max(g.reshape(B, M, GLOB_DIM), axis=1)             # (B, 1024)
        gc = jnp.dot(gf.astype(bf16), rm_wg_ref[...],
                     preferred_element_type=f32)                    # (B, C)
        g_contrib = jnp.broadcast_to(gc[:, None, :], (B, M, C)).reshape(BM, C)

        # coarse (3-dim) part of reduce_map as VPU broadcast-FMAs (exact f32).
        c = c_ref[...]                                              # (BM, 3)
        wc = rm_wc_ref[...]                                         # (3, C)
        c_contrib = (c[:, 0:1] * wc[0:1, :]
                     + c[:, 1:2] * wc[1:2, :]
                     + c[:, 2:3] * wc[2:3, :])                      # (BM, C)

        rf = (g_contrib
              + jnp.dot(qb, rm_wq_ref[...], preferred_element_type=f32)
              + c_contrib + rm_b_ref[...])                          # (BM, C)
        rfb = rf.astype(bf16)

        # feature contributions computed once at BM rows
        f1_feat = jnp.dot(rfb, f1_wf_ref[...], preferred_element_type=f32)   # (BM, H)
        f2_feat = jnp.dot(rfb, f2_wf_ref[...], preferred_element_type=f32)   # (BM, H)

        # ---- folding1: seed-part folded into per-s bias table f1_t1s ----
        f1_scaled = f1_feat * f1_s1_ref[...]                        # hoisted, shared by all s
        for s in range(S):
            fold_scr[s * BM:(s + 1) * BM, :] = jnp.maximum(
                f1_scaled + f1_t1s_ref[s:s + 1, :], 0.0)

        h1 = jnp.dot(fold_scr[...].astype(bf16), f1_w2_ref[...],
                     preferred_element_type=f32)                    # (S*BM, H2)
        h1 = jnp.maximum(h1 * f1_s2_ref[...] + f1_t2_ref[...], 0.0)
        fd1 = jnp.dot(h1.astype(bf16), f1_w3_ref[...],
                      preferred_element_type=f32) + f1_b3_ref[...]  # (S*BM, 128) lane-padded

        # ---- folding2 ----
        hd = jnp.dot(fd1.astype(bf16), f2_wd_ref[...],
                     preferred_element_type=f32)                    # (S*BM, H)
        f2s = f2_s1_ref[...]
        f2t = f2_t1_ref[...]
        for s in range(S):
            fold_scr[s * BM:(s + 1) * BM, :] = jnp.maximum(
                (hd[s * BM:(s + 1) * BM, :] + f2_feat) * f2s + f2t, 0.0)

        h2 = jnp.dot(fold_scr[...].astype(bf16), f2_w2_ref[...],
                     preferred_element_type=f32)
        h2 = jnp.maximum(h2 * f2_s2_ref[...] + f2_t2_ref[...], 0.0)
        out_ref[...] = (jnp.dot(h2.astype(bf16), f2_w3_ref[...],
                                preferred_element_type=f32)
                        + f2_b3_ref[...])                           # lane-dense store


# ================================= wrapper =====================================
def pointr_fused_apply(q, coarse, p):
    B, M, C = q.shape
    S = NUM_SAMPLE
    BM = B * M
    KC = INC_CHUNK
    NK = GLOB_DIM // KC

    args = (
        q.reshape(BM, C), coarse.reshape(BM, 3),
        p["inc_w1"], p["inc_s1"], p["inc_t1"], p["inc_w2"], p["inc_b2"],
        p["rm_wg"], p["rm_wq"], p["rm_wc"], p["rm_b"],
        p["f1_wf"], p["f1_s1"], p["f1_t1s"],
        p["f1_w2"], p["f1_s2"], p["f1_t2"], p["f1_w3"], p["f1_b3"],
        p["f2_wd"], p["f2_wf"], p["f2_s1"], p["f2_t1"],
        p["f2_w2"], p["f2_s2"], p["f2_t2"], p["f2_w3"], p["f2_b3"],
    )

    const = lambda a: pl.BlockSpec(a.shape, lambda k: (0, 0))
    in_specs = [
        const(args[0]),                                   # q rows
        const(args[1]),                                   # coarse rows
        pl.BlockSpec((C, KC), lambda k: (0, k)),          # inc_w1, streamed on N
        pl.BlockSpec((1, KC), lambda k: (0, k)),          # inc_s1 (chunked BN scale)
        pl.BlockSpec((1, KC), lambda k: (0, k)),          # inc_t1 (chunked BN bias)
        pl.BlockSpec((KC, GLOB_DIM), lambda k: (k, 0)),   # inc_w2, streamed on K
    ] + [const(a) for a in args[6:]]                      # all other weights fetched once

    fd2 = pl.pallas_call(
        functools.partial(_pointr_kernel, B=B, M=M, S=S),
        out_shape=jax.ShapeDtypeStruct((S * BM, OUT_PAD), jnp.float32),
        grid=(NK,),
        in_specs=in_specs,
        out_specs=pl.BlockSpec((S * BM, OUT_PAD), lambda k: (0, 0)),
        scratch_shapes=[pltpu.VMEM((BM, GLOB_DIM), jnp.float32),       # g accumulator
                        pltpu.VMEM((S * BM, FOLD_HIDDEN), jnp.float32)],  # fold activations
        compiler_params=pltpu.CompilerParams(dimension_semantics=("arbitrary",)),
    )(*args)
    return fd2[:, :3]               # row index = s*B*M + b*M + m


# ======================= deterministic parameter creation ======================
def _fold_bn(conv_b, gamma, beta, mean, var):
    scale = gamma / jnp.sqrt(var + BN_EPS)
    bias = (conv_b - mean) * scale + beta
    return scale[None, :].astype(jnp.float32), bias[None, :].astype(jnp.float32)


def init_params(key):
    keys = iter(jax.random.split(key, 64))
    nrm = lambda shape, s=0.05: s * jax.random.normal(next(keys), shape, dtype=jnp.float32)

    def bn(c):
        gamma = 1.0 + 0.1 * jax.random.normal(next(keys), (c,), dtype=jnp.float32)
        beta = 0.02 * jax.random.normal(next(keys), (c,), dtype=jnp.float32)
        mean = 0.05 * jax.random.normal(next(keys), (c,), dtype=jnp.float32)
        var = 0.9 + 0.2 * jax.random.uniform(next(keys), (c,), dtype=jnp.float32)
        return gamma, beta, mean, var

    pad_cols = lambda w: jnp.pad(w, ((0, 0), (0, OUT_PAD - w.shape[1])))
    pad_rows = lambda w: jnp.pad(w, ((0, OUT_PAD - w.shape[0]), (0, 0)))

    C, H, H2 = TRANS_DIM, FOLD_HIDDEN, FOLD_HIDDEN // 2
    bf16 = jnp.bfloat16
    p = {}

    # --- base_model stub (PCTransformer replacement) ---
    p["query_embed"] = nrm((NUM_QUERY, C), 0.5)
    p["w_center"] = nrm((3, C), 0.5)
    p["w_coarse"] = nrm((C, 3), 0.1)

    # --- increase_dim: Conv1d(C,1024,1) BN LeakyReLU Conv1d(1024,1024,1) ---
    p["inc_w1"] = nrm((C, GLOB_DIM)).astype(bf16)
    b1 = nrm((GLOB_DIM,), 0.01)
    p["inc_s1"], p["inc_t1"] = _fold_bn(b1, *bn(GLOB_DIM))
    p["inc_w2"] = nrm((GLOB_DIM, GLOB_DIM)).astype(bf16)
    p["inc_b2"] = nrm((GLOB_DIM,), 0.01)[None, :]

    # --- reduce_map: Linear(C + 1027, C), split over [global | q | coarse] ---
    p["rm_wg"] = nrm((GLOB_DIM, C)).astype(bf16)
    p["rm_wq"] = nrm((C, C)).astype(bf16)
    p["rm_wc"] = nrm((3, C))                     # tiny; applied as f32 VPU FMAs
    p["rm_b"] = nrm((C,), 0.01)[None, :]

    # folding_seed: the S distinct (a, b) rows, row s -> (a_s, b_s)
    lin = jnp.linspace(-1.0, 1.0, FOLD_STEP)
    a = jnp.broadcast_to(lin[None, :], (FOLD_STEP, FOLD_STEP)).reshape(-1)
    b = jnp.broadcast_to(lin[:, None], (FOLD_STEP, FOLD_STEP)).reshape(-1)
    seed_rows = jnp.stack([a, b], axis=1).astype(jnp.float32)            # (S, 2)

    # --- folding1: Conv1d(C+2,H) BN ReLU Conv1d(H,H2) BN ReLU Conv1d(H2,3) ---
    f1_ws = nrm((2, H))
    f1_s1, f1_t1 = _fold_bn(nrm((H,), 0.01), *bn(H))
    p["f1_s1"] = f1_s1
    # seed contribution + BN folded into a per-sample bias table (S, H)
    p["f1_t1s"] = (seed_rows @ f1_ws) * f1_s1 + f1_t1
    p["f1_wf"] = nrm((C, H)).astype(bf16)
    p["f1_w2"] = nrm((H, H2)).astype(bf16)
    p["f1_s2"], p["f1_t2"] = _fold_bn(nrm((H2,), 0.01), *bn(H2))
    p["f1_w3"] = pad_cols(nrm((H2, 3))).astype(bf16)                     # (H2, 128)
    p["f1_b3"] = pad_cols(nrm((3,), 0.01)[None, :])                      # (1, 128)

    # --- folding2: Conv1d(C+3,H) BN ReLU Conv1d(H,H2) BN ReLU Conv1d(H2,3) ---
    p["f2_wd"] = pad_rows(nrm((3, H))).astype(bf16)                      # (128, H), rows>=3 zero
    p["f2_wf"] = nrm((C, H)).astype(bf16)
    p["f2_s1"], p["f2_t1"] = _fold_bn(nrm((H,), 0.01), *bn(H))
    p["f2_w2"] = nrm((H, H2)).astype(bf16)
    p["f2_s2"], p["f2_t2"] = _fold_bn(nrm((H2,), 0.01), *bn(H2))
    p["f2_w3"] = pad_cols(nrm((H2, 3))).astype(bf16)                     # (H2, 128)
    p["f2_b3"] = pad_cols(nrm((3,), 0.01)[None, :])                      # (1, 128)
    return p


# ================================= forward =====================================
def base_model_stub(p, xyz):
    # TODO(synk): stand-in for PCTransformer(in_chans=3, embed_dim=trans_dim, ...)
    center = jnp.mean(xyz, axis=1)                                       # (B, 3)
    q = jnp.tanh(p["query_embed"][None, :, :] + center[:, None, :] @ p["w_center"])
    coarse = q @ p["w_coarse"]                                           # (B, M, 3)
    return q, coarse


def _tail(fd2_rows, coarse, min_gt, max_gt, value_std_pc, value_centroid):
    B, M = coarse.shape[0], coarse.shape[1]
    # fold rows are s-major: row = s*B*M + b*M + m
    rel = fd2_rows.reshape(NUM_SAMPLE, B, M, 3).transpose(1, 2, 0, 3)    # (B, M, S, 3)
    rebuild_points = (rel + coarse[:, :, None, :]).reshape(B, M * NUM_SAMPLE, 3)
    centroid = value_centroid.reshape(B, 1, 3)
    max_distance = value_std_pc.reshape(B, 1, 1)
    de_point = rebuild_points * max_distance + centroid
    min_d = min_gt.reshape(B, 1, 1)
    max_d = max_gt.reshape(B, 1, 1)
    npoints = (de_point - min_d) / (max_d + 1.0 - min_d)
    return npoints, rebuild_points


def pointr_forward(p, xyz, min_gt, max_gt, value_std_pc, value_centroid):
    q, coarse = base_model_stub(p, xyz)
    fd2 = pointr_fused_apply(q, coarse, p)                               # (B*M*S, 3)
    # TODO(synk): psr_grid = DPSR(Encode2Points(Npoints)) omitted (external modules)
    return _tail(fd2, coarse, min_gt, max_gt, value_std_pc, value_centroid)


# ======================== pure-JAX reference (for check) =======================
def reference_forward(p, xyz, min_gt, max_gt, value_std_pc, value_centroid):
    f32, bf16 = jnp.float32, jnp.bfloat16
    q, coarse = base_model_stub(p, xyz)
    B, M, C = q.shape
    BM, S = B * M, NUM_SAMPLE
    qf = q.reshape(BM, C)
    cf = coarse.reshape(BM, 3)
    qb = qf.astype(bf16)

    h = jnp.dot(qb, p["inc_w1"], preferred_element_type=f32) * p["inc_s1"] + p["inc_t1"]
    h = jnp.where(h > 0, h, 0.2 * h)
    g = jnp.dot(h.astype(bf16), p["inc_w2"], preferred_element_type=f32) + p["inc_b2"]

    gf = jnp.max(g.reshape(B, M, GLOB_DIM), axis=1)                      # (B, 1024)
    gc = jnp.dot(gf.astype(bf16), p["rm_wg"], preferred_element_type=f32)
    g_contrib = jnp.repeat(gc, M, axis=0)                                # (BM, C)
    wc = p["rm_wc"]
    c_contrib = (cf[:, 0:1] * wc[0:1, :] + cf[:, 1:2] * wc[1:2, :]
                 + cf[:, 2:3] * wc[2:3, :])
    rf = (g_contrib + jnp.dot(qb, p["rm_wq"], preferred_element_type=f32)
          + c_contrib + p["rm_b"])
    rfb = rf.astype(bf16)

    f1_feat = jnp.dot(rfb, p["f1_wf"], preferred_element_type=f32)       # (BM, H)
    f2_feat = jnp.dot(rfb, p["f2_wf"], preferred_element_type=f32)       # (BM, H)

    h1 = jnp.concatenate(
        [jnp.maximum(f1_feat * p["f1_s1"] + p["f1_t1s"][s:s + 1, :], 0.0)
         for s in range(S)], axis=0)                                     # (S*BM, H)
    h = jnp.dot(h1.astype(bf16), p["f1_w2"], preferred_element_type=f32)
    h = jnp.maximum(h * p["f1_s2"] + p["f1_t2"], 0.0)
    fd1 = jnp.dot(h.astype(bf16), p["f1_w3"], preferred_element_type=f32) + p["f1_b3"]

    hd = jnp.dot(fd1.astype(bf16), p["f2_wd"], preferred_element_type=f32)
    h2 = jnp.concatenate(
        [jnp.maximum((hd[s * BM:(s + 1) * BM, :] + f2_feat) * p["f2_s1"] + p["f2_t1"], 0.0)
         for s in range(S)], axis=0)
    h = jnp.dot(h2.astype(bf16), p["f2_w2"], preferred_element_type=f32)
    h = jnp.maximum(h * p["f2_s2"] + p["f2_t2"], 0.0)
    fd2 = jnp.dot(h.astype(bf16), p["f2_w3"], preferred_element_type=f32) + p["f2_b3"]
    return _tail(fd2[:, :3], coarse, min_gt, max_gt, value_std_pc, value_centroid)


# =================================== main ======================================
if __name__ == "__main__":
    key = jax.random.PRNGKey(0)
    kp, kx, k1, k2, k3, k4 = jax.random.split(key, 6)
    params = init_params(kp)

    B, NPTS = 2, 64
    xyz = jax.random.normal(kx, (B, NPTS, 3), dtype=jnp.float32)
    min_gt = -1.0 + 0.1 * jax.random.normal(k1, (B,), dtype=jnp.float32)
    max_gt = 1.0 + 0.1 * jax.random.normal(k2, (B,), dtype=jnp.float32)
    value_std_pc = 1.0 + 0.1 * jax.random.uniform(k3, (B,), dtype=jnp.float32)
    value_centroid = 0.1 * jax.random.normal(k4, (B, 3), dtype=jnp.float32)

    fwd = jax.jit(pointr_forward)
    npoints, rebuild_points = fwd(params, xyz, min_gt, max_gt, value_std_pc, value_centroid)
    jax.block_until_ready((npoints, rebuild_points))

    npoints_ref, rebuild_ref = reference_forward(
        params, xyz, min_gt, max_gt, value_std_pc, value_centroid)
    np.testing.assert_allclose(np.asarray(rebuild_points), np.asarray(rebuild_ref),
                               rtol=3e-2, atol=3e-2)
    np.testing.assert_allclose(np.asarray(npoints), np.asarray(npoints_ref),
                               rtol=3e-2, atol=3e-2)

    assert rebuild_points.shape == (B, NUM_QUERY * NUM_SAMPLE, 3)
    assert npoints.shape == (B, NUM_QUERY * NUM_SAMPLE, 3)
    print("KERNEL_OK")
</pallas_src>

<mosaic_0001>
module attributes {stable_mosaic.version = 11 : i64} {
  func.func @_pointr_kernel(%arg0: i32, %arg1: memref<32x128xf32, #tpu.memory_space<vmem>>, %arg2: memref<32x3xf32, #tpu.memory_space<vmem>>, %arg3: memref<128x256xbf16, #tpu.memory_space<vmem>>, %arg4: memref<1x256xf32, #tpu.memory_space<vmem>>, %arg5: memref<1x256xf32, #tpu.memory_space<vmem>>, %arg6: memref<256x1024xbf16, #tpu.memory_space<vmem>>, %arg7: memref<1x1024xf32, #tpu.memory_space<vmem>>, %arg8: memref<1024x128xbf16, #tpu.memory_space<vmem>>, %arg9: memref<128x128xbf16, #tpu.memory_space<vmem>>, %arg10: memref<3x128xf32, #tpu.memory_space<vmem>>, %arg11: memref<1x128xf32, #tpu.memory_space<vmem>>, %arg12: memref<128x256xbf16, #tpu.memory_space<vmem>>, %arg13: memref<1x256xf32, #tpu.memory_space<vmem>>, %arg14: memref<4x256xf32, #tpu.memory_space<vmem>>, %arg15: memref<256x128xbf16, #tpu.memory_space<vmem>>, %arg16: memref<1x128xf32, #tpu.memory_space<vmem>>, %arg17: memref<1x128xf32, #tpu.memory_space<vmem>>, %arg18: memref<128x128xbf16, #tpu.memory_space<vmem>>, %arg19: memref<1x128xf32, #tpu.memory_space<vmem>>, %arg20: memref<128x256xbf16, #tpu.memory_space<vmem>>, %arg21: memref<128x256xbf16, #tpu.memory_space<vmem>>, %arg22: memref<1x256xf32, #tpu.memory_space<vmem>>, %arg23: memref<1x256xf32, #tpu.memory_space<vmem>>, %arg24: memref<256x128xbf16, #tpu.memory_space<vmem>>, %arg25: memref<1x128xf32, #tpu.memory_space<vmem>>, %arg26: memref<1x128xf32, #tpu.memory_space<vmem>>, %arg27: memref<128x128xbf16, #tpu.memory_space<vmem>>, %arg28: memref<1x128xf32, #tpu.memory_space<vmem>>, %arg29: memref<128x128xf32, #tpu.memory_space<vmem>>, %arg30: memref<32x1024xf32, #tpu.memory_space<vmem>>, %arg31: memref<128x256xf32, #tpu.memory_space<vmem>>) attributes {dimension_semantics = [#tpu.dimension_semantics<arbitrary>], iteration_bounds = array<i64: 4>, scalar_prefetch = 0 : i64, scratch_operands = 2 : i64, tpu.core_type = #tpu.core_type<tc>, window_params = [{pipeline_mode = #tpu.pipeline_mode<synchronous>, transform_indices = @transform_0, window_bounds = array<i64: 32, 128>}, {pipeline_mode = #tpu.pipeline_mode<synchronous>, transform_indices = @transform_1, window_bounds = array<i64: 32, 3>}, {transform_indices = @transform_2, window_bounds = array<i64: 128, 256>}, {transform_indices = @transform_3, window_bounds = array<i64: 1, 256>}, {transform_indices = @transform_4, window_bounds = array<i64: 1, 256>}, {transform_indices = @transform_5, window_bounds = array<i64: 256, 1024>}, {pipeline_mode = #tpu.pipeline_mode<synchronous>, transform_indices = @transform_6, window_bounds = array<i64: 1, 1024>}, {pipeline_mode = #tpu.pipeline_mode<synchronous>, transform_indices = @transform_7, window_bounds = array<i64: 1024, 128>}, {pipeline_mode = #tpu.pipeline_mode<synchronous>, transform_indices = @transform_8, window_bounds = array<i64: 128, 128>}, {pipeline_mode = #tpu.pipeline_mode<synchronous>, transform_indices = @transform_9, window_bounds = array<i64: 3, 128>}, {pipeline_mode = #tpu.pipeline_mode<synchronous>, transform_indices = @transform_10, window_bounds = array<i64: 1, 128>}, {pipeline_mode = #tpu.pipeline_mode<synchronous>, transform_indices = @transform_11, window_bounds = array<i64: 128, 256>}, {pipeline_mode = #tpu.pipeline_mode<synchronous>, transform_indices = @transform_12, window_bounds = array<i64: 1, 256>}, {pipeline_mode = #tpu.pipeline_mode<synchronous>, transform_indices = @transform_13, window_bounds = array<i64: 4, 256>}, {pipeline_mode = #tpu.pipeline_mode<synchronous>, transform_indices = @transform_14, window_bounds = array<i64: 256, 128>}, {pipeline_mode = #tpu.pipeline_mode<synchronous>, transform_indices = @transform_15, window_bounds = array<i64: 1, 128>}, {pipeline_mode = #tpu.pipeline_mode<synchronous>, transform_indices = @transform_16, window_bounds = array<i64: 1, 128>}, {pipeline_mode = #tpu.pipeline_mode<synchronous>, transform_indices = @transform_17, window_bounds = array<i64: 128, 128>}, {pipeline_mode = #tpu.pipeline_mode<synchronous>, transform_indices = @transform_18, window_bounds = array<i64: 1, 128>}, {pipeline_mode = #tpu.pipeline_mode<synchronous>, transform_indices = @transform_19, window_bounds = array<i64: 128, 256>}, {pipeline_mode = #tpu.pipeline_mode<synchronous>, transform_indices = @transform_20, window_bounds = array<i64: 128, 256>}, {pipeline_mode = #tpu.pipeline_mode<synchronous>, transform_indices = @transform_21, window_bounds = array<i64: 1, 256>}, {pipeline_mode = #tpu.pipeline_mode<synchronous>, transform_indices = @transform_22, window_bounds = array<i64: 1, 256>}, {pipeline_mode = #tpu.pipeline_mode<synchronous>, transform_indices = @transform_23, window_bounds = array<i64: 256, 128>}, {pipeline_mode = #tpu.pipeline_mode<synchronous>, transform_indices = @transform_24, window_bounds = array<i64: 1, 128>}, {pipeline_mode = #tpu.pipeline_mode<synchronous>, transform_indices = @transform_25, window_bounds = array<i64: 1, 128>}, {pipeline_mode = #tpu.pipeline_mode<synchronous>, transform_indices = @transform_26, window_bounds = array<i64: 128, 128>}, {pipeline_mode = #tpu.pipeline_mode<synchronous>, transform_indices = @transform_27, window_bounds = array<i64: 1, 128>}, {pipeline_mode = #tpu.pipeline_mode<synchronous>, transform_indices = @transform_28, window_bounds = array<i64: 128, 128>}]} {
    %c0 = arith.constant 0 : index
    %c0_0 = arith.constant 0 : index
    %0 = vector.load %arg1[%c0, %c0_0] : memref<32x128xf32, #tpu.memory_space<vmem>>, vector<32x128xf32>
    %1 = arith.truncf %0 : vector<32x128xf32> to vector<32x128xbf16>
    %c0_i32 = arith.constant 0 : i32
    %2 = arith.cmpi eq, %arg0, %c0_i32 : i32
    %3 = arith.extui %2 : i1 to i32
    %c0_i32_1 = arith.constant 0 : i32
    %4 = arith.cmpi ne, %3, %c0_i32_1 : i32
    scf.if %4 {
      %cst_18 = arith.constant 0.000000e+00 : f32
      %27 = vector.broadcast %cst_18 : f32 to vector<32x1024xf32>
      %c0_19 = arith.constant 0 : index
      %c0_20 = arith.constant 0 : index
      %28 = vector.load %arg30[%c0_19, %c0_20] : memref<32x1024xf32, #tpu.memory_space<vmem>>, vector<32x1024xf32>
      tpu.vector_store %arg30[%c0_19, %c0_20], %27 {strides = array<i32>} : memref<32x1024xf32, #tpu.memory_space<vmem>>, vector<32x1024xf32>,
    } else {
    }
    %c0_2 = arith.constant 0 : index
    %c0_3 = arith.constant 0 : index
    %5 = vector.load %arg3[%c0_2, %c0_3] : memref<128x256xbf16, #tpu.memory_space<vmem>>, vector<128x256xbf16>
    %cst = arith.constant dense<0.000000e+00> : vector<32x256xf32>
    %6 = tpu.matmul %1, %5, %cst {dimension_numbers = #tpu.dot_dimension_numbers<[1], [0], [0], [1], [0, 0, 1, 1], [], []>} : vector<32x128xbf16>, vector<128x256xbf16>, vector<32x256xf32> -> vector<32x256xf32>
    %c0_4 = arith.constant 0 : index
    %c0_5 = arith.constant 0 : index
    %7 = vector.load %arg4[%c0_4, %c0_5] : memref<1x256xf32, #tpu.memory_space<vmem>>, vector<1x256xf32>
    %8 = vector.broadcast %7 : vector<1x256xf32> to vector<32x256xf32>
    %9 = arith.mulf %6, %8 : vector<32x256xf32>
    %c0_6 = arith.constant 0 : index
    %c0_7 = arith.constant 0 : index
    %10 = vector.load %arg5[%c0_6, %c0_7] : memref<1x256xf32, #tpu.memory_space<vmem>>, vector<1x256xf32>
    %11 = vector.broadcast %10 : vector<1x256xf32> to vector<32x256xf32>
    %12 = arith.addf %9, %11 : vector<32x256xf32>
    %cst_8 = arith.constant 0.000000e+00 : f32
    %13 = vector.broadcast %cst_8 : f32 to vector<32x256xf32>
    %14 = arith.cmpf ogt, %12, %13 : vector<32x256xf32>
    %cst_9 = arith.constant 2.000000e-01 : f32
    %15 = vector.broadcast %cst_9 : f32 to vector<32x256xf32>
    %16 = arith.mulf %15, %12 : vector<32x256xf32>
    %17 = arith.select %14, %12, %16 : vector<32x256xi1>, vector<32x256xf32>
    %c0_10 = arith.constant 0 : index
    %c0_11 = arith.constant 0 : index
    %18 = vector.load %arg30[%c0_10, %c0_11] : memref<32x1024xf32, #tpu.memory_space<vmem>>, vector<32x1024xf32>
    %19 = arith.truncf %17 : vector<32x256xf32> to vector<32x256xbf16>
    %c0_12 = arith.constant 0 : index
    %c0_13 = arith.constant 0 : index
    %20 = vector.load %arg6[%c0_12, %c0_13] : memref<256x1024xbf16, #tpu.memory_space<vmem>>, vector<256x1024xbf16>
    %cst_14 = arith.constant dense<0.000000e+00> : vector<32x1024xf32>
    %21 = tpu.matmul %19, %20, %cst_14 {dimension_numbers = #tpu.dot_dimension_numbers<[1], [0], [0], [1], [0, 0, 1, 1], [], []>} : vector<32x256xbf16>, vector<256x1024xbf16>, vector<32x1024xf32> -> vector<32x1024xf32>
    %22 = arith.addf %18, %21 : vector<32x1024xf32>
    %c0_15 = arith.constant 0 : index
    %c0_16 = arith.constant 0 : index
    %23 = vector.load %arg30[%c0_15, %c0_16] : memref<32x1024xf32, #tpu.memory_space<vmem>>, vector<32x1024xf32>
    tpu.vector_store %arg30[%c0_15, %c0_16], %22 {strides = array<i32>} : memref<32x1024xf32, #tpu.memory_space<vmem>>, vector<32x1024xf32>,
    %c3_i32 = arith.constant 3 : i32
    %24 = arith.cmpi eq, %arg0, %c3_i32 : i32
    %25 = arith.extui %24 : i1 to i32
    %c0_i32_17 = arith.constant 0 : i32
    %26 = arith.cmpi ne, %25, %c0_i32_17 : i32
    scf.if %26 {
      %c0_18 = arith.constant 0 : index
      %c0_19 = arith.constant 0 : index
      %27 = vector.load %arg30[%c0_18, %c0_19] : memref<32x1024xf32, #tpu.memory_space<vmem>>, vector<32x1024xf32>
      %c0_20 = arith.constant 0 : index
      %c0_21 = arith.constant 0 : index
      %28 = vector.load %arg7[%c0_20, %c0_21] : memref<1x1024xf32, #tpu.memory_space<vmem>>, vector<1x1024xf32>
      %29 = vector.broadcast %28 : vector<1x1024xf32> to vector<32x1024xf32>
      %30 = arith.addf %27, %29 : vector<32x1024xf32>
      %31 = vector.shape_cast %30 : vector<32x1024xf32> to vector<2x16x1024xf32>
      %cst_22 = arith.constant dense<0xFF800000> : vector<2x1024xf32>
      %32 = vector.multi_reduction <maximumf>, %31, %cst_22 [1] : vector<2x16x1024xf32> to vector<2x1024xf32>
      %33 = arith.truncf %32 : vector<2x1024xf32> to vector<2x1024xbf16>
      %c0_23 = arith.constant 0 : index
      %c0_24 = arith.constant 0 : index
      %34 = vector.load %arg8[%c0_23, %c0_24] : memref<1024x128xbf16, #tpu.memory_space<vmem>>, vector<1024x128xbf16>
      %cst_25 = arith.constant dense<0.000000e+00> : vector<2x128xf32>
      %35 = tpu.matmul %33, %34, %cst_25 {dimension_numbers = #tpu.dot_dimension_numbers<[1], [0], [0], [1], [0, 0, 1, 1], [], []>} : vector<2x1024xbf16>, vector<1024x128xbf16>, vector<2x128xf32> -> vector<2x128xf32>
      %36 = vector.shape_cast %35 : vector<2x128xf32> to vector<2x1x128xf32>
      %37 = vector.shape_cast %36 : vector<2x1x128xf32> to vector<2x1x128xf32>
      %38 = vector.broadcast %37 : vector<2x1x128xf32> to vector<2x16x128xf32>
      %39 = vector.shape_cast %38 : vector<2x16x128xf32> to vector<32x128xf32>
      %c0_26 = arith.constant 0 : index
      %c0_27 = arith.constant 0 : index
      %40 = vector.load %arg2[%c0_26, %c0_27] : memref<32x3xf32, #tpu.memory_space<vmem>>, vector<32x3xf32>
      %c0_28 = arith.constant 0 : index
      %c0_29 = arith.constant 0 : index
      %41 = vector.load %arg10[%c0_28, %c0_29] : memref<3x128xf32, #tpu.memory_space<vmem>>, vector<3x128xf32>
      %42 = vector.extract_strided_slice %40 {offsets = [0, 0], sizes = [32, 1], strides = [1, 1]} : vector<32x3xf32> to vector<32x1xf32>
      %43 = vector.extract_strided_slice %41 {offsets = [0, 0], sizes = [1, 128], strides = [1, 1]} : vector<3x128xf32> to vector<1x128xf32>
      %44 = vector.broadcast %42 : vector<32x1xf32> to vector<32x128xf32>
      %45 = vector.broadcast %43 : vector<1x128xf32> to vector<32x128xf32>
      %46 = arith.mulf %44, %45 : vector<32x128xf32>
      %47 = vector.extract_strided_slice %40 {offsets = [0, 1], sizes = [32, 1], strides = [1, 1]} : vector<32x3xf32> to vector<32x1xf32>
      %48 = vector.extract_strided_slice %41 {offsets = [1, 0], sizes = [1, 128], strides = [1, 1]} : vector<3x128xf32> to vector<1x128xf32>
      %49 = vector.broadcast %47 : vector<32x1xf32> to vector<32x128xf32>
      %50 = vector.broadcast %48 : vector<1x128xf32> to vector<32x128xf32>
      %51 = arith.mulf %49, %50 : vector<32x128xf32>
      %52 = arith.addf %46, %51 : vector<32x128xf32>
      %53 = vector.extract_strided_slice %40 {offsets = [0, 2], sizes = [32, 1], strides = [1, 1]} : vector<32x3xf32> to vector<32x1xf32>
      %54 = vector.extract_strided_slice %41 {offsets = [2, 0], sizes = [1, 128], strides = [1, 1]} : vector<3x128xf32> to vector<1x128xf32>
      %55 = vector.broadcast %53 : vector<32x1xf32> to vector<32x128xf32>
      %56 = vector.broadcast %54 : vector<1x128xf32> to vector<32x128xf32>
      %57 = arith.mulf %55, %56 : vector<32x128xf32>
      %58 = arith.addf %52, %57 : vector<32x128xf32>
      %c0_30 = arith.constant 0 : index
      %c0_31 = arith.constant 0 : index
      %59 = vector.load %arg9[%c0_30, %c0_31] : memref<128x128xbf16, #tpu.memory_space<vmem>>, vector<128x128xbf16>
      %cst_32 = arith.constant dense<0.000000e+00> : vector<32x128xf32>
      %60 = tpu.matmul %1, %59, %cst_32 {dimension_numbers = #tpu.dot_dimension_numbers<[1], [0], [0], [1], [0, 0, 1, 1], [], []>} : vector<32x128xbf16>, vector<128x128xbf16>, vector<32x128xf32> -> vector<32x128xf32>
      %61 = arith.addf %39, %60 : vector<32x128xf32>
      %62 = arith.addf %61, %58 : vector<32x128xf32>
      %c0_33 = arith.constant 0 : index
      %c0_34 = arith.constant 0 : index
      %63 = vector.load %arg11[%c0_33, %c0_34] : memref<1x128xf32, #tpu.memory_space<vmem>>, vector<1x128xf32>
      %64 = vector.broadcast %63 : vector<1x128xf32> to vector<32x128xf32>
      %65 = arith.addf %62, %64 : vector<32x128xf32>
      %66 = arith.truncf %65 : vector<32x128xf32> to vector<32x128xbf16>
      %c0_35 = arith.constant 0 : index
      %c0_36 = arith.constant 0 : index
      %67 = vector.load %arg12[%c0_35, %c0_36] : memref<128x256xbf16, #tpu.memory_space<vmem>>, vector<128x256xbf16>
      %cst_37 = arith.constant dense<0.000000e+00> : vector<32x256xf32>
      %68 = tpu.matmul %66, %67, %cst_37 {dimension_numbers = #tpu.dot_dimension_numbers<[1], [0], [0], [1], [0, 0, 1, 1], [], []>} : vector<32x128xbf16>, vector<128x256xbf16>, vector<32x256xf32> -> vector<32x256xf32>
      %c0_38 = arith.constant 0 : index
      %c0_39 = arith.constant 0 : index
      %69 = vector.load %arg21[%c0_38, %c0_39] : memref<128x256xbf16, #tpu.memory_space<vmem>>, vector<128x256xbf16>
      %cst_40 = arith.constant dense<0.000000e+00> : vector<32x256xf32>
      %70 = tpu.matmul %66, %69, %cst_40 {dimension_numbers = #tpu.dot_dimension_numbers<[1], [0], [0], [1], [0, 0, 1, 1], [], []>} : vector<32x128xbf16>, vector<128x256xbf16>, vector<32x256xf32> -> vector<32x256xf32>
      %c0_41 = arith.constant 0 : index
      %c0_42 = arith.constant 0 : index
      %71 = vector.load %arg13[%c0_41, %c0_42] : memref<1x256xf32, #tpu.memory_space<vmem>>, vector<1x256xf32>
      %72 = vector.broadcast %71 : vector<1x256xf32> to vector<32x256xf32>
      %73 = arith.mulf %68, %72 : vector<32x256xf32>
      %c0_43 = arith.constant 0 : index
      %c0_44 = arith.constant 0 : index
      %74 = vector.load %arg14[%c0_43, %c0_44] : memref<4x256xf32, #tpu.memory_space<vmem>>, vector<1x256xf32>
      %75 = vector.broadcast %74 : vector<1x256xf32> to vector<32x256xf32>
      %76 = arith.addf %73, %75 : vector<32x256xf32>
      %cst_45 = arith.constant 0.000000e+00 : f32
      %77 = vector.broadcast %cst_45 : f32 to vector<32x256xf32>
      %78 = arith.maximumf %76, %77 : vector<32x256xf32>
      %c0_46 = arith.constant 0 : index
      %c0_47 = arith.constant 0 : index
      %79 = vector.load %arg31[%c0_46, %c0_47] : memref<128x256xf32, #tpu.memory_space<vmem>>, vector<32x256xf32>
      tpu.vector_store %arg31[%c0_46, %c0_47], %78 {strides = array<i32>} : memref<128x256xf32, #tpu.memory_space<vmem>>, vector<32x256xf32>,
      %c1 = arith.constant 1 : index
      %c0_48 = arith.constant 0 : index
      %80 = vector.load %arg14[%c1, %c0_48] : memref<4x256xf32, #tpu.memory_space<vmem>>, vector<1x256xf32>
      %81 = vector.broadcast %80 : vector<1x256xf32> to vector<32x256xf32>
      %82 = arith.addf %73, %81 : vector<32x256xf32>
      %cst_49 = arith.constant 0.000000e+00 : f32
      %83 = vector.broadcast %cst_49 : f32 to vector<32x256xf32>
      %84 = arith.maximumf %82, %83 : vector<32x256xf32>
      %c32 = arith.constant 32 : index
      %c0_50 = arith.constant 0 : index
      %85 = vector.load %arg31[%c32, %c0_50] : memref<128x256xf32, #tpu.memory_space<vmem>>, vector<32x256xf32>
      tpu.vector_store %arg31[%c32, %c0_50], %84 {strides = array<i32>} : memref<128x256xf32, #tpu.memory_space<vmem>>, vector<32x256xf32>,
      %c2 = arith.constant 2 : index
      %c0_51 = arith.constant 0 : index
      %86 = vector.load %arg14[%c2, %c0_51] : memref<4x256xf32, #tpu.memory_space<vmem>>, vector<1x256xf32>
      %87 = vector.broadcast %86 : vector<1x256xf32> to vector<32x256xf32>
      %88 = arith.addf %73, %87 : vector<32x256xf32>
      %cst_52 = arith.constant 0.000000e+00 : f32
      %89 = vector.broadcast %cst_52 : f32 to vector<32x256xf32>
      %90 = arith.maximumf %88, %89 : vector<32x256xf32>
      %c64 = arith.constant 64 : index
      %c0_53 = arith.constant 0 : index
      %91 = vector.load %arg31[%c64, %c0_53] : memref<128x256xf32, #tpu.memory_space<vmem>>, vector<32x256xf32>
      tpu.vector_store %arg31[%c64, %c0_53], %90 {strides = array<i32>} : memref<128x256xf32, #tpu.memory_space<vmem>>, vector<32x256xf32>,
      %c3 = arith.constant 3 : index
      %c0_54 = arith.constant 0 : index
      %92 = vector.load %arg14[%c3, %c0_54] : memref<4x256xf32, #tpu.memory_space<vmem>>, vector<1x256xf32>
      %93 = vector.broadcast %92 : vector<1x256xf32> to vector<32x256xf32>
      %94 = arith.addf %73, %93 : vector<32x256xf32>
      %cst_55 = arith.constant 0.000000e+00 : f32
      %95 = vector.broadcast %cst_55 : f32 to vector<32x256xf32>
      %96 = arith.maximumf %94, %95 : vector<32x256xf32>
      %c96 = arith.constant 96 : index
      %c0_56 = arith.constant 0 : index
      %97 = vector.load %arg31[%c96, %c0_56] : memref<128x256xf32, #tpu.memory_space<vmem>>, vector<32x256xf32>
      tpu.vector_store %arg31[%c96, %c0_56], %96 {strides = array<i32>} : memref<128x256xf32, #tpu.memory_space<vmem>>, vector<32x256xf32>,
      %c0_57 = arith.constant 0 : index
      %c0_58 = arith.constant 0 : index
      %98 = vector.load %arg31[%c0_57, %c0_58] : memref<128x256xf32, #tpu.memory_space<vmem>>, vector<128x256xf32>
      %99 = arith.truncf %98 : vector<128x256xf32> to vector<128x256xbf16>
      %c0_59 = arith.constant 0 : index
      %c0_60 = arith.constant 0 : index
      %100 = vector.load %arg15[%c0_59, %c0_60] : memref<256x128xbf16, #tpu.memory_space<vmem>>, vector<256x128xbf16>
      %cst_61 = arith.constant dense<0.000000e+00> : vector<128x128xf32>
      %101 = tpu.matmul %99, %100, %cst_61 {dimension_numbers = #tpu.dot_dimension_numbers<[1], [0], [0], [1], [0, 0, 1, 1], [], []>} : vector<128x256xbf16>, vector<256x128xbf16>, vector<128x128xf32> -> vector<128x128xf32>
      %c0_62 = arith.constant 0 : index
      %c0_63 = arith.constant 0 : index
      %102 = vector.load %arg16[%c0_62, %c0_63] : memref<1x128xf32, #tpu.memory_space<vmem>>, vector<1x128xf32>
      %103 = vector.broadcast %102 : vector<1x128xf32> to vector<128x128xf32>
      %104 = arith.mulf %101, %103 : vector<128x128xf32>
      %c0_64 = arith.constant 0 : index
      %c0_65 = arith.constant 0 : index
      %105 = vector.load %arg17[%c0_64, %c0_65] : memref<1x128xf32, #tpu.memory_space<vmem>>, vector<1x128xf32>
      %106 = vector.broadcast %105 : vector<1x128xf32> to vector<128x128xf32>
      %107 = arith.addf %104, %106 : vector<128x128xf32>
      %cst_66 = arith.constant 0.000000e+00 : f32
      %108 = vector.broadcast %cst_66 : f32 to vector<128x128xf32>
      %109 = arith.maximumf %107, %108 : vector<128x128xf32>
      %110 = arith.truncf %109 : vector<128x128xf32> to vector<128x128xbf16>
      %c0_67 = arith.constant 0 : index
      %c0_68 = arith.constant 0 : index
      %111 = vector.load %arg18[%c0_67, %c0_68] : memref<128x128xbf16, #tpu.memory_space<vmem>>, vector<128x128xbf16>
      %cst_69 = arith.constant dense<0.000000e+00> : vector<128x128xf32>
      %112 = tpu.matmul %110, %111, %cst_69 {dimension_numbers = #tpu.dot_dimension_numbers<[1], [0], [0], [1], [0, 0, 1, 1], [], []>} : vector<128x128xbf16>, vector<128x128xbf16>, vector<128x128xf32> -> vector<128x128xf32>
      %c0_70 = arith.constant 0 : index
      %c0_71 = arith.constant 0 : index
      %113 = vector.load %arg19[%c0_70, %c0_71] : memref<1x128xf32, #tpu.memory_space<vmem>>, vector<1x128xf32>
      %114 = vector.broadcast %113 : vector<1x128xf32> to vector<128x128xf32>
      %115 = arith.addf %112, %114 : vector<128x128xf32>
      %116 = arith.truncf %115 : vector<128x128xf32> to vector<128x128xbf16>
      %c0_72 = arith.constant 0 : index
      %c0_73 = arith.constant 0 : index
      %117 = vector.load %arg20[%c0_72, %c0_73] : memref<128x256xbf16, #tpu.memory_space<vmem>>, vector<128x256xbf16>
      %cst_74 = arith.constant dense<0.000000e+00> : vector<128x256xf32>
      %118 = tpu.matmul %116, %117, %cst_74 {dimension_numbers = #tpu.dot_dimension_numbers<[1], [0], [0], [1], [0, 0, 1, 1], [], []>} : vector<128x128xbf16>, vector<128x256xbf16>, vector<128x256xf32> -> vector<128x256xf32>
      %c0_75 = arith.constant 0 : index
      %c0_76 = arith.constant 0 : index
      %119 = vector.load %arg22[%c0_75, %c0_76] : memref<1x256xf32, #tpu.memory_space<vmem>>, vector<1x256xf32>
      %c0_77 = arith.constant 0 : index
      %c0_78 = arith.constant 0 : index
      %120 = vector.load %arg23[%c0_77, %c0_78] : memref<1x256xf32, #tpu.memory_space<vmem>>, vector<1x256xf32>
      %121 = vector.extract_strided_slice %118 {offsets = [0, 0], sizes = [32, 256], strides = [1, 1]} : vector<128x256xf32> to vector<32x256xf32>
      %122 = arith.addf %121, %70 : vector<32x256xf32>
      %123 = vector.broadcast %119 : vector<1x256xf32> to vector<32x256xf32>
      %124 = arith.mulf %122, %123 : vector<32x256xf32>
      %125 = vector.broadcast %120 : vector<1x256xf32> to vector<32x256xf32>
      %126 = arith.addf %124, %125 : vector<32x256xf32>
      %cst_79 = arith.constant 0.000000e+00 : f32
      %127 = vector.broadcast %cst_79 : f32 to vector<32x256xf32>
      %128 = arith.maximumf %126, %127 : vector<32x256xf32>
      %c0_80 = arith.constant 0 : index
      %c0_81 = arith.constant 0 : index
      %129 = vector.load %arg31[%c0_80, %c0_81] : memref<128x256xf32, #tpu.memory_space<vmem>>, vector<32x256xf32>
      tpu.vector_store %arg31[%c0_80, %c0_81], %128 {strides = array<i32>} : memref<128x256xf32, #tpu.memory_space<vmem>>, vector<32x256xf32>,
      %130 = vector.extract_strided_slice %118 {offsets = [32, 0], sizes = [32, 256], strides = [1, 1]} : vector<128x256xf32> to vector<32x256xf32>
      %131 = arith.addf %130, %70 : vector<32x256xf32>
      %132 = vector.broadcast %119 : vector<1x256xf32> to vector<32x256xf32>
      %133 = arith.mulf %131, %132 : vector<32x256xf32>
      %134 = vector.broadcast %120 : vector<1x256xf32> to vector<32x256xf32>
      %135 = arith.addf %133, %134 : vector<32x256xf32>
      %cst_82 = arith.constant 0.000000e+00 : f32
      %136 = vector.broadcast %cst_82 : f32 to vector<32x256xf32>
      %137 = arith.maximumf %135, %136 : vector<32x256xf32>
      %c32_83 = arith.constant 32 : index
      %c0_84 = arith.constant 0 : index
      %138 = vector.load %arg31[%c32_83, %c0_84] : memref<128x256xf32, #tpu.memory_space<vmem>>, vector<32x256xf32>
      tpu.vector_store %arg31[%c32_83, %c0_84], %137 {strides = array<i32>} : memref<128x256xf32, #tpu.memory_space<vmem>>, vector<32x256xf32>,
      %139 = vector.extract_strided_slice %118 {offsets = [64, 0], sizes = [32, 256], strides = [1, 1]} : vector<128x256xf32> to vector<32x256xf32>
      %140 = arith.addf %139, %70 : vector<32x256xf32>
      %141 = vector.broadcast %119 : vector<1x256xf32> to vector<32x256xf32>
      %142 = arith.mulf %140, %141 : vector<32x256xf32>
      %143 = vector.broadcast %120 : vector<1x256xf32> to vector<32x256xf32>
      %144 = arith.addf %142, %143 : vector<32x256xf32>
      %cst_85 = arith.constant 0.000000e+00 : f32
      %145 = vector.broadcast %cst_85 : f32 to vector<32x256xf32>
      %146 = arith.maximumf %144, %145 : vector<32x256xf32>
      %c64_86 = arith.constant 64 : index
      %c0_87 = arith.constant 0 : index
      %147 = vector.load %arg31[%c64_86, %c0_87] : memref<128x256xf32, #tpu.memory_space<vmem>>, vector<32x256xf32>
      tpu.vector_store %arg31[%c64_86, %c0_87], %146 {strides = array<i32>} : memref<128x256xf32, #tpu.memory_space<vmem>>, vector<32x256xf32>,
      %148 = vector.extract_strided_slice %118 {offsets = [96, 0], sizes = [32, 256], strides = [1, 1]} : vector<128x256xf32> to vector<32x256xf32>
      %149 = arith.addf %148, %70 : vector<32x256xf32>
      %150 = vector.broadcast %119 : vector<1x256xf32> to vector<32x256xf32>
      %151 = arith.mulf %149, %150 : vector<32x256xf32>
      %152 = vector.broadcast %120 : vector<1x256xf32> to vector<32x256xf32>
      %153 = arith.addf %151, %152 : vector<32x256xf32>
      %cst_88 = arith.constant 0.000000e+00 : f32
      %154 = vector.broadcast %cst_88 : f32 to vector<32x256xf32>
      %155 = arith.maximumf %153, %154 : vector<32x256xf32>
      %c96_89 = arith.constant 96 : index
      %c0_90 = arith.constant 0 : index
      %156 = vector.load %arg31[%c96_89, %c0_90] : memref<128x256xf32, #tpu.memory_space<vmem>>, vector<32x256xf32>
      tpu.vector_store %arg31[%c96_89, %c0_90], %155 {strides = array<i32>} : memref<128x256xf32, #tpu.memory_space<vmem>>, vector<32x256xf32>,
      %c0_91 = arith.constant 0 : index
      %c0_92 = arith.constant 0 : index
      %157 = vector.load %arg31[%c0_91, %c0_92] : memref<128x256xf32, #tpu.memory_space<vmem>>, vector<128x256xf32>
      %158 = arith.truncf %157 : vector<128x256xf32> to vector<128x256xbf16>
      %c0_93 = arith.constant 0 : index
      %c0_94 = arith.constant 0 : index
      %159 = vector.load %arg24[%c0_93, %c0_94] : memref<256x128xbf16, #tpu.memory_space<vmem>>, vector<256x128xbf16>
      %cst_95 = arith.constant dense<0.000000e+00> : vector<128x128xf32>
      %160 = tpu.matmul %158, %159, %cst_95 {dimension_numbers = #tpu.dot_dimension_numbers<[1], [0], [0], [1], [0, 0, 1, 1], [], []>} : vector<128x256xbf16>, vector<256x128xbf16>, vector<128x128xf32> -> vector<128x128xf32>
      %c0_96 = arith.constant 0 : index
      %c0_97 = arith.constant 0 : index
      %161 = vector.load %arg25[%c0_96, %c0_97] : memref<1x128xf32, #tpu.memory_space<vmem>>, vector<1x128xf32>
      %162 = vector.broadcast %161 : vector<1x128xf32> to vector<128x128xf32>
      %163 = arith.mulf %160, %162 : vector<128x128xf32>
      %c0_98 = arith.constant 0 : index
      %c0_99 = arith.constant 0 : index
      %164 = vector.load %arg26[%c0_98, %c0_99] : memref<1x128xf32, #tpu.memory_space<vmem>>, vector<1x128xf32>
      %165 = vector.broadcast %164 : vector<1x128xf32> to vector<128x128xf32>
      %166 = arith.addf %163, %165 : vector<128x128xf32>
      %cst_100 = arith.constant 0.000000e+00 : f32
      %167 = vector.broadcast %cst_100 : f32 to vector<128x128xf32>
      %168 = arith.maximumf %166, %167 : vector<128x128xf32>
      %169 = arith.truncf %168 : vector<128x128xf32> to vector<128x128xbf16>
      %c0_101 = arith.constant 0 : index
      %c0_102 = arith.constant 0 : index
      %170 = vector.load %arg27[%c0_101, %c0_102] : memref<128x128xbf16, #tpu.memory_space<vmem>>, vector<128x128xbf16>
      %cst_103 = arith.constant dense<0.000000e+00> : vector<128x128xf32>
      %171 = tpu.matmul %169, %170, %cst_103 {dimension_numbers = #tpu.dot_dimension_numbers<[1], [0], [0], [1], [0, 0, 1, 1], [], []>} : vector<128x128xbf16>, vector<128x128xbf16>, vector<128x128xf32> -> vector<128x128xf32>
      %c0_104 = arith.constant 0 : index
      %c0_105 = arith.constant 0 : index
      %172 = vector.load %arg28[%c0_104, %c0_105] : memref<1x128xf32, #tpu.memory_space<vmem>>, vector<1x128xf32>
      %173 = vector.broadcast %172 : vector<1x128xf32> to vector<128x128xf32>
      %174 = arith.addf %171, %173 : vector<128x128xf32>
      %c0_106 = arith.constant 0 : index
      %c0_107 = arith.constant 0 : index
      %175 = vector.load %arg29[%c0_106, %c0_107] : memref<128x128xf32, #tpu.memory_space<vmem>>, vector<128x128xf32>
      tpu.vector_store %arg29[%c0_106, %c0_107], %174 {strides = array<i32>} : memref<128x128xf32, #tpu.memory_space<vmem>>, vector<128x128xf32>,
    } else {
    }
    return
  }
  func.func @transform_0(%arg0: i32) -> (i32, i32) {
    %c0_i32 = arith.constant 0 : i32
    %c0_i32_0 = arith.constant 0 : i32
    %c0_i32_1 = arith.constant 0 : i32
    return %c0_i32, %c0_i32_0 : i32, i32
  }
  func.func @transform_1(%arg0: i32) -> (i32, i32) {
    %c0_i32 = arith.constant 0 : i32
    %c0_i32_0 = arith.constant 0 : i32
    %c0_i32_1 = arith.constant 0 : i32
    return %c0_i32, %c0_i32_0 : i32, i32
  }
  func.func @transform_2(%arg0: i32) -> (i32, i32) {
    %c0_i32 = arith.constant 0 : i32
    %c0_i32_0 = arith.constant 0 : i32
    return %c0_i32, %arg0 : i32, i32
  }
  func.func @transform_3(%arg0: i32) -> (i32, i32) {
    %c0_i32 = arith.constant 0 : i32
    %c0_i32_0 = arith.constant 0 : i32
    return %c0_i32, %arg0 : i32, i32
  }
  func.func @transform_4(%arg0: i32) -> (i32, i32) {
    %c0_i32 = arith.constant 0 : i32
    %c0_i32_0 = arith.constant 0 : i32
    return %c0_i32, %arg0 : i32, i32
  }
  func.func @transform_5(%arg0: i32) -> (i32, i32) {
    %c0_i32 = arith.constant 0 : i32
    %c0_i32_0 = arith.constant 0 : i32
    return %arg0, %c0_i32 : i32, i32
  }
  func.func @transform_6(%arg0: i32) -> (i32, i32) {
    %c0_i32 = arith.constant 0 : i32
    %c0_i32_0 = arith.constant 0 : i32
    %c0_i32_1 = arith.constant 0 : i32
    return %c0_i32, %c0_i32_0 : i32, i32
  }
  func.func @transform_7(%arg0: i32) -> (i32, i32) {
    %c0_i32 = arith.constant 0 : i32
    %c0_i32_0 = arith.constant 0 : i32
    %c0_i32_1 = arith.constant 0 : i32
    return %c0_i32, %c0_i32_0 : i32, i32
  }
  func.func @transform_8(%arg0: i32) -> (i32, i32) {
    %c0_i32 = arith.constant 0 : i32
    %c0_i32_0 = arith.constant 0 : i32
    %c0_i32_1 = arith.constant 0 : i32
    return %c0_i32, %c0_i32_0 : i32, i32
  }
  func.func @transform_9(%arg0: i32) -> (i32, i32) {
    %c0_i32 = arith.constant 0 : i32
    %c0_i32_0 = arith.constant 0 : i32
    %c0_i32_1 = arith.constant 0 : i32
    return %c0_i32, %c0_i32_0 : i32, i32
  }
  func.func @transform_10(%arg0: i32) -> (i32, i32) {
    %c0_i32 = arith.constant 0 : i32
    %c0_i32_0 = arith.constant 0 : i32
    %c0_i32_1 = arith.constant 0 : i32
    return %c0_i32, %c0_i32_0 : i32, i32
  }
  func.func @transform_11(%arg0: i32) -> (i32, i32) {
    %c0_i32 = arith.constant 0 : i32
    %c0_i32_0 = arith.constant 0 : i32
    %c0_i32_1 = arith.constant 0 : i32
    return %c0_i32, %c0_i32_0 : i32, i32
  }
  func.func @transform_12(%arg0: i32) -> (i32, i32) {
    %c0_i32 = arith.constant 0 : i32
    %c0_i32_0 = arith.constant 0 : i32
    %c0_i32_1 = arith.constant 0 : i32
    return %c0_i32, %c0_i32_0 : i32, i32
  }
  func.func @transform_13(%arg0: i32) -> (i32, i32) {
    %c0_i32 = arith.constant 0 : i32
    %c0_i32_0 = arith.constant 0 : i32
    %c0_i32_1 = arith.constant 0 : i32
    return %c0_i32, %c0_i32_0 : i32, i32
  }
  func.func @transform_14(%arg0: i32) -> (i32, i32) {
    %c0_i32 = arith.constant 0 : i32
    %c0_i32_0 = arith.constant 0 : i32
    %c0_i32_1 = arith.constant 0 : i32
    return %c0_i32, %c0_i32_0 : i32, i32
  }
  func.func @transform_15(%arg0: i32) -> (i32, i32) {
    %c0_i32 = arith.constant 0 : i32
    %c0_i32_0 = arith.constant 0 : i32
    %c0_i32_1 = arith.constant 0 : i32
    return %c0_i32, %c0_i32_0 : i32, i32
  }
  func.func @transform_16(%arg0: i32) -> (i32, i32) {
    %c0_i32 = arith.constant 0 : i32
    %c0_i32_0 = arith.constant 0 : i32
    %c0_i32_1 = arith.constant 0 : i32
    return %c0_i32, %c0_i32_0 : i32, i32
  }
  func.func @transform_17(%arg0: i32) -> (i32, i32) {
    %c0_i32 = arith.constant 0 : i32
    %c0_i32_0 = arith.constant 0 : i32
    %c0_i32_1 = arith.constant 0 : i32
    return %c0_i32, %c0_i32_0 : i32, i32
  }
  func.func @transform_18(%arg0: i32) -> (i32, i32) {
    %c0_i32 = arith.constant 0 : i32
    %c0_i32_0 = arith.constant 0 : i32
    %c0_i32_1 = arith.constant 0 : i32
    return %c0_i32, %c0_i32_0 : i32, i32
  }
  func.func @transform_19(%arg0: i32) -> (i32, i32) {
    %c0_i32 = arith.constant 0 : i32
    %c0_i32_0 = arith.constant 0 : i32
    %c0_i32_1 = arith.constant 0 : i32
    return %c0_i32, %c0_i32_0 : i32, i32
  }
  func.func @transform_20(%arg0: i32) -> (i32, i32) {
    %c0_i32 = arith.constant 0 : i32
    %c0_i32_0 = arith.constant 0 : i32
    %c0_i32_1 = arith.constant 0 : i32
    return %c0_i32, %c0_i32_0 : i32, i32
  }
  func.func @transform_21(%arg0: i32) -> (i32, i32) {
    %c0_i32 = arith.constant 0 : i32
    %c0_i32_0 = arith.constant 0 : i32
    %c0_i32_1 = arith.constant 0 : i32
    return %c0_i32, %c0_i32_0 : i32, i32
  }
  func.func @transform_22(%arg0: i32) -> (i32, i32) {
    %c0_i32 = arith.constant 0 : i32
    %c0_i32_0 = arith.constant 0 : i32
    %c0_i32_1 = arith.constant 0 : i32
    return %c0_i32, %c0_i32_0 : i32, i32
  }
  func.func @transform_23(%arg0: i32) -> (i32, i32) {
    %c0_i32 = arith.constant 0 : i32
    %c0_i32_0 = arith.constant 0 : i32
    %c0_i32_1 = arith.constant 0 : i32
    return %c0_i32, %c0_i32_0 : i32, i32
  }
  func.func @transform_24(%arg0: i32) -> (i32, i32) {
    %c0_i32 = arith.constant 0 : i32
    %c0_i32_0 = arith.constant 0 : i32
    %c0_i32_1 = arith.constant 0 : i32
    return %c0_i32, %c0_i32_0 : i32, i32
  }
  func.func @transform_25(%arg0: i32) -> (i32, i32) {
    %c0_i32 = arith.constant 0 : i32
    %c0_i32_0 = arith.constant 0 : i32
    %c0_i32_1 = arith.constant 0 : i32
    return %c0_i32, %c0_i32_0 : i32, i32
  }
  func.func @transform_26(%arg0: i32) -> (i32, i32) {
    %c0_i32 = arith.constant 0 : i32
    %c0_i32_0 = arith.constant 0 : i32
    %c0_i32_1 = arith.constant 0 : i32
    return %c0_i32, %c0_i32_0 : i32, i32
  }
  func.func @transform_27(%arg0: i32) -> (i32, i32) {
    %c0_i32 = arith.constant 0 : i32
    %c0_i32_0 = arith.constant 0 : i32
    %c0_i32_1 = arith.constant 0 : i32
    return %c0_i32, %c0_i32_0 : i32, i32
  }
  func.func @transform_28(%arg0: i32) -> (i32, i32) {
    %c0_i32 = arith.constant 0 : i32
    %c0_i32_0 = arith.constant 0 : i32
    %c0_i32_1 = arith.constant 0 : i32
    return %c0_i32, %c0_i32_0 : i32, i32
  }
}

</mosaic_0001>

<llo_original>
// kernel: pointr_forward.1
$region0: #{pointr_forward.1}
  #allocation0 [shape = 'u32[]', space=smem, size = 0x4, offset = 0x4, fixed_abs, tag = 'smem constant byte address 0x4 - core index']
  #allocation1 [shape = 'u32[144,128]{1,0:T(1,128)}', space=vmem, size = 0x12000, scoped, tag = 'internal scratch']
  #allocation2 [shape = 'f32[32,1024]{1,0:T(8,128)}', space=vmem, size = 0x20000, scoped, tag = 'scratch operand']
  #allocation3 [shape = 'f32[128,256]{1,0:T(8,128)}', space=vmem, size = 0x20000, scoped, tag = 'scratch operand']
  %s0 = inlined_call_operand.vmem [shape: f32[32,128], index: 0, kind: input, shape index: {}]
  %s1 = inlined_call_operand.vmem [shape: f32[32,3], index: 1, kind: input, shape index: {}]
  %s2 = inlined_call_operand.hbm [shape: bf16[128,1024], index: 2, kind: input, shape index: {}]
  %s3 = inlined_call_operand.hbm [shape: f32[1,1024], index: 3, kind: input, shape index: {}]
  %s4 = inlined_call_operand.hbm [shape: f32[1,1024], index: 4, kind: input, shape index: {}]
  %s5 = inlined_call_operand.hbm [shape: bf16[1024,1024], index: 5, kind: input, shape index: {}]
  %s6 = inlined_call_operand.hbm [shape: f32[1,1024], index: 6, kind: input, shape index: {}]
  %s7 = inlined_call_operand.hbm [shape: bf16[1024,128], index: 7, kind: input, shape index: {}]
  %s8 = inlined_call_operand.hbm [shape: bf16[128,128], index: 8, kind: input, shape index: {}]
  %s9 = inlined_call_operand.hbm [shape: f32[3,128], index: 9, kind: input, shape index: {}]
  %s10 = inlined_call_operand.hbm [shape: f32[1,128], index: 10, kind: input, shape index: {}]
  %s11 = inlined_call_operand.hbm [shape: bf16[128,256], index: 11, kind: input, shape index: {}]
  %s12 = inlined_call_operand.hbm [shape: f32[1,256], index: 12, kind: input, shape index: {}]
  %s13 = inlined_call_operand.hbm [shape: f32[4,256], index: 13, kind: input, shape index: {}]
  %s14 = inlined_call_operand.hbm [shape: bf16[256,128], index: 14, kind: input, shape index: {}]
  %s15 = inlined_call_operand.hbm [shape: f32[1,128], index: 15, kind: input, shape index: {}]
  %s16 = inlined_call_operand.hbm [shape: f32[1,128], index: 16, kind: input, shape index: {}]
  %s17 = inlined_call_operand.hbm [shape: bf16[128,128], index: 17, kind: input, shape index: {}]
  %s18 = inlined_call_operand.hbm [shape: f32[1,128], index: 18, kind: input, shape index: {}]
  %s19 = inlined_call_operand.hbm [shape: bf16[128,256], index: 19, kind: input, shape index: {}]
  %s20 = inlined_call_operand.hbm [shape: bf16[128,256], index: 20, kind: input, shape index: {}]
  %s21 = inlined_call_operand.hbm [shape: f32[1,256], index: 21, kind: input, shape index: {}]
  %s22 = inlined_call_operand.hbm [shape: f32[1,256], index: 22, kind: input, shape index: {}]
  %s23 = inlined_call_operand.hbm [shape: bf16[256,128], index: 23, kind: input, shape index: {}]
  %s24 = inlined_call_operand.hbm [shape: f32[1,128], index: 24, kind: input, shape index: {}]
  %s25 = inlined_call_operand.hbm [shape: f32[1,128], index: 25, kind: input, shape index: {}]
  %s26 = inlined_call_operand.hbm [shape: bf16[128,128], index: 26, kind: input, shape index: {}]
  %s27 = inlined_call_operand.hbm [shape: f32[1,128], index: 27, kind: input, shape index: {}]
  %s28 = inlined_call_operand.vmem [shape: f32[128,128], index: 28, kind: output, shape index: {}]
  %s29 = sld [smem:[#allocation0]]
  $region257: #{pointr_forward.1} parent=0
    _
  %s31 = ssub.s32 1, %s29
  %s32 = scalar_select 0, %s31, %s29
  $region1: #{pointr_forward.1} parent=0
    #allocation4 [shape = 'u8[131072]{0}', space=vmem, size = 0x20000, scoped, tag = 'input window, operand 2']
    #allocation5 [shape = 's32[2]{0}', space=sflag, size = 0x8, scoped, tag = 'scoped memory for pointr_forward.1']
    #allocation6 [shape = 'u8[2048]{0}', space=vmem, size = 0x800, scoped, tag = 'input window, operand 3']
    #allocation7 [shape = 's32[2]{0}', space=sflag, size = 0x8, scoped, tag = 'scoped memory for pointr_forward.1']
    #allocation8 [shape = 'u8[2048]{0}', space=vmem, size = 0x800, scoped, tag = 'input window, operand 4']
    #allocation9 [shape = 'u8[1048576]{0}', space=vmem, size = 0x100000, scoped, tag = 'input window, operand 5']
    #allocation10 [shape = 's32[2]{0}', space=sflag, size = 0x8, scoped, tag = 'scoped memory for pointr_forward.1']
    #allocation11 [shape = 'u8[4096]{0}', space=vmem, size = 0x1000, scoped, tag = 'input window, operand 6, single buffered']
    #allocation12 [shape = 'u8[262144]{0}', space=vmem, size = 0x40000, scoped, tag = 'input window, operand 7, single buffered']
    #allocation13 [shape = 's32[1]{0}', space=sflag, size = 0x4, scoped, tag = 'scoped memory for pointr_forward.1']
    #allocation14 [shape = 'u8[32768]{0}', space=vmem, size = 0x8000, scoped, tag = 'input window, operand 8, single buffered']
    #allocation15 [shape = 'u8[2048]{0}', space=vmem, size = 0x800, scoped, tag = 'input window, operand 9, single buffered']
    #allocation16 [shape = 's32[1]{0}', space=sflag, size = 0x4, scoped, tag = 'scoped memory for pointr_forward.1']
    #allocation17 [shape = 'u8[512]{0}', space=vmem, size = 0x400, scoped, tag = 'input window, operand 10, single buffered']
    #allocation18 [shape = 'u8[65536]{0}', space=vmem, size = 0x10000, scoped, tag = 'input window, operand 11, single buffered']
    #allocation19 [shape = 's32[1]{0}', space=sflag, size = 0x4, scoped, tag = 'scoped memory for pointr_forward.1']
    #allocation20 [shape = 'u8[1024]{0}', space=vmem, size = 0x400, scoped, tag = 'input window, operand 12, single buffered']
    #allocation21 [shape = 'u8[4096]{0}', space=vmem, size = 0x1000, scoped, tag = 'input window, operand 13, single buffered']
    #allocation22 [shape = 's32[1]{0}', space=sflag, size = 0x4, scoped, tag = 'scoped memory for pointr_forward.1']
    #allocation23 [shape = 'u8[65536]{0}', space=vmem, size = 0x10000, scoped, tag = 'input window, operand 14, single buffered']
    #allocation24 [shape = 'u8[512]{0}', space=vmem, size = 0x400, scoped, tag = 'input window, operand 15, single buffered']
    #allocation25 [shape = 's32[1]{0}', space=sflag, size = 0x4, scoped, tag = 'scoped memory for pointr_forward.1']
    #allocation26 [shape = 'u8[512]{0}', space=vmem, size = 0x400, scoped, tag = 'input window, operand 16, single buffered']
    #allocation27 [shape = 'u8[32768]{0}', space=vmem, size = 0x8000, scoped, tag = 'input window, operand 17, single buffered']
    #allocation28 [shape = 's32[1]{0}', space=sflag, size = 0x4, scoped, tag = 'scoped memory for pointr_forward.1']
    #allocation29 [shape = 'u8[512]{0}', space=vmem, size = 0x400, scoped, tag = 'input window, operand 18, single buffered']
    #allocation30 [shape = 'u8[65536]{0}', space=vmem, size = 0x10000, scoped, tag = 'input window, operand 19, single buffered']
    #allocation31 [shape = 's32[1]{0}', space=sflag, size = 0x4, scoped, tag = 'scoped memory for pointr_forward.1']
    #allocation32 [shape = 'u8[65536]{0}', space=vmem, size = 0x10000, scoped, tag = 'input window, operand 20, single buffered']
    #allocation33 [shape = 'u8[1024]{0}', space=vmem, size = 0x400, scoped, tag = 'input window, operand 21, single buffered']
    #allocation34 [shape = 's32[1]{0}', space=sflag, size = 0x4, scoped, tag = 'scoped memory for pointr_forward.1']
    #allocation35 [shape = 'u8[1024]{0}', space=vmem, size = 0x400, scoped, tag = 'input window, operand 22, single buffered']
    #allocation36 [shape = 'u8[65536]{0}', space=vmem, size = 0x10000, scoped, tag = 'input window, operand 23, single buffered']
    #allocation37 [shape = 's32[1]{0}', space=sflag, size = 0x4, scoped, tag = 'scoped memory for pointr_forward.1']
    #allocation38 [shape = 'u8[512]{0}', space=vmem, size = 0x400, scoped, tag = 'input window, operand 24, single buffered']
    #allocation39 [shape = 'u8[512]{0}', space=vmem, size = 0x400, scoped, tag = 'input window, operand 25, single buffered']
    #allocation40 [shape = 's32[1]{0}', space=sflag, size = 0x4, scoped, tag = 'scoped memory for pointr_forward.1']
    #allocation41 [shape = 'u8[32768]{0}', space=vmem, size = 0x8000, scoped, tag = 'input window, operand 26, single buffered']
    #allocation42 [shape = 'u8[512]{0}', space=vmem, size = 0x400, scoped, tag = 'input window, operand 27, single buffered']
    #allocation43 [shape = 's32[1]{0}', space=sflag, size = 0x4, scoped, tag = 'scoped memory for pointr_forward.1']
    %33 = vsyncpa [#allocation5], 0
    %s34 = scalar_lea.sflag [#allocation5], 1
    %35 = vsyncpa %s34, 0
    %36 = vsyncpa [#allocation7], 0
    %s37 = scalar_lea.sflag [#allocation7], 1
    %38 = vsyncpa %s37, 0
    %39 = vsyncpa [#allocation10], 0
    %s40 = scalar_lea.sflag [#allocation10], 1
    %41 = vsyncpa %s40, 0
    %42 = vsyncpa [#allocation13], 0
    %43 = vsyncpa [#allocation16], 0
    %44 = vsyncpa [#allocation19], 0
    %45 = vsyncpa [#allocation22], 0
    %46 = vsyncpa [#allocation25], 0
    %47 = vsyncpa [#allocation28], 0
    %48 = vsyncpa [#allocation31], 0
    %49 = vsyncpa [#allocation34], 0
    %50 = vsyncpa [#allocation37], 0
    %51 = vsyncpa [#allocation40], 0
    %52 = vsyncpa [#allocation43], 0
    loop: start=0, step=1, limit=6
    $region2: #{pointr_forward.1} parent=1 // loop_pre_header
      _
    $region3: #{pointr_forward.1} parent=1 // loop_header
      %s54 = sphi 0, %s58
      %p55 = scmp.ge.s32.totalorder %s54, 6
      %s62 = sphi 0, %s62
      %s64 = sphi 0, %s62
      %s65 = sphi 0, %s64
      %s79 = sphi 0, %s65
      %s83 = sphi 0, %s83
      %s85 = sphi 0, %s83
      %s86 = sphi 0, %s85
      %s100 = sphi 0, %s86
      %s106 = sphi 0, %s108
      %s109 = sphi 0, %s106
      %s110 = sphi 0, %s109
      %s126 = sphi 0, %s110
      %s132 = sphi 0, %s134
      %s135 = sphi 0, %s132
      %s136 = sphi 0, %s135
      %s152 = sphi 0, %s136
      %s158 = sphi 0, %s160
      %s161 = sphi 0, %s158
      %s162 = sphi 0, %s161
      %s178 = sphi 0, %s162
      %s184 = sphi 0, %s186
      %s187 = sphi 0, %s184
      %s188 = sphi 0, %s187
      %s204 = sphi 0, %s188
      %s208 = sphi 0, %s208
      %s210 = sphi 0, %s208
      %s211 = sphi 0, %s210
      %s225 = sphi 0, %s211
      %s229 = sphi 0, %s229
      %s231 = sphi 0, %s229
      %s232 = sphi 0, %s231
      %s246 = sphi 0, %s232
      %s250 = sphi 0, %s250
      %s252 = sphi 0, %s250
      %s253 = sphi 0, %s252
      %s267 = sphi 0, %s253
      %s271 = sphi 0, %s271
      %s273 = sphi 0, %s271
      %s274 = sphi 0, %s273
      %s288 = sphi 0, %s274
      %s292 = sphi 0, %s292
      %s294 = sphi 0, %s292
      %s295 = sphi 0, %s294
      %s309 = sphi 0, %s295
      %s313 = sphi 0, %s313
      %s315 = sphi 0, %s313
      %s316 = sphi 0, %s315
      %s330 = sphi 0, %s316
      %s334 = sphi 0, %s334
      %s336 = sphi 0, %s334
      %s337 = sphi 0, %s336
      %s351 = sphi 0, %s337
      %s355 = sphi 0, %s355
      %s357 = sphi 0, %s355
      %s358 = sphi 0, %s357
      %s372 = sphi 0, %s358
      %s376 = sphi 0, %s376
      %s378 = sphi 0, %s376
      %s379 = sphi 0, %s378
      %s393 = sphi 0, %s379
      %s397 = sphi 0, %s397
      %s399 = sphi 0, %s397
      %s400 = sphi 0, %s399
      %s414 = sphi 0, %s400
      %s418 = sphi 0, %s418
      %s420 = sphi 0, %s418
      %s421 = sphi 0, %s420
      %s435 = sphi 0, %s421
      %s439 = sphi 0, %s439
      %s441 = sphi 0, %s439
      %s442 = sphi 0, %s441
      %s456 = sphi 0, %s442
      %s460 = sphi 0, %s460
      %s462 = sphi 0, %s460
      %s463 = sphi 0, %s462
      %s477 = sphi 0, %s463
      %s481 = sphi 0, %s481
      %s483 = sphi 0, %s481
      %s484 = sphi 0, %s483
      %s498 = sphi 0, %s484
      %s502 = sphi 0, %s502
      %s504 = sphi 0, %s502
      %s505 = sphi 0, %s504
      %s519 = sphi 0, %s505
      %s523 = sphi 0, %s523
      %s525 = sphi 0, %s523
      %s526 = sphi 0, %s525
      %s540 = sphi 0, %s526
      %s544 = sphi 0, %s544
      %s546 = sphi 0, %s544
      %s547 = sphi 0, %s546
      %s561 = sphi 0, %s547
      %s565 = sphi 0, %s565
      %s567 = sphi 0, %s565
      %s568 = sphi 0, %s567
      %s582 = sphi 0, %s568
      %s586 = sphi 0, %s586
      %s588 = sphi 0, %s586
      %s589 = sphi 0, %s588
      %s603 = sphi 0, %s589
      %s607 = sphi 0, %s607
      %s609 = sphi 0, %s607
      %s610 = sphi 0, %s609
      %s624 = sphi 0, %s610
      %s628 = sphi 0, %s628
      %s630 = sphi 0, %s628
      %s631 = sphi 0, %s630
      %s645 = sphi 0, %s631
      %s649 = sphi 0, %s649
      %s651 = sphi 0, %s649
      %s652 = sphi 0, %s651
      %s666 = sphi 0, %s652
      %s670 = sphi 0, %s670
      %s672 = sphi 0, %s670
      %s673 = sphi 0, %s672
      %s687 = sphi 0, %s673
    $region4: #{pointr_forward.1} parent=1 // loop_header_branch
      %57 = sbr.rel (%p55) target = $region8
    $region5: #{pointr_forward.1} parent=1 // loop_body
      %s59 = ssub.s32 %s54, 1
      %s60 = ssub.s32 %s54, 2
      %s61 = sadd.s32 %s54, 1
      %s63 = sadd.s32 %s62, 1
      %p66 = scmp.eq.s32.totalorder %s54, 3
      %p67 = scmp.ne.s32.totalorder %s62, %s64
      %p68 = scmp.eq.s32.totalorder %s54, 0
      %p69 = por %p67, %p68
      %p70 = scmp.ne.s32.totalorder %s62, %s64
      %p71 = scmp.eq.s32.totalorder %s59, 3
      %p72 = por %p70, %p71
      %p73 = scmp.ne.s32.totalorder %s64, %s65
      %p74 = scmp.eq.s32.totalorder %s59, 0
      %p75 = por %p73, %p74
      %p76 = scmp.ne.s32.totalorder %s64, %s65
      %p77 = scmp.eq.s32.totalorder %s60, 3
      %p78 = por %p76, %p77
      %p80 = scmp.ne.s32.totalorder %s65, %s79
      %p81 = scmp.eq.s32.totalorder %s60, 0
      %p82 = por %p80, %p81
      %s84 = sadd.s32 %s83, 1
      %p87 = scmp.eq.s32.totalorder %s54, 3
      %p88 = scmp.ne.s32.totalorder %s83, %s85
      %p89 = scmp.eq.s32.totalorder %s54, 0
      %p90 = por %p88, %p89
      %p91 = scmp.ne.s32.totalorder %s83, %s85
      %p92 = scmp.eq.s32.totalorder %s59, 3
      %p93 = por %p91, %p92
      %p94 = scmp.ne.s32.totalorder %s85, %s86
      %p95 = scmp.eq.s32.totalorder %s59, 0
      %p96 = por %p94, %p95
      %p97 = scmp.ne.s32.totalorder %s85, %s86
      %p98 = scmp.eq.s32.totalorder %s60, 3
      %p99 = por %p97, %p98
      %p101 = scmp.ne.s32.totalorder %s86, %s100
      %p102 = scmp.eq.s32.totalorder %s60, 0
      %p103 = por %p101, %p102
      %s104 = ssub.s32 %s54, %s61
      %p105 = scmp.eq.s32.totalorder %s104, 0
      %s107 = sadd.s32 %s106, 1
      %s108 = scalar_select %p105, %s106, %s107
      %p111 = pneg %p105
      %p112 = scmp.eq.s32.totalorder %s54, 3
      %p113 = por %p111, %p112
      %p114 = scmp.ne.s32.totalorder %s106, %s109
      %p115 = scmp.eq.s32.totalorder %s54, 0
      %p116 = por %p114, %p115
      %p117 = scmp.ne.s32.totalorder %s106, %s109
      %p118 = scmp.eq.s32.totalorder %s59, 3
      %p119 = por %p117, %p118
      %p120 = scmp.ne.s32.totalorder %s109, %s110
      %p121 = scmp.eq.s32.totalorder %s59, 0
      %p122 = por %p120, %p121
      %p123 = scmp.ne.s32.totalorder %s109, %s110
      %p124 = scmp.eq.s32.totalorder %s60, 3
      %p125 = por %p123, %p124
      %p127 = scmp.ne.s32.totalorder %s110, %s126
      %p128 = scmp.eq.s32.totalorder %s60, 0
      %p129 = por %p127, %p128
      %s130 = ssub.s32 %s54, %s61
      %p131 = scmp.eq.s32.totalorder %s130, 0
      %s133 = sadd.s32 %s132, 1
      %s134 = scalar_select %p131, %s132, %s133
      %p137 = pneg %p131
      %p138 = scmp.eq.s32.totalorder %s54, 3
      %p139 = por %p137, %p138
      %p140 = scmp.ne.s32.totalorder %s132, %s135
      %p141 = scmp.eq.s32.totalorder %s54, 0
      %p142 = por %p140, %p141
      %p143 = scmp.ne.s32.totalorder %s132, %s135
      %p144 = scmp.eq.s32.totalorder %s59, 3
      %p145 = por %p143, %p144
      %p146 = scmp.ne.s32.totalorder %s135, %s136
      %p147 = scmp.eq.s32.totalorder %s59, 0
      %p148 = por %p146, %p147
      %p149 = scmp.ne.s32.totalorder %s135, %s136
      %p150 = scmp.eq.s32.totalorder %s60, 3
      %p151 = por %p149, %p150
      %p153 = scmp.ne.s32.totalorder %s136, %s152
      %p154 = scmp.eq.s32.totalorder %s60, 0
      %p155 = por %p153, %p154
      %s156 = ssub.s32 %s54, %s61
      %p157 = scmp.eq.s32.totalorder %s156, 0
      %s159 = sadd.s32 %s158, 1
      %s160 = scalar_select %p157, %s158, %s159
      %p163 = pneg %p157
      %p164 = scmp.eq.s32.totalorder %s54, 3
      %p165 = por %p163, %p164
      %p166 = scmp.ne.s32.totalorder %s158, %s161
      %p167 = scmp.eq.s32.totalorder %s54, 0
      %p168 = por %p166, %p167
      %p169 = scmp.ne.s32.totalorder %s158, %s161
      %p170 = scmp.eq.s32.totalorder %s59, 3
      %p171 = por %p169, %p170
      %p172 = scmp.ne.s32.totalorder %s161, %s162
      %p173 = scmp.eq.s32.totalorder %s59, 0
      %p174 = por %p172, %p173
      %p175 = scmp.ne.s32.totalorder %s161, %s162
      %p176 = scmp.eq.s32.totalorder %s60, 3
      %p177 = por %p175, %p176
      %p179 = scmp.ne.s32.totalorder %s162, %s178
      %p180 = scmp.eq.s32.totalorder %s60, 0
      %p181 = por %p179, %p180
      %s182 = ssub.s32 %s54, %s61
      %p183 = scmp.eq.s32.totalorder %s182, 0
      %s185 = sadd.s32 %s184, 1
      %s186 = scalar_select %p183, %s184, %s185
      %p189 = pneg %p183
      %p190 = scmp.eq.s32.totalorder %s54, 3
      %p191 = por %p189, %p190
      %p192 = scmp.ne.s32.totalorder %s184, %s187
      %p193 = scmp.eq.s32.totalorder %s54, 0
      %p194 = por %p192, %p193
      %p195 = scmp.ne.s32.totalorder %s184, %s187
      %p196 = scmp.eq.s32.totalorder %s59, 3
      %p197 = por %p195, %p196
      %p198 = scmp.ne.s32.totalorder %s187, %s188
      %p199 = scmp.eq.s32.totalorder %s59, 0
      %p200 = por %p198, %p199
      %p201 = scmp.ne.s32.totalorder %s187, %s188
      %p202 = scmp.eq.s32.totalorder %s60, 3
      %p203 = por %p201, %p202
      %p205 = scmp.ne.s32.totalorder %s188, %s204
      %p206 = scmp.eq.s32.totalorder %s60, 0
      %p207 = por %p205, %p206
      %s209 = sadd.s32 %s208, 1
      %p212 = scmp.eq.s32.totalorder %s54, 3
      %p213 = scmp.ne.s32.totalorder %s208, %s210
      %p214 = scmp.eq.s32.totalorder %s54, 0
      %p215 = por %p213, %p214
      %p216 = scmp.ne.s32.totalorder %s208, %s210
      %p217 = scmp.eq.s32.totalorder %s59, 3
      %p218 = por %p216, %p217
      %p219 = scmp.ne.s32.totalorder %s210, %s211
      %p220 = scmp.eq.s32.totalorder %s59, 0
      %p221 = por %p219, %p220
      %p222 = scmp.ne.s32.totalorder %s210, %s211
      %p223 = scmp.eq.s32.totalorder %s60, 3
      %p224 = por %p222, %p223
      %p226 = scmp.ne.s32.totalorder %s211, %s225
      %p227 = scmp.eq.s32.totalorder %s60, 0
      %p228 = por %p226, %p227
      %s230 = sadd.s32 %s229, 1
      %p233 = scmp.eq.s32.totalorder %s54, 3
      %p234 = scmp.ne.s32.totalorder %s229, %s231
      %p235 = scmp.eq.s32.totalorder %s54, 0
      %p236 = por %p234, %p235
      %p237 = scmp.ne.s32.totalorder %s229, %s231
      %p238 = scmp.eq.s32.totalorder %s59, 3
      %p239 = por %p237, %p238
      %p240 = scmp.ne.s32.totalorder %s231, %s232
      %p241 = scmp.eq.s32.totalorder %s59, 0
      %p242 = por %p240, %p241
      %p243 = scmp.ne.s32.totalorder %s231, %s232
      %p244 = scmp.eq.s32.totalorder %s60, 3
      %p245 = por %p243, %p244
      %p247 = scmp.ne.s32.totalorder %s232, %s246
      %p248 = scmp.eq.s32.totalorder %s60, 0
      %p249 = por %p247, %p248
      %s251 = sadd.s32 %s250, 1
      %p254 = scmp.eq.s32.totalorder %s54, 3
      %p255 = scmp.ne.s32.totalorder %s250, %s252
      %p256 = scmp.eq.s32.totalorder %s54, 0
      %p257 = por %p255, %p256
      %p258 = scmp.ne.s32.totalorder %s250, %s252
      %p259 = scmp.eq.s32.totalorder %s59, 3
      %p260 = por %p258, %p259
      %p261 = scmp.ne.s32.totalorder %s252, %s253
      %p262 = scmp.eq.s32.totalorder %s59, 0
      %p263 = por %p261, %p262
      %p264 = scmp.ne.s32.totalorder %s252, %s253
      %p265 = scmp.eq.s32.totalorder %s60, 3
      %p266 = por %p264, %p265
      %p268 = scmp.ne.s32.totalorder %s253, %s267
      %p269 = scmp.eq.s32.totalorder %s60, 0
      %p270 = por %p268, %p269
      %s272 = sadd.s32 %s271, 1
      %p275 = scmp.eq.s32.totalorder %s54, 3
      %p276 = scmp.ne.s32.totalorder %s271, %s273
      %p277 = scmp.eq.s32.totalorder %s54, 0
      %p278 = por %p276, %p277
      %p279 = scmp.ne.s32.totalorder %s271, %s273
      %p280 = scmp.eq.s32.totalorder %s59, 3
      %p281 = por %p279, %p280
      %p282 = scmp.ne.s32.totalorder %s273, %s274
      %p283 = scmp.eq.s32.totalorder %s59, 0
      %p284 = por %p282, %p283
      %p285 = scmp.ne.s32.totalorder %s273, %s274
      %p286 = scmp.eq.s32.totalorder %s60, 3
      %p287 = por %p285, %p286
      %p289 = scmp.ne.s32.totalorder %s274, %s288
      %p290 = scmp.eq.s32.totalorder %s60, 0
      %p291 = por %p289, %p290
      %s293 = sadd.s32 %s292, 1
      %p296 = scmp.eq.s32.totalorder %s54, 3
      %p297 = scmp.ne.s32.totalorder %s292, %s294
      %p298 = scmp.eq.s32.totalorder %s54, 0
      %p299 = por %p297, %p298
      %p300 = scmp.ne.s32.totalorder %s292, %s294
      %p301 = scmp.eq.s32.totalorder %s59, 3
      %p302 = por %p300, %p301
      %p303 = scmp.ne.s32.totalorder %s294, %s295
      %p304 = scmp.eq.s32.totalorder %s59, 0
      %p305 = por %p303, %p304
      %p306 = scmp.ne.s32.totalorder %s294, %s295
      %p307 = scmp.eq.s32.totalorder %s60, 3
      %p308 = por %p306, %p307
      %p310 = scmp.ne.s32.totalorder %s295, %s309
      %p311 = scmp.eq.s32.totalorder %s60, 0
      %p312 = por %p310, %p311
      %s314 = sadd.s32 %s313, 1
      %p317 = scmp.eq.s32.totalorder %s54, 3
      %p318 = scmp.ne.s32.totalorder %s313, %s315
      %p319 = scmp.eq.s32.totalorder %s54, 0
      %p320 = por %p318, %p319
      %p321 = scmp.ne.s32.totalorder %s313, %s315
      %p322 = scmp.eq.s32.totalorder %s59, 3
      %p323 = por %p321, %p322
      %p324 = scmp.ne.s32.totalorder %s315, %s316
      %p325 = scmp.eq.s32.totalorder %s59, 0
      %p326 = por %p324, %p325
      %p327 = scmp.ne.s32.totalorder %s315, %s316
      %p328 = scmp.eq.s32.totalorder %s60, 3
      %p329 = por %p327, %p328
      %p331 = scmp.ne.s32.totalorder %s316, %s330
      %p332 = scmp.eq.s32.totalorder %s60, 0
      %p333 = por %p331, %p332
      %s335 = sadd.s32 %s334, 1
      %p338 = scmp.eq.s32.totalorder %s54, 3
      %p339 = scmp.ne.s32.totalorder %s334, %s336
      %p340 = scmp.eq.s32.totalorder %s54, 0
      %p341 = por %p339, %p340
      %p342 = scmp.ne.s32.totalorder %s334, %s336
      %p343 = scmp.eq.s32.totalorder %s59, 3
      %p344 = por %p342, %p343
      %p345 = scmp.ne.s32.totalorder %s336, %s337
      %p346 = scmp.eq.s32.totalorder %s59, 0
      %p347 = por %p345, %p346
      %p348 = scmp.ne.s32.totalorder %s336, %s337
      %p349 = scmp.eq.s32.totalorder %s60, 3
      %p350 = por %p348, %p349
      %p352 = scmp.ne.s32.totalorder %s337, %s351
      %p353 = scmp.eq.s32.totalorder %s60, 0
      %p354 = por %p352, %p353
      %s356 = sadd.s32 %s355, 1
      %p359 = scmp.eq.s32.totalorder %s54, 3
      %p360 = scmp.ne.s32.totalorder %s355, %s357
      %p361 = scmp.eq.s32.totalorder %s54, 0
      %p362 = por %p360, %p361
      %p363 = scmp.ne.s32.totalorder %s355, %s357
      %p364 = scmp.eq.s32.totalorder %s59, 3
      %p365 = por %p363, %p364
      %p366 = scmp.ne.s32.totalorder %s357, %s358
      %p367 = scmp.eq.s32.totalorder %s59, 0
      %p368 = por %p366, %p367
      %p369 = scmp.ne.s32.totalorder %s357, %s358
      %p370 = scmp.eq.s32.totalorder %s60, 3
      %p371 = por %p369, %p370
      %p373 = scmp.ne.s32.totalorder %s358, %s372
      %p374 = scmp.eq.s32.totalorder %s60, 0
      %p375 = por %p373, %p374
      %s377 = sadd.s32 %s376, 1
      %p380 = scmp.eq.s32.totalorder %s54, 3
      %p381 = scmp.ne.s32.totalorder %s376, %s378
      %p382 = scmp.eq.s32.totalorder %s54, 0
      %p383 = por %p381, %p382
      %p384 = scmp.ne.s32.totalorder %s376, %s378
      %p385 = scmp.eq.s32.totalorder %s59, 3
      %p386 = por %p384, %p385
      %p387 = scmp.ne.s32.totalorder %s378, %s379
      %p388 = scmp.eq.s32.totalorder %s59, 0
      %p389 = por %p387, %p388
      %p390 = scmp.ne.s32.totalorder %s378, %s379
      %p391 = scmp.eq.s32.totalorder %s60, 3
      %p392 = por %p390, %p391
      %p394 = scmp.ne.s32.totalorder %s379, %s393
      %p395 = scmp.eq.s32.totalorder %s60, 0
      %p396 = por %p394, %p395
      %s398 = sadd.s32 %s397, 1
      %p401 = scmp.eq.s32.totalorder %s54, 3
      %p402 = scmp.ne.s32.totalorder %s397, %s399
      %p403 = scmp.eq.s32.totalorder %s54, 0
      %p404 = por %p402, %p403
      %p405 = scmp.ne.s32.totalorder %s397, %s399
      %p406 = scmp.eq.s32.totalorder %s59, 3
      %p407 = por %p405, %p406
      %p408 = scmp.ne.s32.totalorder %s399, %s400
      %p409 = scmp.eq.s32.totalorder %s59, 0
      %p410 = por %p408, %p409
      %p411 = scmp.ne.s32.totalorder %s399, %s400
      %p412 = scmp.eq.s32.totalorder %s60, 3
      %p413 = por %p411, %p412
      %p415 = scmp.ne.s32.totalorder %s400, %s414
      %p416 = scmp.eq.s32.totalorder %s60, 0
      %p417 = por %p415, %p416
      %s419 = sadd.s32 %s418, 1
      %p422 = scmp.eq.s32.totalorder %s54, 3
      %p423 = scmp.ne.s32.totalorder %s418, %s420
      %p424 = scmp.eq.s32.totalorder %s54, 0
      %p425 = por %p423, %p424
      %p426 = scmp.ne.s32.totalorder %s418, %s420
      %p427 = scmp.eq.s32.totalorder %s59, 3
      %p428 = por %p426, %p427
      %p429 = scmp.ne.s32.totalorder %s420, %s421
      %p430 = scmp.eq.s32.totalorder %s59, 0
      %p431 = por %p429, %p430
      %p432 = scmp.ne.s32.totalorder %s420, %s421
      %p433 = scmp.eq.s32.totalorder %s60, 3
      %p434 = por %p432, %p433
      %p436 = scmp.ne.s32.totalorder %s421, %s435
      %p437 = scmp.eq.s32.totalorder %s60, 0
      %p438 = por %p436, %p437
      %s440 = sadd.s32 %s439, 1
      %p443 = scmp.eq.s32.totalorder %s54, 3
      %p444 = scmp.ne.s32.totalorder %s439, %s441
      %p445 = scmp.eq.s32.totalorder %s54, 0
      %p446 = por %p444, %p445
      %p447 = scmp.ne.s32.totalorder %s439, %s441
      %p448 = scmp.eq.s32.totalorder %s59, 3
      %p449 = por %p447, %p448
      %p450 = scmp.ne.s32.totalorder %s441, %s442
      %p451 = scmp.eq.s32.totalorder %s59, 0
      %p452 = por %p450, %p451
      %p453 = scmp.ne.s32.totalorder %s441, %s442
      %p454 = scmp.eq.s32.totalorder %s60, 3
      %p455 = por %p453, %p454
      %p457 = scmp.ne.s32.totalorder %s442, %s456
      %p458 = scmp.eq.s32.totalorder %s60, 0
      %p459 = por %p457, %p458
      %s461 = sadd.s32 %s460, 1
      %p464 = scmp.eq.s32.totalorder %s54, 3
      %p465 = scmp.ne.s32.totalorder %s460, %s462
      %p466 = scmp.eq.s32.totalorder %s54, 0
      %p467 = por %p465, %p466
      %p468 = scmp.ne.s32.totalorder %s460, %s462
      %p469 = scmp.eq.s32.totalorder %s59, 3
      %p470 = por %p468, %p469
      %p471 = scmp.ne.s32.totalorder %s462, %s463
      %p472 = scmp.eq.s32.totalorder %s59, 0
      %p473 = por %p471, %p472
      %p474 = scmp.ne.s32.totalorder %s462, %s463
      %p475 = scmp.eq.s32.totalorder %s60, 3
      %p476 = por %p474, %p475
      %p478 = scmp.ne.s32.totalorder %s463, %s477
      %p479 = scmp.eq.s32.totalorder %s60, 0
      %p480 = por %p478, %p479
      %s482 = sadd.s32 %s481, 1
      %p485 = scmp.eq.s32.totalorder %s54, 3
      %p486 = scmp.ne.s32.totalorder %s481, %s483
      %p487 = scmp.eq.s32.totalorder %s54, 0
      %p488 = por %p486, %p487
      %p489 = scmp.ne.s32.totalorder %s481, %s483
      %p490 = scmp.eq.s32.totalorder %s59, 3
      %p491 = por %p489, %p490
      %p492 = scmp.ne.s32.totalorder %s483, %s484
      %p493 = scmp.eq.s32.totalorder %s59, 0
      %p494 = por %p492, %p493
      %p495 = scmp.ne.s32.totalorder %s483, %s484
      %p496 = scmp.eq.s32.totalorder %s60, 3
      %p497 = por %p495, %p496
      %p499 = scmp.ne.s32.totalorder %s484, %s498
      %p500 = scmp.eq.s32.totalorder %s60, 0
      %p501 = por %p499, %p500
      %s503 = sadd.s32 %s502, 1
      %p506 = scmp.eq.s32.totalorder %s54, 3
      %p507 = scmp.ne.s32.totalorder %s502, %s504
      %p508 = scmp.eq.s32.totalorder %s54, 0
      %p509 = por %p507, %p508
      %p510 = scmp.ne.s32.totalorder %s502, %s504
      %p511 = scmp.eq.s32.totalorder %s59, 3
      %p512 = por %p510, %p511
      %p513 = scmp.ne.s32.totalorder %s504, %s505
      %p514 = scmp.eq.s32.totalorder %s59, 0
      %p515 = por %p513, %p514
      %p516 = scmp.ne.s32.totalorder %s504, %s505
      %p517 = scmp.eq.s32.totalorder %s60, 3
      %p518 = por %p516, %p517
      %p520 = scmp.ne.s32.totalorder %s505, %s519
      %p521 = scmp.eq.s32.totalorder %s60, 0
      %p522 = por %p520, %p521
      %s524 = sadd.s32 %s523, 1
      %p527 = scmp.eq.s32.totalorder %s54, 3
      %p528 = scmp.ne.s32.totalorder %s523, %s525
      %p529 = scmp.eq.s32.totalorder %s54, 0
      %p530 = por %p528, %p529
      %p531 = scmp.ne.s32.totalorder %s523, %s525
      %p532 = scmp.eq.s32.totalorder %s59, 3
      %p533 = por %p531, %p532
      %p534 = scmp.ne.s32.totalorder %s525, %s526
      %p535 = scmp.eq.s32.totalorder %s59, 0
      %p536 = por %p534, %p535
      %p537 = scmp.ne.s32.totalorder %s525, %s526
      %p538 = scmp.eq.s32.totalorder %s60, 3
      %p539 = por %p537, %p538
      %p541 = scmp.ne.s32.totalorder %s526, %s540
      %p542 = scmp.eq.s32.totalorder %s60, 0
      %p543 = por %p541, %p542
      %s545 = sadd.s32 %s544, 1
      %p548 = scmp.eq.s32.totalorder %s54, 3
      %p549 = scmp.ne.s32.totalorder %s544, %s546
      %p550 = scmp.eq.s32.totalorder %s54, 0
      %p551 = por %p549, %p550
      %p552 = scmp.ne.s32.totalorder %s544, %s546
      %p553 = scmp.eq.s32.totalorder %s59, 3
      %p554 = por %p552, %p553
      %p555 = scmp.ne.s32.totalorder %s546, %s547
      %p556 = scmp.eq.s32.totalorder %s59, 0
      %p557 = por %p555, %p556
      %p558 = scmp.ne.s32.totalorder %s546, %s547
      %p559 = scmp.eq.s32.totalorder %s60, 3
      %p560 = por %p558, %p559
      %p562 = scmp.ne.s32.totalorder %s547, %s561
      %p563 = scmp.eq.s32.totalorder %s60, 0
      %p564 = por %p562, %p563
      %s566 = sadd.s32 %s565, 1
      %p569 = scmp.eq.s32.totalorder %s54, 3
      %p570 = scmp.ne.s32.totalorder %s565, %s567
      %p571 = scmp.eq.s32.totalorder %s54, 0
      %p572 = por %p570, %p571
      %p573 = scmp.ne.s32.totalorder %s565, %s567
      %p574 = scmp.eq.s32.totalorder %s59, 3
      %p575 = por %p573, %p574
      %p576 = scmp.ne.s32.totalorder %s567, %s568
      %p577 = scmp.eq.s32.totalorder %s59, 0
      %p578 = por %p576, %p577
      %p579 = scmp.ne.s32.totalorder %s567, %s568
      %p580 = scmp.eq.s32.totalorder %s60, 3
      %p581 = por %p579, %p580
      %p583 = scmp.ne.s32.totalorder %s568, %s582
      %p584 = scmp.eq.s32.totalorder %s60, 0
      %p585 = por %p583, %p584
      %s587 = sadd.s32 %s586, 1
      %p590 = scmp.eq.s32.totalorder %s54, 3
      %p591 = scmp.ne.s32.totalorder %s586, %s588
      %p592 = scmp.eq.s32.totalorder %s54, 0
      %p593 = por %p591, %p592
      %p594 = scmp.ne.s32.totalorder %s586, %s588
      %p595 = scmp.eq.s32.totalorder %s59, 3
      %p596 = por %p594, %p595
      %p597 = scmp.ne.s32.totalorder %s588, %s589
      %p598 = scmp.eq.s32.totalorder %s59, 0
      %p599 = por %p597, %p598
      %p600 = scmp.ne.s32.totalorder %s588, %s589
      %p601 = scmp.eq.s32.totalorder %s60, 3
      %p602 = por %p600, %p601
      %p604 = scmp.ne.s32.totalorder %s589, %s603
      %p605 = scmp.eq.s32.totalorder %s60, 0
      %p606 = por %p604, %p605
      %s608 = sadd.s32 %s607, 1
      %p611 = scmp.eq.s32.totalorder %s54, 3
      %p612 = scmp.ne.s32.totalorder %s607, %s609
      %p613 = scmp.eq.s32.totalorder %s54, 0
      %p614 = por %p612, %p613
      %p615 = scmp.ne.s32.totalorder %s607, %s609
      %p616 = scmp.eq.s32.totalorder %s59, 3
      %p617 = por %p615, %p616
      %p618 = scmp.ne.s32.totalorder %s609, %s610
      %p619 = scmp.eq.s32.totalorder %s59, 0
      %p620 = por %p618, %p619
      %p621 = scmp.ne.s32.totalorder %s609, %s610
      %p622 = scmp.eq.s32.totalorder %s60, 3
      %p623 = por %p621, %p622
      %p625 = scmp.ne.s32.totalorder %s610, %s624
      %p626 = scmp.eq.s32.totalorder %s60, 0
      %p627 = por %p625, %p626
      %s629 = sadd.s32 %s628, 1
      %p632 = scmp.eq.s32.totalorder %s54, 3
      %p633 = scmp.ne.s32.totalorder %s628, %s630
      %p634 = scmp.eq.s32.totalorder %s54, 0
      %p635 = por %p633, %p634
      %p636 = scmp.ne.s32.totalorder %s628, %s630
      %p637 = scmp.eq.s32.totalorder %s59, 3
      %p638 = por %p636, %p637
      %p639 = scmp.ne.s32.totalorder %s630, %s631
      %p640 = scmp.eq.s32.totalorder %s59, 0
      %p641 = por %p639, %p640
      %p642 = scmp.ne.s32.totalorder %s630, %s631
      %p643 = scmp.eq.s32.totalorder %s60, 3
      %p644 = por %p642, %p643
      %p646 = scmp.ne.s32.totalorder %s631, %s645
      %p647 = scmp.eq.s32.totalorder %s60, 0
      %p648 = por %p646, %p647
      %s650 = sadd.s32 %s649, 1
      %p653 = scmp.eq.s32.totalorder %s54, 3
      %p654 = scmp.ne.s32.totalorder %s649, %s651
      %p655 = scmp.eq.s32.totalorder %s54, 0
      %p656 = por %p654, %p655
      %p657 = scmp.ne.s32.totalorder %s649, %s651
      %p658 = scmp.eq.s32.totalorder %s59, 3
      %p659 = por %p657, %p658
      %p660 = scmp.ne.s32.totalorder %s651, %s652
      %p661 = scmp.eq.s32.totalorder %s59, 0
      %p662 = por %p660, %p661
      %p663 = scmp.ne.s32.totalorder %s651, %s652
      %p664 = scmp.eq.s32.totalorder %s60, 3
      %p665 = por %p663, %p664
      %p667 = scmp.ne.s32.totalorder %s652, %s666
      %p668 = scmp.eq.s32.totalorder %s60, 0
      %p669 = por %p667, %p668
      %s671 = sadd.s32 %s670, 1
      %p674 = scmp.eq.s32.totalorder %s54, 3
      %p675 = scmp.ne.s32.totalorder %s670, %s672
      %p676 = scmp.eq.s32.totalorder %s54, 0
      %p677 = por %p675, %p676
      %p678 = scmp.ne.s32.totalorder %s670, %s672
      %p679 = scmp.eq.s32.totalorder %s59, 3
      %p680 = por %p678, %p679
      %p681 = scmp.ne.s32.totalorder %s672, %s673
      %p682 = scmp.eq.s32.totalorder %s59, 0
      %p683 = por %p681, %p682
      %p684 = scmp.ne.s32.totalorder %s672, %s673
      %p685 = scmp.eq.s32.totalorder %s60, 3
      %p686 = por %p684, %p685
      %p688 = scmp.ne.s32.totalorder %s673, %s687
      %p689 = scmp.eq.s32.totalorder %s60, 0
      %p690 = por %p688, %p689
      %p691 = scmp.le.s32.totalorder 1, %s54
      %p692 = scmp.lt.s32.totalorder %s54, 5
      %p693 = pnand %p691, %p692
      %p694 = pneg %p693
      // Predicated region
      $region9: #{pointr_forward.1} parent=5 // pred_check
        _
      $region10: #{pointr_forward.1} parent=5 // pred_check_branch
        %696 = sbr.rel (%p693) target = $region12
      $region11: #{pointr_forward.1} parent=5 // pred_region
        %s697 = ssub.s32 %s54, 1
        // Predicated region
        $region13: #{pointr_forward.1} parent=11 // pred_check
          %p698 = pneg %p75
        $region14: #{pointr_forward.1} parent=11 // pred_check_branch
          %700 = sbr.rel (%p698) target = $region16
        $region15: #{pointr_forward.1} parent=11 // pred_region
          _
        $region16: #{pointr_forward.1} parent=11 // pred_fallthru
          _
        // Predicated region
        $region17: #{pointr_forward.1} parent=11 // pred_check
          %p701 = pneg %p96
        $region18: #{pointr_forward.1} parent=11 // pred_check_branch
          %703 = sbr.rel (%p701) target = $region20
        $region19: #{pointr_forward.1} parent=11 // pred_region
          _
        $region20: #{pointr_forward.1} parent=11 // pred_fallthru
          _
        // Predicated region
        $region21: #{pointr_forward.1} parent=11 // pred_check
          %p704 = pneg %p221
        $region22: #{pointr_forward.1} parent=11 // pred_check_branch
          %706 = sbr.rel (%p704) target = $region24
        $region23: #{pointr_forward.1} parent=11 // pred_region
          %s708 = ssub.s32 128, 128
          %709 = vsyncadd [#allocation10], %s708
          %s711 = sshll.u32 [#allocation11], 4
          %s712 = int_to_ptr.vmem [resolvable:$true] %s711
          %714 = dma.hbm_to_vmem [thread:$0]  %s6, 128, %s712, [#allocation10]
        $region24: #{pointr_forward.1} parent=11 // pred_fallthru
          _
        // Predicated region
        $region25: #{pointr_forward.1} parent=11 // pred_check
          %p715 = pneg %p242
        $region26: #{pointr_forward.1} parent=11 // pred_check_branch
          %717 = sbr.rel (%p715) target = $region28
        $region27: #{pointr_forward.1} parent=11 // pred_region
          %s719 = ssub.s32 8192, 8192
          %720 = vsyncadd [#allocation13], %s719
          %s721 = sshll.u32 [#allocation12], 4
          %s722 = int_to_ptr.vmem [resolvable:$true] %s721
          %727 = dma.hbm_to_vmem [thread:$0]  %s7, 8192, %s722, [#allocation13], 64, 64, 4
        $region28: #{pointr_forward.1} parent=11 // pred_fallthru
          _
        // Predicated region
        $region29: #{pointr_forward.1} parent=11 // pred_check
          %p728 = pneg %p263
        $region30: #{pointr_forward.1} parent=11 // pred_check_branch
          %730 = sbr.rel (%p728) target = $region32
        $region31: #{pointr_forward.1} parent=11 // pred_region
          %s732 = ssub.s32 1024, 1024
          %733 = vsyncadd [#allocation13], %s732
          %s734 = sshll.u32 [#allocation14], 4
          %s735 = int_to_ptr.vmem [resolvable:$true] %s734
          %740 = dma.hbm_to_vmem [thread:$0]  %s8, 1024, %s735, [#allocation13], 64, 64, 4
        $region32: #{pointr_forward.1} parent=11 // pred_fallthru
          _
        // Predicated region
        $region33: #{pointr_forward.1} parent=11 // pred_check
          %p741 = pneg %p284
        $region34: #{pointr_forward.1} parent=11 // pred_check_branch
          %743 = sbr.rel (%p741) target = $region36
        $region35: #{pointr_forward.1} parent=11 // pred_region
          %s745 = ssub.s32 64, 64
          %746 = vsyncadd [#allocation16], %s745
          %s748 = sshll.u32 [#allocation15], 4
          %s749 = int_to_ptr.vmem [resolvable:$true] %s748
          %751 = dma.hbm_to_vmem [thread:$0]  %s9, 64, %s749, [#allocation16]
        $region36: #{pointr_forward.1} parent=11 // pred_fallthru
          _
        // Predicated region
        $region37: #{pointr_forward.1} parent=11 // pred_check
          %p752 = pneg %p305
        $region38: #{pointr_forward.1} parent=11 // pred_check_branch
          %754 = sbr.rel (%p752) target = $region40
        $region39: #{pointr_forward.1} parent=11 // pred_region
          %s756 = ssub.s32 16, 16
          %757 = vsyncadd [#allocation16], %s756
          %s759 = sshll.u32 [#allocation17], 4
          %s760 = int_to_ptr.vmem [resolvable:$true] %s759
          %762 = dma.hbm_to_vmem [thread:$0]  %s10, 16, %s760, [#allocation16]
        $region40: #{pointr_forward.1} parent=11 // pred_fallthru
          _
        // Predicated region
        $region41: #{pointr_forward.1} parent=11 // pred_check
          %p763 = pneg %p326
        $region42: #{pointr_forward.1} parent=11 // pred_check_branch
          %765 = sbr.rel (%p763) target = $region44
        $region43: #{pointr_forward.1} parent=11 // pred_region
          %s767 = ssub.s32 2048, 2048
          %768 = vsyncadd [#allocation19], %s767
          %s769 = sshll.u32 [#allocation18], 4
          %s770 = int_to_ptr.vmem [resolvable:$true] %s769
          %775 = dma.hbm_to_vmem [thread:$0]  %s11, 2048, %s770, [#allocation19], 128, 128, 8
        $region44: #{pointr_forward.1} parent=11 // pred_fallthru
          _
        // Predicated region
        $region45: #{pointr_forward.1} parent=11 // pred_check
          %p776 = pneg %p347
        $region46: #{pointr_forward.1} parent=11 // pred_check_branch
          %778 = sbr.rel (%p776) target = $region48
        $region47: #{pointr_forward.1} parent=11 // pred_region
          %s780 = ssub.s32 32, 32
          %781 = vsyncadd [#allocation19], %s780
          %s783 = sshll.u32 [#allocation20], 4
          %s784 = int_to_ptr.vmem [resolvable:$true] %s783
          %786 = dma.hbm_to_vmem [thread:$0]  %s12, 32, %s784, [#allocation19]
        $region48: #{pointr_forward.1} parent=11 // pred_fallthru
          _
        // Predicated region
        $region49: #{pointr_forward.1} parent=11 // pred_check
          %p787 = pneg %p368
        $region50: #{pointr_forward.1} parent=11 // pred_check_branch
          %789 = sbr.rel (%p787) target = $region52
        $region51: #{pointr_forward.1} parent=11 // pred_region
          %s791 = ssub.s32 128, 128
          %792 = vsyncadd [#allocation22], %s791
          %s794 = sshll.u32 [#allocation21], 4
          %s795 = int_to_ptr.vmem [resolvable:$true] %s794
          %797 = dma.hbm_to_vmem [thread:$0]  %s13, 128, %s795, [#allocation22]
        $region52: #{pointr_forward.1} parent=11 // pred_fallthru
          _
        // Predicated region
        $region53: #{pointr_forward.1} parent=11 // pred_check
          %p798 = pneg %p389
        $region54: #{pointr_forward.1} parent=11 // pred_check_branch
          %800 = sbr.rel (%p798) target = $region56
        $region55: #{pointr_forward.1} parent=11 // pred_region
          %s802 = ssub.s32 2048, 2048
          %803 = vsyncadd [#allocation22], %s802
          %s804 = sshll.u32 [#allocation23], 4
          %s805 = int_to_ptr.vmem [resolvable:$true] %s804
          %810 = dma.hbm_to_vmem [thread:$0]  %s14, 2048, %s805, [#allocation22], 64, 64, 4
        $region56: #{pointr_forward.1} parent=11 // pred_fallthru
          _
        // Predicated region
        $region57: #{pointr_forward.1} parent=11 // pred_check
          %p811 = pneg %p410
        $region58: #{pointr_forward.1} parent=11 // pred_check_branch
          %813 = sbr.rel (%p811) target = $region60
        $region59: #{pointr_forward.1} parent=11 // pred_region
          %s815 = ssub.s32 16, 16
          %816 = vsyncadd [#allocation25], %s815
          %s818 = sshll.u32 [#allocation24], 4
          %s819 = int_to_ptr.vmem [resolvable:$true] %s818
          %821 = dma.hbm_to_vmem [thread:$0]  %s15, 16, %s819, [#allocation25]
        $region60: #{pointr_forward.1} parent=11 // pred_fallthru
          _
        // Predicated region
        $region61: #{pointr_forward.1} parent=11 // pred_check
          %p822 = pneg %p431
        $region62: #{pointr_forward.1} parent=11 // pred_check_branch
          %824 = sbr.rel (%p822) target = $region64
        $region63: #{pointr_forward.1} parent=11 // pred_region
          %s826 = ssub.s32 16, 16
          %827 = vsyncadd [#allocation25], %s826
          %s829 = sshll.u32 [#allocation26], 4
          %s830 = int_to_ptr.vmem [resolvable:$true] %s829
          %832 = dma.hbm_to_vmem [thread:$0]  %s16, 16, %s830, [#allocation25]
        $region64: #{pointr_forward.1} parent=11 // pred_fallthru
          _
        // Predicated region
        $region65: #{pointr_forward.1} parent=11 // pred_check
          %p833 = pneg %p452
        $region66: #{pointr_forward.1} parent=11 // pred_check_branch
          %835 = sbr.rel (%p833) target = $region68
        $region67: #{pointr_forward.1} parent=11 // pred_region
          %s837 = ssub.s32 1024, 1024
          %838 = vsyncadd [#allocation28], %s837
          %s839 = sshll.u32 [#allocation27], 4
          %s840 = int_to_ptr.vmem [resolvable:$true] %s839
          %845 = dma.hbm_to_vmem [thread:$0]  %s17, 1024, %s840, [#allocation28], 64, 64, 4
        $region68: #{pointr_forward.1} parent=11 // pred_fallthru
          _
        // Predicated region
        $region69: #{pointr_forward.1} parent=11 // pred_check
          %p846 = pneg %p473
        $region70: #{pointr_forward.1} parent=11 // pred_check_branch
          %848 = sbr.rel (%p846) target = $region72
        $region71: #{pointr_forward.1} parent=11 // pred_region
          %s850 = ssub.s32 16, 16
          %851 = vsyncadd [#allocation28], %s850
          %s853 = sshll.u32 [#allocation29], 4
          %s854 = int_to_ptr.vmem [resolvable:$true] %s853
          %856 = dma.hbm_to_vmem [thread:$0]  %s18, 16, %s854, [#allocation28]
        $region72: #{pointr_forward.1} parent=11 // pred_fallthru
          _
        // Predicated region
        $region73: #{pointr_forward.1} parent=11 // pred_check
          %p857 = pneg %p494
        $region74: #{pointr_forward.1} parent=11 // pred_check_branch
          %859 = sbr.rel (%p857) target = $region76
        $region75: #{pointr_forward.1} parent=11 // pred_region
          %s861 = ssub.s32 2048, 2048
          %862 = vsyncadd [#allocation31], %s861
          %s863 = sshll.u32 [#allocation30], 4
          %s864 = int_to_ptr.vmem [resolvable:$true] %s863
          %869 = dma.hbm_to_vmem [thread:$0]  %s19, 2048, %s864, [#allocation31], 128, 128, 8
        $region76: #{pointr_forward.1} parent=11 // pred_fallthru
          _
        // Predicated region
        $region77: #{pointr_forward.1} parent=11 // pred_check
          %p870 = pneg %p515
        $region78: #{pointr_forward.1} parent=11 // pred_check_branch
          %872 = sbr.rel (%p870) target = $region80
        $region79: #{pointr_forward.1} parent=11 // pred_region
          %s874 = ssub.s32 2048, 2048
          %875 = vsyncadd [#allocation31], %s874
          %s876 = sshll.u32 [#allocation32], 4
          %s877 = int_to_ptr.vmem [resolvable:$true] %s876
          %882 = dma.hbm_to_vmem [thread:$0]  %s20, 2048, %s877, [#allocation31], 128, 128, 8
        $region80: #{pointr_forward.1} parent=11 // pred_fallthru
          _
        // Predicated region
        $region81: #{pointr_forward.1} parent=11 // pred_check
          %p883 = pneg %p536
        $region82: #{pointr_forward.1} parent=11 // pred_check_branch
          %885 = sbr.rel (%p883) target = $region84
        $region83: #{pointr_forward.1} parent=11 // pred_region
          %s887 = ssub.s32 32, 32
          %888 = vsyncadd [#allocation34], %s887
          %s890 = sshll.u32 [#allocation33], 4
          %s891 = int_to_ptr.vmem [resolvable:$true] %s890
          %893 = dma.hbm_to_vmem [thread:$0]  %s21, 32, %s891, [#allocation34]
        $region84: #{pointr_forward.1} parent=11 // pred_fallthru
          _
        // Predicated region
        $region85: #{pointr_forward.1} parent=11 // pred_check
          %p894 = pneg %p557
        $region86: #{pointr_forward.1} parent=11 // pred_check_branch
          %896 = sbr.rel (%p894) target = $region88
        $region87: #{pointr_forward.1} parent=11 // pred_region
          %s898 = ssub.s32 32, 32
          %899 = vsyncadd [#allocation34], %s898
          %s901 = sshll.u32 [#allocation35], 4
          %s902 = int_to_ptr.vmem [resolvable:$true] %s901
          %904 = dma.hbm_to_vmem [thread:$0]  %s22, 32, %s902, [#allocation34]
        $region88: #{pointr_forward.1} parent=11 // pred_fallthru
          _
        // Predicated region
        $region89: #{pointr_forward.1} parent=11 // pred_check
          %p905 = pneg %p578
        $region90: #{pointr_forward.1} parent=11 // pred_check_branch
          %907 = sbr.rel (%p905) target = $region92
        $region91: #{pointr_forward.1} parent=11 // pred_region
          %s909 = ssub.s32 2048, 2048
          %910 = vsyncadd [#allocation37], %s909
          %s911 = sshll.u32 [#allocation36], 4
          %s912 = int_to_ptr.vmem [resolvable:$true] %s911
          %917 = dma.hbm_to_vmem [thread:$0]  %s23, 2048, %s912, [#allocation37], 64, 64, 4
        $region92: #{pointr_forward.1} parent=11 // pred_fallthru
          _
        // Predicated region
        $region93: #{pointr_forward.1} parent=11 // pred_check
          %p918 = pneg %p599
        $region94: #{pointr_forward.1} parent=11 // pred_check_branch
          %920 = sbr.rel (%p918) target = $region96
        $region95: #{pointr_forward.1} parent=11 // pred_region
          %s922 = ssub.s32 16, 16
          %923 = vsyncadd [#allocation37], %s922
          %s925 = sshll.u32 [#allocation38], 4
          %s926 = int_to_ptr.vmem [resolvable:$true] %s925
          %928 = dma.hbm_to_vmem [thread:$0]  %s24, 16, %s926, [#allocation37]
        $region96: #{pointr_forward.1} parent=11 // pred_fallthru
          _
        // Predicated region
        $region97: #{pointr_forward.1} parent=11 // pred_check
          %p929 = pneg %p620
        $region98: #{pointr_forward.1} parent=11 // pred_check_branch
          %931 = sbr.rel (%p929) target = $region100
        $region99: #{pointr_forward.1} parent=11 // pred_region
          %s933 = ssub.s32 16, 16
          %934 = vsyncadd [#allocation40], %s933
          %s936 = sshll.u32 [#allocation39], 4
          %s937 = int_to_ptr.vmem [resolvable:$true] %s936
          %939 = dma.hbm_to_vmem [thread:$0]  %s25, 16, %s937, [#allocation40]
        $region100: #{pointr_forward.1} parent=11 // pred_fallthru
          _
        // Predicated region
        $region101: #{pointr_forward.1} parent=11 // pred_check
          %p940 = pneg %p641
        $region102: #{pointr_forward.1} parent=11 // pred_check_branch
          %942 = sbr.rel (%p940) target = $region104
        $region103: #{pointr_forward.1} parent=11 // pred_region
          %s944 = ssub.s32 1024, 1024
          %945 = vsyncadd [#allocation40], %s944
          %s946 = sshll.u32 [#allocation41], 4
          %s947 = int_to_ptr.vmem [resolvable:$true] %s946
          %952 = dma.hbm_to_vmem [thread:$0]  %s26, 1024, %s947, [#allocation40], 64, 64, 4
        $region104: #{pointr_forward.1} parent=11 // pred_fallthru
          _
        // Predicated region
        $region105: #{pointr_forward.1} parent=11 // pred_check
          %p953 = pneg %p662
        $region106: #{pointr_forward.1} parent=11 // pred_check_branch
          %955 = sbr.rel (%p953) target = $region108
        $region107: #{pointr_forward.1} parent=11 // pred_region
          %s957 = ssub.s32 16, 16
          %958 = vsyncadd [#allocation43], %s957
          %s960 = sshll.u32 [#allocation42], 4
          %s961 = int_to_ptr.vmem [resolvable:$true] %s960
          %963 = dma.hbm_to_vmem [thread:$0]  %s27, 16, %s961, [#allocation43]
        $region108: #{pointr_forward.1} parent=11 // pred_fallthru
          _
      $region12: #{pointr_forward.1} parent=5 // pred_fallthru
        _
      %p964 = scmp.lt.s32.totalorder %s54, 4
      // Predicated region
      $region109: #{pointr_forward.1} parent=5 // pred_check
        %p965 = pneg %p964
      $region110: #{pointr_forward.1} parent=5 // pred_check_branch
        %967 = sbr.rel (%p965) target = $region112
      $region111: #{pointr_forward.1} parent=5 // pred_region
        // Predicated region
        $region113: #{pointr_forward.1} parent=111 // pred_check
          %p968 = pneg %p116
        $region114: #{pointr_forward.1} parent=111 // pred_check_branch
          %970 = sbr.rel (%p968) target = $region116
        $region115: #{pointr_forward.1} parent=111 // pred_region
          %s971 = sand.u32 %s106, 1
          %s972 = scalar_lea.sflag [#allocation5], %s971
          %s973 = sand.u32 %s106, 1
          %s974 = smul.addr %s973, 128
          %s975 = scalar_lea.vmem [#allocation4], %s974
          %s976 = smul.u32 2, %s54
          %s978 = ssub.s32 2048, 2048
          %979 = vsyncadd %s972, %s978
          %s980 = smul.addr %s976, 64
          %s981 = scalar_lea.hbm %s2, %s980
          %s982 = sshll.u32 %s975, 4
          %s983 = int_to_ptr.vmem [resolvable:$true] %s982
          %988 = dma.hbm_to_vmem [thread:$0]  %s981, 2048, %s983, %s972, 512, 128, 8
        $region116: #{pointr_forward.1} parent=111 // pred_fallthru
          _
        // Predicated region
        $region117: #{pointr_forward.1} parent=111 // pred_check
          %p989 = pneg %p142
        $region118: #{pointr_forward.1} parent=111 // pred_check_branch
          %991 = sbr.rel (%p989) target = $region120
        $region119: #{pointr_forward.1} parent=111 // pred_region
          %s992 = sand.u32 %s54, 1
          %s993 = scalar_lea.sflag [#allocation7], %s992
          %s994 = sand.u32 %s132, 1
          %s995 = smul.addr %s994, 2
          %s996 = scalar_lea.vmem [#allocation6], %s995
          %s997 = smul.u32 2, %s54
          %s999 = ssub.s32 32, 32
          %1000 = vsyncadd %s993, %s999
          %s1001 = smul.addr %s997, 16
          %s1002 = scalar_lea.hbm %s3, %s1001
          %s1004 = sshll.u32 %s996, 4
          %s1005 = int_to_ptr.vmem [resolvable:$true] %s1004
          %1007 = dma.hbm_to_vmem [thread:$0]  %s1002, 32, %s1005, %s993
        $region120: #{pointr_forward.1} parent=111 // pred_fallthru
          _
        // Predicated region
        $region121: #{pointr_forward.1} parent=111 // pred_check
          %p1008 = pneg %p168
        $region122: #{pointr_forward.1} parent=111 // pred_check_branch
          %1010 = sbr.rel (%p1008) target = $region124
        $region123: #{pointr_forward.1} parent=111 // pred_region
          %s1011 = sand.u32 %s54, 1
          %s1012 = scalar_lea.sflag [#allocation7], %s1011
          %s1013 = sand.u32 %s158, 1
          %s1014 = smul.addr %s1013, 2
          %s1015 = scalar_lea.vmem [#allocation8], %s1014
          %s1016 = smul.u32 2, %s54
          %s1018 = ssub.s32 32, 32
          %1019 = vsyncadd %s1012, %s1018
          %s1020 = smul.addr %s1016, 16
          %s1021 = scalar_lea.hbm %s4, %s1020
          %s1023 = sshll.u32 %s1015, 4
          %s1024 = int_to_ptr.vmem [resolvable:$true] %s1023
          %1026 = dma.hbm_to_vmem [thread:$0]  %s1021, 32, %s1024, %s1012
        $region124: #{pointr_forward.1} parent=111 // pred_fallthru
          _
        // Predicated region
        $region125: #{pointr_forward.1} parent=111 // pred_check
          %p1027 = pneg %p194
        $region126: #{pointr_forward.1} parent=111 // pred_check_branch
          %1029 = sbr.rel (%p1027) target = $region128
        $region127: #{pointr_forward.1} parent=111 // pred_region
          %s1030 = sand.u32 %s54, 1
          %s1031 = scalar_lea.sflag [#allocation10], %s1030
          %s1032 = sand.u32 %s184, 1
          %s1033 = smul.addr %s1032, 1024
          %s1034 = scalar_lea.vmem [#allocation9], %s1033
          %s1035 = smul.u32 32, %s54
          %s1037 = ssub.s32 16384, 16384
          %1038 = vsyncadd %s1031, %s1037
          %s1039 = smul.addr %s1035, 8
          %s1040 = smul.addr %s1039, 64
          %s1041 = scalar_lea.hbm %s5, %s1040
          %s1042 = sshll.u32 %s1034, 4
          %s1043 = int_to_ptr.vmem [resolvable:$true] %s1042
          %1048 = dma.hbm_to_vmem [thread:$0]  %s1041, 16384, %s1043, %s1031, 512, 512, 32
        $region128: #{pointr_forward.1} parent=111 // pred_fallthru
          _
      $region112: #{pointr_forward.1} parent=5 // pred_fallthru
        _
      %p1049 = scmp.le.s32.totalorder 1, %s54
      %p1050 = scmp.lt.s32.totalorder %s54, 5
      %p1051 = pnand %p1049, %p1050
      %p1052 = pneg %p1051
      // Predicated region
      $region129: #{pointr_forward.1} parent=5 // pred_check
        _
      $region130: #{pointr_forward.1} parent=5 // pred_check_branch
        %1054 = sbr.rel (%p1051) target = $region132
      $region131: #{pointr_forward.1} parent=5 // pred_region
        %s1055 = ssub.s32 %s54, 1
        %s1056 = sand.u32 %s109, 1
        %s1057 = scalar_lea.sflag [#allocation5], %s1056
        %s1058 = sand.u32 %s109, 1
        %s1059 = smul.addr %s1058, 128
        %s1060 = scalar_lea.vmem [#allocation4], %s1059
        // Predicated region
        $region133: #{pointr_forward.1} parent=131 // pred_check
          %p1061 = pneg %p122
        $region134: #{pointr_forward.1} parent=131 // pred_check_branch
          %1063 = sbr.rel (%p1061) target = $region136
        $region135: #{pointr_forward.1} parent=131 // pred_region
          %1064 = dma.done %s1057, 2048
        $region136: #{pointr_forward.1} parent=131 // pred_fallthru
          _
        %s1065 = sand.u32 %s59, 1
        %s1066 = scalar_lea.sflag [#allocation7], %s1065
        %s1067 = sand.u32 %s135, 1
        %s1068 = smul.addr %s1067, 2
        %s1069 = scalar_lea.vmem [#allocation6], %s1068
        // Predicated region
        $region137: #{pointr_forward.1} parent=131 // pred_check
          %p1070 = pneg %p148
        $region138: #{pointr_forward.1} parent=131 // pred_check_branch
          %1072 = sbr.rel (%p1070) target = $region140
        $region139: #{pointr_forward.1} parent=131 // pred_region
          %1073 = dma.done %s1066, 32
        $region140: #{pointr_forward.1} parent=131 // pred_fallthru
          _
        %s1074 = sand.u32 %s59, 1
        %s1075 = scalar_lea.sflag [#allocation7], %s1074
        %s1076 = sand.u32 %s161, 1
        %s1077 = smul.addr %s1076, 2
        %s1078 = scalar_lea.vmem [#allocation8], %s1077
        // Predicated region
        $region141: #{pointr_forward.1} parent=131 // pred_check
          %p1079 = pneg %p174
        $region142: #{pointr_forward.1} parent=131 // pred_check_branch
          %1081 = sbr.rel (%p1079) target = $region144
        $region143: #{pointr_forward.1} parent=131 // pred_region
          %1082 = dma.done %s1075, 32
        $region144: #{pointr_forward.1} parent=131 // pred_fallthru
          _
        %s1083 = sand.u32 %s59, 1
        %s1084 = scalar_lea.sflag [#allocation10], %s1083
        %s1085 = sand.u32 %s187, 1
        %s1086 = smul.addr %s1085, 1024
        %s1087 = scalar_lea.vmem [#allocation9], %s1086
        // Predicated region
        $region145: #{pointr_forward.1} parent=131 // pred_check
          %p1088 = pneg %p200
        $region146: #{pointr_forward.1} parent=131 // pred_check_branch
          %1090 = sbr.rel (%p1088) target = $region148
        $region147: #{pointr_forward.1} parent=131 // pred_region
          %1091 = dma.done %s1084, 16384
        $region148: #{pointr_forward.1} parent=131 // pred_fallthru
          _
        // Predicated region
        $region149: #{pointr_forward.1} parent=131 // pred_check
          %p1092 = pneg %p221
        $region150: #{pointr_forward.1} parent=131 // pred_check_branch
          %1094 = sbr.rel (%p1092) target = $region152
        $region151: #{pointr_forward.1} parent=131 // pred_region
          %1095 = dma.done [#allocation10], 128
        $region152: #{pointr_forward.1} parent=131 // pred_fallthru
          _
        // Predicated region
        $region153: #{pointr_forward.1} parent=131 // pred_check
          %p1096 = pneg %p242
        $region154: #{pointr_forward.1} parent=131 // pred_check_branch
          %1098 = sbr.rel (%p1096) target = $region156
        $region155: #{pointr_forward.1} parent=131 // pred_region
          %1099 = dma.done [#allocation13], 8192
        $region156: #{pointr_forward.1} parent=131 // pred_fallthru
          _
        // Predicated region
        $region157: #{pointr_forward.1} parent=131 // pred_check
          %p1100 = pneg %p263
        $region158: #{pointr_forward.1} parent=131 // pred_check_branch
          %1102 = sbr.rel (%p1100) target = $region160
        $region159: #{pointr_forward.1} parent=131 // pred_region
          %1103 = dma.done [#allocation13], 1024
        $region160: #{pointr_forward.1} parent=131 // pred_fallthru
          _
        // Predicated region
        $region161: #{pointr_forward.1} parent=131 // pred_check
          %p1104 = pneg %p284
        $region162: #{pointr_forward.1} parent=131 // pred_check_branch
          %1106 = sbr.rel (%p1104) target = $region164
        $region163: #{pointr_forward.1} parent=131 // pred_region
          %1107 = dma.done [#allocation16], 64
        $region164: #{pointr_forward.1} parent=131 // pred_fallthru
          _
        // Predicated region
        $region165: #{pointr_forward.1} parent=131 // pred_check
          %p1108 = pneg %p305
        $region166: #{pointr_forward.1} parent=131 // pred_check_branch
          %1110 = sbr.rel (%p1108) target = $region168
        $region167: #{pointr_forward.1} parent=131 // pred_region
          %1111 = dma.done [#allocation16], 16
        $region168: #{pointr_forward.1} parent=131 // pred_fallthru
          _
        // Predicated region
        $region169: #{pointr_forward.1} parent=131 // pred_check
          %p1112 = pneg %p326
        $region170: #{pointr_forward.1} parent=131 // pred_check_branch
          %1114 = sbr.rel (%p1112) target = $region172
        $region171: #{pointr_forward.1} parent=131 // pred_region
          %1115 = dma.done [#allocation19], 2048
        $region172: #{pointr_forward.1} parent=131 // pred_fallthru
          _
        // Predicated region
        $region173: #{pointr_forward.1} parent=131 // pred_check
          %p1116 = pneg %p347
        $region174: #{pointr_forward.1} parent=131 // pred_check_branch
          %1118 = sbr.rel (%p1116) target = $region176
        $region175: #{pointr_forward.1} parent=131 // pred_region
          %1119 = dma.done [#allocation19], 32
        $region176: #{pointr_forward.1} parent=131 // pred_fallthru
          _
        // Predicated region
        $region177: #{pointr_forward.1} parent=131 // pred_check
          %p1120 = pneg %p368
        $region178: #{pointr_forward.1} parent=131 // pred_check_branch
          %1122 = sbr.rel (%p1120) target = $region180
        $region179: #{pointr_forward.1} parent=131 // pred_region
          %1123 = dma.done [#allocation22], 128
        $region180: #{pointr_forward.1} parent=131 // pred_fallthru
          _
        // Predicated region
        $region181: #{pointr_forward.1} parent=131 // pred_check
          %p1124 = pneg %p389
        $region182: #{pointr_forward.1} parent=131 // pred_check_branch
          %1126 = sbr.rel (%p1124) target = $region184
        $region183: #{pointr_forward.1} parent=131 // pred_region
          %1127 = dma.done [#allocation22], 2048
        $region184: #{pointr_forward.1} parent=131 // pred_fallthru
          _
        // Predicated region
        $region185: #{pointr_forward.1} parent=131 // pred_check
          %p1128 = pneg %p410
        $region186: #{pointr_forward.1} parent=131 // pred_check_branch
          %1130 = sbr.rel (%p1128) target = $region188
        $region187: #{pointr_forward.1} parent=131 // pred_region
          %1131 = dma.done [#allocation25], 16
        $region188: #{pointr_forward.1} parent=131 // pred_fallthru
          _
        // Predicated region
        $region189: #{pointr_forward.1} parent=131 // pred_check
          %p1132 = pneg %p431
        $region190: #{pointr_forward.1} parent=131 // pred_check_branch
          %1134 = sbr.rel (%p1132) target = $region192
        $region191: #{pointr_forward.1} parent=131 // pred_region
          %1135 = dma.done [#allocation25], 16
        $region192: #{pointr_forward.1} parent=131 // pred_fallthru
          _
        // Predicated region
        $region193: #{pointr_forward.1} parent=131 // pred_check
          %p1136 = pneg %p452
        $region194: #{pointr_forward.1} parent=131 // pred_check_branch
          %1138 = sbr.rel (%p1136) target = $region196
        $region195: #{pointr_forward.1} parent=131 // pred_region
          %1139 = dma.done [#allocation28], 1024
        $region196: #{pointr_forward.1} parent=131 // pred_fallthru
          _
        // Predicated region
        $region197: #{pointr_forward.1} parent=131 // pred_check
          %p1140 = pneg %p473
        $region198: #{pointr_forward.1} parent=131 // pred_check_branch
          %1142 = sbr.rel (%p1140) target = $region200
        $region199: #{pointr_forward.1} parent=131 // pred_region
          %1143 = dma.done [#allocation28], 16
        $region200: #{pointr_forward.1} parent=131 // pred_fallthru
          _
        // Predicated region
        $region201: #{pointr_forward.1} parent=131 // pred_check
          %p1144 = pneg %p494
        $region202: #{pointr_forward.1} parent=131 // pred_check_branch
          %1146 = sbr.rel (%p1144) target = $region204
        $region203: #{pointr_forward.1} parent=131 // pred_region
          %1147 = dma.done [#allocation31], 2048
        $region204: #{pointr_forward.1} parent=131 // pred_fallthru
          _
        // Predicated region
        $region205: #{pointr_forward.1} parent=131 // pred_check
          %p1148 = pneg %p515
        $region206: #{pointr_forward.1} parent=131 // pred_check_branch
          %1150 = sbr.rel (%p1148) target = $region208
        $region207: #{pointr_forward.1} parent=131 // pred_region
          %1151 = dma.done [#allocation31], 2048
        $region208: #{pointr_forward.1} parent=131 // pred_fallthru
          _
        // Predicated region
        $region209: #{pointr_forward.1} parent=131 // pred_check
          %p1152 = pneg %p536
        $region210: #{pointr_forward.1} parent=131 // pred_check_branch
          %1154 = sbr.rel (%p1152) target = $region212
        $region211: #{pointr_forward.1} parent=131 // pred_region
          %1155 = dma.done [#allocation34], 32
        $region212: #{pointr_forward.1} parent=131 // pred_fallthru
          _
        // Predicated region
        $region213: #{pointr_forward.1} parent=131 // pred_check
          %p1156 = pneg %p557
        $region214: #{pointr_forward.1} parent=131 // pred_check_branch
          %1158 = sbr.rel (%p1156) target = $region216
        $region215: #{pointr_forward.1} parent=131 // pred_region
          %1159 = dma.done [#allocation34], 32
        $region216: #{pointr_forward.1} parent=131 // pred_fallthru
          _
        // Predicated region
        $region217: #{pointr_forward.1} parent=131 // pred_check
          %p1160 = pneg %p578
        $region218: #{pointr_forward.1} parent=131 // pred_check_branch
          %1162 = sbr.rel (%p1160) target = $region220
        $region219: #{pointr_forward.1} parent=131 // pred_region
          %1163 = dma.done [#allocation37], 2048
        $region220: #{pointr_forward.1} parent=131 // pred_fallthru
          _
        // Predicated region
        $region221: #{pointr_forward.1} parent=131 // pred_check
          %p1164 = pneg %p599
        $region222: #{pointr_forward.1} parent=131 // pred_check_branch
          %1166 = sbr.rel (%p1164) target = $region224
        $region223: #{pointr_forward.1} parent=131 // pred_region
          %1167 = dma.done [#allocation37], 16
        $region224: #{pointr_forward.1} parent=131 // pred_fallthru
          _
        // Predicated region
        $region225: #{pointr_forward.1} parent=131 // pred_check
          %p1168 = pneg %p620
        $region226: #{pointr_forward.1} parent=131 // pred_check_branch
          %1170 = sbr.rel (%p1168) target = $region228
        $region227: #{pointr_forward.1} parent=131 // pred_region
          %1171 = dma.done [#allocation40], 16
        $region228: #{pointr_forward.1} parent=131 // pred_fallthru
          _
        // Predicated region
        $region229: #{pointr_forward.1} parent=131 // pred_check
          %p1172 = pneg %p641
        $region230: #{pointr_forward.1} parent=131 // pred_check_branch
          %1174 = sbr.rel (%p1172) target = $region232
        $region231: #{pointr_forward.1} parent=131 // pred_region
          %1175 = dma.done [#allocation40], 1024
        $region232: #{pointr_forward.1} parent=131 // pred_fallthru
          _
        // Predicated region
        $region233: #{pointr_forward.1} parent=131 // pred_check
          %p1176 = pneg %p662
        $region234: #{pointr_forward.1} parent=131 // pred_check_branch
          %1178 = sbr.rel (%p1176) target = $region236
        $region235: #{pointr_forward.1} parent=131 // pred_region
          %1179 = dma.done [#allocation43], 16
        $region236: #{pointr_forward.1} parent=131 // pred_fallthru
          _
        %p1180 = pneg %p75
        %p1181 = pneg %p72
        %p1182 = pneg %p96
        %p1183 = pneg %p93
        %s1184 = sand.u32 %s109, 1
        %s1185 = scalar_lea.sflag [#allocation5], %s1184
        %s1186 = sand.u32 %s109, 1
        %s1187 = smul.addr %s1186, 128
        %s1188 = scalar_lea.vmem [#allocation4], %s1187
        %p1189 = pneg %p122
        %p1190 = pneg %p119
        %s1191 = sand.u32 %s59, 1
        %s1192 = scalar_lea.sflag [#allocation7], %s1191
        %s1193 = sand.u32 %s135, 1
        %s1194 = smul.addr %s1193, 2
        %s1195 = scalar_lea.vmem [#allocation6], %s1194
        %p1196 = pneg %p148
        %p1197 = pneg %p145
        %s1198 = sand.u32 %s59, 1
        %s1199 = scalar_lea.sflag [#allocation7], %s1198
        %s1200 = sand.u32 %s161, 1
        %s1201 = smul.addr %s1200, 2
        %s1202 = scalar_lea.vmem [#allocation8], %s1201
        %p1203 = pneg %p174
        %p1204 = pneg %p171
        %s1205 = sand.u32 %s59, 1
        %s1206 = scalar_lea.sflag [#allocation10], %s1205
        %s1207 = sand.u32 %s187, 1
        %s1208 = smul.addr %s1207, 1024
        %s1209 = scalar_lea.vmem [#allocation9], %s1208
        %p1210 = pneg %p200
        %p1211 = pneg %p197
        %p1212 = pneg %p221
        %p1213 = pneg %p218
        %p1214 = pneg %p242
        %p1215 = pneg %p239
        %p1216 = pneg %p263
        %p1217 = pneg %p260
        %p1218 = pneg %p284
        %p1219 = pneg %p281
        %p1220 = pneg %p305
        %p1221 = pneg %p302
        %p1222 = pneg %p326
        %p1223 = pneg %p323
        %p1224 = pneg %p347
        %p1225 = pneg %p344
        %p1226 = pneg %p368
        %p1227 = pneg %p365
        %p1228 = pneg %p389
        %p1229 = pneg %p386
        %p1230 = pneg %p410
        %p1231 = pneg %p407
        %p1232 = pneg %p431
        %p1233 = pneg %p428
        %p1234 = pneg %p452
        %p1235 = pneg %p449
        %p1236 = pneg %p473
        %p1237 = pneg %p470
        %p1238 = pneg %p494
        %p1239 = pneg %p491
        %p1240 = pneg %p515
        %p1241 = pneg %p512
        %p1242 = pneg %p536
        %p1243 = pneg %p533
        %p1244 = pneg %p557
        %p1245 = pneg %p554
        %p1246 = pneg %p578
        %p1247 = pneg %p575
        %p1248 = pneg %p599
        %p1249 = pneg %p596
        %p1250 = pneg %p620
        %p1251 = pneg %p617
        %p1252 = pneg %p641
        %p1253 = pneg %p638
        %p1254 = pneg %p662
        %p1255 = pneg %p659
        %p1256 = pneg %p683
        %p1257 = pneg %p680
        %s1258 = smul.u32 2, %s59
        %s1259 = smul.u32 2, %s59
        %s1260 = smul.u32 2, %s59
        %s1261 = smul.u32 32, %s59
        %v1263 = vld [vmem:[%s0] sm:$0xff]
        %v1264 = vld [vmem:[%s0 + $0x8] sm:$0xff]
        %v1265 = vld [vmem:[%s0 + $0x10] sm:$0xff]
        %v1266 = vld [vmem:[%s0 + $0x18] sm:$0xff]
        %v1267 = vpack.c.bf16 %v1264, %v1263
        %v1268 = vpack.c.bf16 %v1266, %v1265
        %p1269 = scmp.eq.s32.totalorder %s59, 0
        // Predicated region
        $region237: #{pointr_forward.1} parent=131 // pred_check
          %p1270 = pneg %p1269
        $region238: #{pointr_forward.1} parent=131 // pred_check_branch
          %1272 = sbr.rel (%p1270) target = $region240
        $region239: #{pointr_forward.1} parent=131 // pred_region
          %1273 = vst [vmem:[#allocation2] sm:$0xff] 0.0
          %1274 = vst [vmem:[#allocation2 + $0x8] sm:$0xff] 0.0
          %1275 = vst [vmem:[#allocation2 + $0x10] sm:$0xff] 0.0
          %1276 = vst [vmem:[#allocation2 + $0x18] sm:$0xff] 0.0
          %1277 = vst [vmem:[#allocation2 + $0x20] sm:$0xff] 0.0
          %1278 = vst [vmem:[#allocation2 + $0x28] sm:$0xff] 0.0
          %1279 = vst [vmem:[#allocation2 + $0x30] sm:$0xff] 0.0
          %1280 = vst [vmem:[#allocation2 + $0x38] sm:$0xff] 0.0
          %1281 = vst [vmem:[#allocation2 + $0x40] sm:$0xff] 0.0
          %1282 = vst [vmem:[#allocation2 + $0x48] sm:$0xff] 0.0
          %1283 = vst [vmem:[#allocation2 + $0x50] sm:$0xff] 0.0
          %1284 = vst [vmem:[#allocation2 + $0x58] sm:$0xff] 0.0
          %1285 = vst [vmem:[#allocation2 + $0x60] sm:$0xff] 0.0
          %1286 = vst [vmem:[#allocation2 + $0x68] sm:$0xff] 0.0
          %1287 = vst [vmem:[#allocation2 + $0x70] sm:$0xff] 0.0
          %1288 = vst [vmem:[#allocation2 + $0x78] sm:$0xff] 0.0
          %1289 = vst [vmem:[#allocation2 + $0x80] sm:$0xff] 0.0
          %1290 = vst [vmem:[#allocation2 + $0x88] sm:$0xff] 0.0
          %1291 = vst [vmem:[#allocation2 + $0x90] sm:$0xff] 0.0
          %1292 = vst [vmem:[#allocation2 + $0x98] sm:$0xff] 0.0
          %1293 = vst [vmem:[#allocation2 + $0xa0] sm:$0xff] 0.0
          %1294 = vst [vmem:[#allocation2 + $0xa8] sm:$0xff] 0.0
          %1295 = vst [vmem:[#allocation2 + $0xb0] sm:$0xff] 0.0
          %1296 = vst [vmem:[#allocation2 + $0xb8] sm:$0xff] 0.0
          %1297 = vst [vmem:[#allocation2 + $0xc0] sm:$0xff] 0.0
          %1298 = vst [vmem:[#allocation2 + $0xc8] sm:$0xff] 0.0
          %1299 = vst [vmem:[#allocation2 + $0xd0] sm:$0xff] 0.0
          %1300 = vst [vmem:[#allocation2 + $0xd8] sm:$0xff] 0.0
          %1301 = vst [vmem:[#allocation2 + $0xe0] sm:$0xff] 0.0
          %1302 = vst [vmem:[#allocation2 + $0xe8] sm:$0xff] 0.0
          %1303 = vst [vmem:[#allocation2 + $0xf0] sm:$0xff] 0.0
          %1304 = vst [vmem:[#allocation2 + $0xf8] sm:$0xff] 0.0
        $region240: #{pointr_forward.1} parent=131 // pred_fallthru
          _
        %v1305 = vld [vmem:[%s1060] sm:$0xff]
        %v1306 = vld [vmem:[%s1060 + $0x8] sm:$0xff]
        %v1307 = vld [vmem:[%s1060 + $0x10] sm:$0xff]
        %v1308 = vld [vmem:[%s1060 + $0x18] sm:$0xff]
        %v1309 = vld [vmem:[%s1060 + $0x20] sm:$0xff]
        %v1310 = vld [vmem:[%s1060 + $0x28] sm:$0xff]
        %v1311 = vld [vmem:[%s1060 + $0x30] sm:$0xff]
        %v1312 = vld [vmem:[%s1060 + $0x38] sm:$0xff]
        %v1313 = vld [vmem:[%s1060 + $0x40] sm:$0xff]
        %v1314 = vld [vmem:[%s1060 + $0x48] sm:$0xff]
        %v1315 = vld [vmem:[%s1060 + $0x50] sm:$0xff]
        %v1316 = vld [vmem:[%s1060 + $0x58] sm:$0xff]
        %v1317 = vld [vmem:[%s1060 + $0x60] sm:$0xff]
        %v1318 = vld [vmem:[%s1060 + $0x68] sm:$0xff]
        %v1319 = vld [vmem:[%s1060 + $0x70] sm:$0xff]
        %v1320 = vld [vmem:[%s1060 + $0x78] sm:$0xff]
        %v1337 = vunpack.c.l.b16 %v1305
        %v1338 = vunpack.c.h.b16 %v1305
        %v1339 = vunpack.c.l.b16 %v1306
        %v1340 = vunpack.c.h.b16 %v1306
        %v1341 = vunpack.c.l.b16 %v1307
        %v1342 = vunpack.c.h.b16 %v1307
        %v1343 = vunpack.c.l.b16 %v1308
        %v1344 = vunpack.c.h.b16 %v1308
        %v1345 = vunpack.c.l.b16 %v1309
        %v1346 = vunpack.c.h.b16 %v1309
        %v1347 = vunpack.c.l.b16 %v1310
        %v1348 = vunpack.c.h.b16 %v1310
        %v1349 = vunpack.c.l.b16 %v1311
        %v1350 = vunpack.c.h.b16 %v1311
        %v1351 = vunpack.c.l.b16 %v1312
        %v1352 = vunpack.c.h.b16 %v1312
        %v1353 = vunpack.c.l.b16 %v1313
        %v1354 = vunpack.c.h.b16 %v1313
        %v1355 = vunpack.c.l.b16 %v1314
        %v1356 = vunpack.c.h.b16 %v1314
        %v1357 = vunpack.c.l.b16 %v1315
        %v1358 = vunpack.c.h.b16 %v1315
        %v1359 = vunpack.c.l.b16 %v1316
        %v1360 = vunpack.c.h.b16 %v1316
        %v1361 = vunpack.c.l.b16 %v1317
        %v1362 = vunpack.c.h.b16 %v1317
        %v1363 = vunpack.c.l.b16 %v1318
        %v1364 = vunpack.c.h.b16 %v1318
        %v1365 = vunpack.c.l.b16 %v1319
        %v1366 = vunpack.c.h.b16 %v1319
        %v1367 = vunpack.c.l.b16 %v1320
        %v1368 = vunpack.c.h.b16 %v1320
        %v1369 = vpack.c.b16 %v1339, %v1337
        %v1370 = vpack.c.b16 %v1340, %v1338
        %v1371 = vpack.c.b16 %v1343, %v1341
        %v1372 = vpack.c.b16 %v1344, %v1342
        %v1373 = vpack.c.b16 %v1347, %v1345
        %v1374 = vpack.c.b16 %v1348, %v1346
        %v1375 = vpack.c.b16 %v1351, %v1349
        %v1376 = vpack.c.b16 %v1352, %v1350
        %v1377 = vpack.c.b16 %v1355, %v1353
        %v1378 = vpack.c.b16 %v1356, %v1354
        %v1379 = vpack.c.b16 %v1359, %v1357
        %v1380 = vpack.c.b16 %v1360, %v1358
        %v1381 = vpack.c.b16 %v1363, %v1361
        %v1382 = vpack.c.b16 %v1364, %v1362
        %v1383 = vpack.c.b16 %v1367, %v1365
        %v1384 = vpack.c.b16 %v1368, %v1366
        %1401 = vmatprep.subr.bf16.mxu0 %v1370
        %1402 = vmatpush1.bf16.msra.mxu0 %v1369
        %1403 = vmatprep.subr.bf16.mxu0 %v1372
        %1404 = vmatpush1.bf16.msra.mxu0 %v1371
        %1405 = vmatprep.subr.bf16.mxu0 %v1374
        %1406 = vmatpush1.bf16.msra.mxu0 %v1373
        %1407 = vmatprep.subr.bf16.mxu0 %v1376
        %1408 = vmatpush1.bf16.msra.mxu0 %v1375
        %1409 = vmatprep.subr.bf16.mxu0 %v1378
        %1410 = vmatpush1.bf16.msra.mxu0 %v1377
        %1411 = vmatprep.subr.bf16.mxu0 %v1380
        %1412 = vmatpush1.bf16.msra.mxu0 %v1379
        %1413 = vmatprep.subr.bf16.mxu0 %v1382
        %1414 = vmatpush1.bf16.msra.mxu0 %v1381
        %1415 = vmatprep.subr.bf16.mxu0 %v1384
        %1416 = vmatpush1.bf16.msra.mxu0 %v1383
        %1417 = vmatprep.subr.bf16.mxu0 0
        %1418 = vmatpush1.bf16.msra.mxu0 0
        %1419 = vmatprep.subr.bf16.mxu0 0
        %1420 = vmatpush1.bf16.msra.mxu0 0
        %1421 = vmatprep.subr.bf16.mxu0 0
        %1422 = vmatpush1.bf16.msra.mxu0 0
        %1423 = vmatprep.subr.bf16.mxu0 0
        %1424 = vmatpush1.bf16.msra.mxu0 0
        %1425 = vmatprep.subr.bf16.mxu0 0
        %1426 = vmatpush1.bf16.msra.mxu0 0
        %1427 = vmatprep.subr.bf16.mxu0 0
        %1428 = vmatpush1.bf16.msra.mxu0 0
        %1429 = vmatprep.subr.bf16.mxu0 0
        %1430 = vmatpush1.bf16.msra.mxu0 0
        %1431 = vmatprep.subr.bf16.mxu0 0
        %1432 = vmatpush1.bf16.msra.mxu0 0
        %1433 = vmatprep.mubr.bf16.mxu0 0
        %1434 = vmatmul.mubr.bf16.gmra.mrb[0].mxu0 %v1267
        %v1435 = vpop.f32.mrb[0].mxu0
        %v1436 = vadd.f32 0.0, %v1435
        %v1437 = vpop.f32.mrb[0].mxu0
        %v1438 = vadd.f32 0.0, %v1437
        %v1439 = vpop.f32.mrb[0].mxu0
        %v1440 = vadd.f32 0.0, %v1439
        %v1441 = vpop.f32.mrb[0].mxu0
        %v1442 = vadd.f32 0.0, %v1441
        %1443 = vmatprep.mubr.bf16.mxu0 0
        %1444 = vmatmul.mubr.bf16.gmra.mrb[0].mxu0 %v1268
        %v1445 = vpop.f32.mrb[0].mxu0
        %v1446 = vadd.f32 0.0, %v1445
        %v1447 = vpop.f32.mrb[0].mxu0
        %v1448 = vadd.f32 0.0, %v1447
        %v1449 = vpop.f32.mrb[0].mxu0
        %v1450 = vadd.f32 0.0, %v1449
        %v1451 = vpop.f32.mrb[0].mxu0
        %v1452 = vadd.f32 0.0, %v1451
        %1453 = vdwg.mxu0
        %v1454 = vld [vmem:[%s1069] sm:$0x3]
        %v1456 = vlaneseq
        %v1457 = vshrl.u32 %v1456, 7
        %v1458 = vsub.s32 0, %v1457
        %v1459 = vrot.slane %v1454, %v1458
        %v1460 = vlaneseq
        %v1461 = vshrl.u32 %v1460, 7
        %v1462 = vsub.s32 1, %v1461
        %v1463 = vrot.slane %v1454, %v1462
        %v1466 = vmul.f32 %v1436, %v1459
        %v1467 = vmul.f32 %v1438, %v1463
        %v1468 = vmul.f32 %v1440, %v1459
        %v1469 = vmul.f32 %v1442, %v1463
        %v1470 = vmul.f32 %v1446, %v1459
        %v1471 = vmul.f32 %v1448, %v1463
        %v1472 = vmul.f32 %v1450, %v1459
        %v1473 = vmul.f32 %v1452, %v1463
        %v1474 = vld [vmem:[%s1078] sm:$0x3]
        %v1476 = vlaneseq
        %v1477 = vshrl.u32 %v1476, 7
        %v1478 = vsub.s32 0, %v1477
        %v1479 = vrot.slane %v1474, %v1478
        %v1480 = vlaneseq
        %v1481 = vshrl.u32 %v1480, 7
        %v1482 = vsub.s32 1, %v1481
        %v1483 = vrot.slane %v1474, %v1482
        %v1486 = vadd.f32 %v1466, %v1479
        %v1487 = vadd.f32 %v1467, %v1483
        %v1488 = vadd.f32 %v1468, %v1479
        %v1489 = vadd.f32 %v1469, %v1483
        %v1490 = vadd.f32 %v1470, %v1479
        %v1491 = vadd.f32 %v1471, %v1483
        %v1492 = vadd.f32 %v1472, %v1479
        %v1493 = vadd.f32 %v1473, %v1483
        %vm1494 = vcmp.gt.f32.partialorder %v1486, 0.0
        %vm1495 = vcmp.gt.f32.partialorder %v1487, 0.0
        %vm1496 = vcmp.gt.f32.partialorder %v1488, 0.0
        %vm1497 = vcmp.gt.f32.partialorder %v1489, 0.0
        %vm1498 = vcmp.gt.f32.partialorder %v1490, 0.0
        %vm1499 = vcmp.gt.f32.partialorder %v1491, 0.0
        %vm1500 = vcmp.gt.f32.partialorder %v1492, 0.0
        %vm1501 = vcmp.gt.f32.partialorder %v1493, 0.0
        %v1502 = vmul.f32 %v1486, 0.2
        %v1503 = vmul.f32 %v1487, 0.2
        %v1504 = vmul.f32 %v1488, 0.2
        %v1505 = vmul.f32 %v1489, 0.2
        %v1506 = vmul.f32 %v1490, 0.2
        %v1507 = vmul.f32 %v1491, 0.2
        %v1508 = vmul.f32 %v1492, 0.2
        %v1509 = vmul.f32 %v1493, 0.2
        %v1510 = vsel %vm1494, %v1486, %v1502
        %v1511 = vsel %vm1495, %v1487, %v1503
        %v1512 = vsel %vm1496, %v1488, %v1504
        %v1513 = vsel %vm1497, %v1489, %v1505
        %v1514 = vsel %vm1498, %v1490, %v1506
        %v1515 = vsel %vm1499, %v1491, %v1507
        %v1516 = vsel %vm1500, %v1492, %v1508
        %v1517 = vsel %vm1501, %v1493, %v1509
        %v1518 = vld [vmem:[#allocation2] sm:$0xff]
        %v1519 = vld [vmem:[#allocation2 + $0x8] sm:$0xff]
        %v1520 = vld [vmem:[#allocation2 + $0x10] sm:$0xff]
        %v1521 = vld [vmem:[#allocation2 + $0x18] sm:$0xff]
        %v1522 = vld [vmem:[#allocation2 + $0x20] sm:$0xff]
        %v1523 = vld [vmem:[#allocation2 + $0x28] sm:$0xff]
        %v1524 = vld [vmem:[#allocation2 + $0x30] sm:$0xff]
        %v1525 = vld [vmem:[#allocation2 + $0x38] sm:$0xff]
        %v1526 = vld [vmem:[#allocation2 + $0x40] sm:$0xff]
        %v1527 = vld [vmem:[#allocation2 + $0x48] sm:$0xff]
        %v1528 = vld [vmem:[#allocation2 + $0x50] sm:$0xff]
        %v1529 = vld [vmem:[#allocation2 + $0x58] sm:$0xff]
        %v1530 = vld [vmem:[#allocation2 + $0x60] sm:$0xff]
        %v1531 = vld [vmem:[#allocation2 + $0x68] sm:$0xff]
        %v1532 = vld [vmem:[#allocation2 + $0x70] sm:$0xff]
        %v1533 = vld [vmem:[#allocation2 + $0x78] sm:$0xff]
        %v1534 = vld [vmem:[#allocation2 + $0x80] sm:$0xff]
        %v1535 = vld [vmem:[#allocation2 + $0x88] sm:$0xff]
        %v1536 = vld [vmem:[#allocation2 + $0x90] sm:$0xff]
        %v1537 = vld [vmem:[#allocation2 + $0x98] sm:$0xff]
        %v1538 = vld [vmem:[#allocation2 + $0xa0] sm:$0xff]
        %v1539 = vld [vmem:[#allocation2 + $0xa8] sm:$0xff]
        %v1540 = vld [vmem:[#allocation2 + $0xb0] sm:$0xff]
        %v1541 = vld [vmem:[#allocation2 + $0xb8] sm:$0xff]
        %v1542 = vld [vmem:[#allocation2 + $0xc0] sm:$0xff]
        %v1543 = vld [vmem:[#allocation2 + $0xc8] sm:$0xff]
        %v1544 = vld [vmem:[#allocation2 + $0xd0] sm:$0xff]
        %v1545 = vld [vmem:[#allocation2 + $0xd8] sm:$0xff]
        %v1546 = vld [vmem:[#allocation2 + $0xe0] sm:$0xff]
        %v1547 = vld [vmem:[#allocation2 + $0xe8] sm:$0xff]
        %v1548 = vld [vmem:[#allocation2 + $0xf0] sm:$0xff]
        %v1549 = vld [vmem:[#allocation2 + $0xf8] sm:$0xff]
        %v1550 = vpack.c.bf16 %v1512, %v1510
        %v1551 = vpack.c.bf16 %v1513, %v1511
        %v1552 = vpack.c.bf16 %v1516, %v1514
        %v1553 = vpack.c.bf16 %v1517, %v1515
        %v1554 = vld [vmem:[%s1087] sm:$0xff]
        %v1555 = vld [vmem:[%s1087 + $0x8] sm:$0xff]
        %v1556 = vld [vmem:[%s1087 + $0x10] sm:$0xff]
        %v1557 = vld [vmem:[%s1087 + $0x18] sm:$0xff]
        %v1558 = vld [vmem:[%s1087 + $0x20] sm:$0xff]
        %v1559 = vld [vmem:[%s1087 + $0x28] sm:$0xff]
        %v1560 = vld [vmem:[%s1087 + $0x30] sm:$0xff]
        %v1561 = vld [vmem:[%s1087 + $0x38] sm:$0xff]
        %v1562 = vld [vmem:[%s1087 + $0x40] sm:$0xff]
        %v1563 = vld [vmem:[%s1087 + $0x48] sm:$0xff]
        %v1564 = vld [vmem:[%s1087 + $0x50] sm:$0xff]
        %v1565 = vld [vmem:[%s1087 + $0x58] sm:$0xff]
        %v1566 = vld [vmem:[%s1087 + $0x60] sm:$0xff]
        %v1567 = vld [vmem:[%s1087 + $0x68] sm:$0xff]
        %v1568 = vld [vmem:[%s1087 + $0x70] sm:$0xff]
        %v1569 = vld [vmem:[%s1087 + $0x78] sm:$0xff]
        %v1570 = vld [vmem:[%s1087 + $0x80] sm:$0xff]
        %v1571 = vld [vmem:[%s1087 + $0x88] sm:$0xff]
        %v1572 = vld [vmem:[%s1087 + $0x90] sm:$0xff]
        %v1573 = vld [vmem:[%s1087 + $0x98] sm:$0xff]
        %v1574 = vld [vmem:[%s1087 + $0xa0] sm:$0xff]
        %v1575 = vld [vmem:[%s1087 + $0xa8] sm:$0xff]
        %v1576 = vld [vmem:[%s1087 + $0xb0] sm:$0xff]
        %v1577 = vld [vmem:[%s1087 + $0xb8] sm:$0xff]
        %v1578 = vld [vmem:[%s1087 + $0xc0] sm:$0xff]
        %v1579 = vld [vmem:[%s1087 + $0xc8] sm:$0xff]
        %v1580 = vld [vmem:[%s1087 + $0xd0] sm:$0xff]
        %v1581 = vld [vmem:[%s1087 + $0xd8] sm:$0xff]
        %v1582 = vld [vmem:[%s1087 + $0xe0] sm:$0xff]
        %v1583 = vld [vmem:[%s1087 + $0xe8] sm:$0xff]
        %v1584 = vld [vmem:[%s1087 + $0xf0] sm:$0xff]
        %v1585 = vld [vmem:[%s1087 + $0xf8] sm:$0xff]
        %v1586 = vld [vmem:[%s1087 + $0x100] sm:$0xff]
        %v1587 = vld [vmem:[%s1087 + $0x108] sm:$0xff]
        %v1588 = vld [vmem:[%s1087 + $0x110] sm:$0xff]
        %v1589 = vld [vmem:[%s1087 + $0x118] sm:$0xff]
        %v1590 = vld [vmem:[%s1087 + $0x120] sm:$0xff]
        %v1591 = vld [vmem:[%s1087 + $0x128] sm:$0xff]
        %v1592 = vld [vmem:[%s1087 + $0x130] sm:$0xff]
        %v1593 = vld [vmem:[%s1087 + $0x138] sm:$0xff]
        %v1594 = vld [vmem:[%s1087 + $0x140] sm:$0xff]
        %v1595 = vld [vmem:[%s1087 + $0x148] sm:$0xff]
        %v1596 = vld [vmem:[%s1087 + $0x150] sm:$0xff]
        %v1597 = vld [vmem:[%s1087 + $0x158] sm:$0xff]
        %v1598 = vld [vmem:[%s1087 + $0x160] sm:$0xff]
        %v1599 = vld [vmem:[%s1087 + $0x168] sm:$0xff]
        %v1600 = vld [vmem:[%s1087 + $0x170] sm:$0xff]
        %v1601 = vld [vmem:[%s1087 + $0x178] sm:$0xff]
        %v1602 = vld [vmem:[%s1087 + $0x180] sm:$0xff]
        %v1603 = vld [vmem:[%s1087 + $0x188] sm:$0xff]
        %v1604 = vld [vmem:[%s1087 + $0x190] sm:$0xff]
        %v1605 = vld [vmem:[%s1087 + $0x198] sm:$0xff]
        %v1606 = vld [vmem:[%s1087 + $0x1a0] sm:$0xff]
        %v1607 = vld [vmem:[%s1087 + $0x1a8] sm:$0xff]
        %v1608 = vld [vmem:[%s1087 + $0x1b0] sm:$0xff]
        %v1609 = vld [vmem:[%s1087 + $0x1b8] sm:$0xff]
        %v1610 = vld [vmem:[%s1087 + $0x1c0] sm:$0xff]
        %v1611 = vld [vmem:[%s1087 + $0x1c8] sm:$0xff]
        %v1612 = vld [vmem:[%s1087 + $0x1d0] sm:$0xff]
        %v1613 = vld [vmem:[%s1087 + $0x1d8] sm:$0xff]
        %v1614 = vld [vmem:[%s1087 + $0x1e0] sm:$0xff]
        %v1615 = vld [vmem:[%s1087 + $0x1e8] sm:$0xff]
        %v1616 = vld [vmem:[%s1087 + $0x1f0] sm:$0xff]
        %v1617 = vld [vmem:[%s1087 + $0x1f8] sm:$0xff]
        %v1618 = vld [vmem:[%s1087 + $0x200] sm:$0xff]
        %v1619 = vld [vmem:[%s1087 + $0x208] sm:$0xff]
        %v1620 = vld [vmem:[%s1087 + $0x210] sm:$0xff]
        %v1621 = vld [vmem:[%s1087 + $0x218] sm:$0xff]
        %v1622 = vld [vmem:[%s1087 + $0x220] sm:$0xff]
        %v1623 = vld [vmem:[%s1087 + $0x228] sm:$0xff]
        %v1624 = vld [vmem:[%s1087 + $0x230] sm:$0xff]
        %v1625 = vld [vmem:[%s1087 + $0x238] sm:$0xff]
        %v1626 = vld [vmem:[%s1087 + $0x240] sm:$0xff]
        %v1627 = vld [vmem:[%s1087 + $0x248] sm:$0xff]
        %v1628 = vld [vmem:[%s1087 + $0x250] sm:$0xff]
        %v1629 = vld [vmem:[%s1087 + $0x258] sm:$0xff]
        %v1630 = vld [vmem:[%s1087 + $0x260] sm:$0xff]
        %v1631 = vld [vmem:[%s1087 + $0x268] sm:$0xff]
        %v1632 = vld [vmem:[%s1087 + $0x270] sm:$0xff]
        %v1633 = vld [vmem:[%s1087 + $0x278] sm:$0xff]
        %v1634 = vld [vmem:[%s1087 + $0x280] sm:$0xff]
        %v1635 = vld [vmem:[%s1087 + $0x288] sm:$0xff]
        %v1636 = vld [vmem:[%s1087 + $0x290] sm:$0xff]
        %v1637 = vld [vmem:[%s1087 + $0x298] sm:$0xff]
        %v1638 = vld [vmem:[%s1087 + $0x2a0] sm:$0xff]
        %v1639 = vld [vmem:[%s1087 + $0x2a8] sm:$0xff]
        %v1640 = vld [vmem:[%s1087 + $0x2b0] sm:$0xff]
        %v1641 = vld [vmem:[%s1087 + $0x2b8] sm:$0xff]
        %v1642 = vld [vmem:[%s1087 + $0x2c0] sm:$0xff]
        %v1643 = vld [vmem:[%s1087 + $0x2c8] sm:$0xff]
        %v1644 = vld [vmem:[%s1087 + $0x2d0] sm:$0xff]
        %v1645 = vld [vmem:[%s1087 + $0x2d8] sm:$0xff]
        %v1646 = vld [vmem:[%s1087 + $0x2e0] sm:$0xff]
        %v1647 = vld [vmem:[%s1087 + $0x2e8] sm:$0xff]
        %v1648 = vld [vmem:[%s1087 + $0x2f0] sm:$0xff]
        %v1649 = vld [vmem:[%s1087 + $0x2f8] sm:$0xff]
        %v1650 = vld [vmem:[%s1087 + $0x300] sm:$0xff]
        %v1651 = vld [vmem:[%s1087 + $0x308] sm:$0xff]
        %v1652 = vld [vmem:[%s1087 + $0x310] sm:$0xff]
        %v1653 = vld [vmem:[%s1087 + $0x318] sm:$0xff]
        %v1654 = vld [vmem:[%s1087 + $0x320] sm:$0xff]
        %v1655 = vld [vmem:[%s1087 + $0x328] sm:$0xff]
        %v1656 = vld [vmem:[%s1087 + $0x330] sm:$0xff]
        %v1657 = vld [vmem:[%s1087 + $0x338] sm:$0xff]
        %v1658 = vld [vmem:[%s1087 + $0x340] sm:$0xff]
        %v1659 = vld [vmem:[%s1087 + $0x348] sm:$0xff]
        %v1660 = vld [vmem:[%s1087 + $0x350] sm:$0xff]
        %v1661 = vld [vmem:[%s1087 + $0x358] sm:$0xff]
        %v1662 = vld [vmem:[%s1087 + $0x360] sm:$0xff]
        %v1663 = vld [vmem:[%s1087 + $0x368] sm:$0xff]
        %v1664 = vld [vmem:[%s1087 + $0x370] sm:$0xff]
        %v1665 = vld [vmem:[%s1087 + $0x378] sm:$0xff]
        %v1666 = vld [vmem:[%s1087 + $0x380] sm:$0xff]
        %v1667 = vld [vmem:[%s1087 + $0x388] sm:$0xff]
        %v1668 = vld [vmem:[%s1087 + $0x390] sm:$0xff]
        %v1669 = vld [vmem:[%s1087 + $0x398] sm:$0xff]
        %v1670 = vld [vmem:[%s1087 + $0x3a0] sm:$0xff]
        %v1671 = vld [vmem:[%s1087 + $0x3a8] sm:$0xff]
        %v1672 = vld [vmem:[%s1087 + $0x3b0] sm:$0xff]
        %v1673 = vld [vmem:[%s1087 + $0x3b8] sm:$0xff]
        %v1674 = vld [vmem:[%s1087 + $0x3c0] sm:$0xff]
        %v1675 = vld [vmem:[%s1087 + $0x3c8] sm:$0xff]
        %v1676 = vld [vmem:[%s1087 + $0x3d0] sm:$0xff]
        %v1677 = vld [vmem:[%s1087 + $0x3d8] sm:$0xff]
        %v1678 = vld [vmem:[%s1087 + $0x3e0] sm:$0xff]
        %v1679 = vld [vmem:[%s1087 + $0x3e8] sm:$0xff]
        %v1680 = vld [vmem:[%s1087 + $0x3f0] sm:$0xff]
        %v1681 = vld [vmem:[%s1087 + $0x3f8] sm:$0xff]
        %v1810 = vunpack.c.l.b16 %v1554
        %v1811 = vunpack.c.h.b16 %v1554
        %v1812 = vunpack.c.l.b16 %v1555
        %v1813 = vunpack.c.h.b16 %v1555
        %v1814 = vunpack.c.l.b16 %v1556
        %v1815 = vunpack.c.h.b16 %v1556
        %v1816 = vunpack.c.l.b16 %v1557
        %v1817 = vunpack.c.h.b16 %v1557
        %v1818 = vunpack.c.l.b16 %v1558
        %v1819 = vunpack.c.h.b16 %v1558
        %v1820 = vunpack.c.l.b16 %v1559
        %v1821 = vunpack.c.h.b16 %v1559
        %v1822 = vunpack.c.l.b16 %v1560
        %v1823 = vunpack.c.h.b16 %v1560
        %v1824 = vunpack.c.l.b16 %v1561
        %v1825 = vunpack.c.h.b16 %v1561
        %v1826 = vunpack.c.l.b16 %v1562
        %v1827 = vunpack.c.h.b16 %v1562
        %v1828 = vunpack.c.l.b16 %v1563
        %v1829 = vunpack.c.h.b16 %v1563
        %v1830 = vunpack.c.l.b16 %v1564
        %v1831 = vunpack.c.h.b16 %v1564
        %v1832 = vunpack.c.l.b16 %v1565
        %v1833 = vunpack.c.h.b16 %v1565
        %v1834 = vunpack.c.l.b16 %v1566
        %v1835 = vunpack.c.h.b16 %v1566
        %v1836 = vunpack.c.l.b16 %v1567
        %v1837 = vunpack.c.h.b16 %v1567
        %v1838 = vunpack.c.l.b16 %v1568
        %v1839 = vunpack.c.h.b16 %v1568
        %v1840 = vunpack.c.l.b16 %v1569
        %v1841 = vunpack.c.h.b16 %v1569
        %v1842 = vunpack.c.l.b16 %v1570
        %v1843 = vunpack.c.h.b16 %v1570
        %v1844 = vunpack.c.l.b16 %v1571
        %v1845 = vunpack.c.h.b16 %v1571
        %v1846 = vunpack.c.l.b16 %v1572
        %v1847 = vunpack.c.h.b16 %v1572
        %v1848 = vunpack.c.l.b16 %v1573
        %v1849 = vunpack.c.h.b16 %v1573
        %v1850 = vunpack.c.l.b16 %v1574
        %v1851 = vunpack.c.h.b16 %v1574
        %v1852 = vunpack.c.l.b16 %v1575
        %v1853 = vunpack.c.h.b16 %v1575
        %v1854 = vunpack.c.l.b16 %v1576
        %v1855 = vunpack.c.h.b16 %v1576
        %v1856 = vunpack.c.l.b16 %v1577
        %v1857 = vunpack.c.h.b16 %v1577
        %v1858 = vunpack.c.l.b16 %v1578
        %v1859 = vunpack.c.h.b16 %v1578
        %v1860 = vunpack.c.l.b16 %v1579
        %v1861 = vunpack.c.h.b16 %v1579
        %v1862 = vunpack.c.l.b16 %v1580
        %v1863 = vunpack.c.h.b16 %v1580
        %v1864 = vunpack.c.l.b16 %v1581
        %v1865 = vunpack.c.h.b16 %v1581
        %v1866 = vunpack.c.l.b16 %v1582
        %v1867 = vunpack.c.h.b16 %v1582
        %v1868 = vunpack.c.l.b16 %v1583
        %v1869 = vunpack.c.h.b16 %v1583
        %v1870 = vunpack.c.l.b16 %v1584
        %v1871 = vunpack.c.h.b16 %v1584
        %v1872 = vunpack.c.l.b16 %v1585
        %v1873 = vunpack.c.h.b16 %v1585
        %v1874 = vunpack.c.l.b16 %v1586
        %v1875 = vunpack.c.h.b16 %v1586
        %v1876 = vunpack.c.l.b16 %v1587
        %v1877 = vunpack.c.h.b16 %v1587
        %v1878 = vunpack.c.l.b16 %v1588
        %v1879 = vunpack.c.h.b16 %v1588
        %v1880 = vunpack.c.l.b16 %v1589
        %v1881 = vunpack.c.h.b16 %v1589
        %v1882 = vunpack.c.l.b16 %v1590
        %v1883 = vunpack.c.h.b16 %v1590
        %v1884 = vunpack.c.l.b16 %v1591
        %v1885 = vunpack.c.h.b16 %v1591
        %v1886 = vunpack.c.l.b16 %v1592
        %v1887 = vunpack.c.h.b16 %v1592
        %v1888 = vunpack.c.l.b16 %v1593
        %v1889 = vunpack.c.h.b16 %v1593
        %v1890 = vunpack.c.l.b16 %v1594
        %v1891 = vunpack.c.h.b16 %v1594
        %v1892 = vunpack.c.l.b16 %v1595
        %v1893 = vunpack.c.h.b16 %v1595
        %v1894 = vunpack.c.l.b16 %v1596
        %v1895 = vunpack.c.h.b16 %v1596
        %v1896 = vunpack.c.l.b16 %v1597
        %v1897 = vunpack.c.h.b16 %v1597
        %v1898 = vunpack.c.l.b16 %v1598
        %v1899 = vunpack.c.h.b16 %v1598
        %v1900 = vunpack.c.l.b16 %v1599
        %v1901 = vunpack.c.h.b16 %v1599
        %v1902 = vunpack.c.l.b16 %v1600
        %v1903 = vunpack.c.h.b16 %v1600
        %v1904 = vunpack.c.l.b16 %v1601
        %v1905 = vunpack.c.h.b16 %v1601
        %v1906 = vunpack.c.l.b16 %v1602
        %v1907 = vunpack.c.h.b16 %v1602
        %v1908 = vunpack.c.l.b16 %v1603
        %v1909 = vunpack.c.h.b16 %v1603
        %v1910 = vunpack.c.l.b16 %v1604
        %v1911 = vunpack.c.h.b16 %v1604
        %v1912 = vunpack.c.l.b16 %v1605
        %v1913 = vunpack.c.h.b16 %v1605
        %v1914 = vunpack.c.l.b16 %v1606
        %v1915 = vunpack.c.h.b16 %v1606
        %v1916 = vunpack.c.l.b16 %v1607
        %v1917 = vunpack.c.h.b16 %v1607
        %v1918 = vunpack.c.l.b16 %v1608
        %v1919 = vunpack.c.h.b16 %v1608
        %v1920 = vunpack.c.l.b16 %v1609
        %v1921 = vunpack.c.h.b16 %v1609
        %v1922 = vunpack.c.l.b16 %v1610
        %v1923 = vunpack.c.h.b16 %v1610
        %v1924 = vunpack.c.l.b16 %v1611
        %v1925 = vunpack.c.h.b16 %v1611
        %v1926 = vunpack.c.l.b16 %v1612
        %v1927 = vunpack.c.h.b16 %v1612
        %v1928 = vunpack.c.l.b16 %v1613
        %v1929 = vunpack.c.h.b16 %v1613
        %v1930 = vunpack.c.l.b16 %v1614
        %v1931 = vunpack.c.h.b16 %v1614
        %v1932 = vunpack.c.l.b16 %v1615
        %v1933 = vunpack.c.h.b16 %v1615
        %v1934 = vunpack.c.l.b16 %v1616
        %v1935 = vunpack.c.h.b16 %v1616
        %v1936 = vunpack.c.l.b16 %v1617
        %v1937 = vunpack.c.h.b16 %v1617
        %v1938 = vunpack.c.l.b16 %v1618
        %v1939 = vunpack.c.h.b16 %v1618
        %v1940 = vunpack.c.l.b16 %v1619
        %v1941 = vunpack.c.h.b16 %v1619
        %v1942 = vunpack.c.l.b16 %v1620
        %v1943 = vunpack.c.h.b16 %v1620
        %v1944 = vunpack.c.l.b16 %v1621
        %v1945 = vunpack.c.h.b16 %v1621
        %v1946 = vunpack.c.l.b16 %v1622
        %v1947 = vunpack.c.h.b16 %v1622
        %v1948 = vunpack.c.l.b16 %v1623
        %v1949 = vunpack.c.h.b16 %v1623
        %v1950 = vunpack.c.l.b16 %v1624
        %v1951 = vunpack.c.h.b16 %v1624
        %v1952 = vunpack.c.l.b16 %v1625
        %v1953 = vunpack.c.h.b16 %v1625
        %v1954 = vunpack.c.l.b16 %v1626
        %v1955 = vunpack.c.h.b16 %v1626
        %v1956 = vunpack.c.l.b16 %v1627
        %v1957 = vunpack.c.h.b16 %v1627
        %v1958 = vunpack.c.l.b16 %v1628
        %v1959 = vunpack.c.h.b16 %v1628
        %v1960 = vunpack.c.l.b16 %v1629
        %v1961 = vunpack.c.h.b16 %v1629
        %v1962 = vunpack.c.l.b16 %v1630
        %v1963 = vunpack.c.h.b16 %v1630
        %v1964 = vunpack.c.l.b16 %v1631
        %v1965 = vunpack.c.h.b16 %v1631
        %v1966 = vunpack.c.l.b16 %v1632
        %v1967 = vunpack.c.h.b16 %v1632
        %v1968 = vunpack.c.l.b16 %v1633
        %v1969 = vunpack.c.h.b16 %v1633
        %v1970 = vunpack.c.l.b16 %v1634
        %v1971 = vunpack.c.h.b16 %v1634
        %v1972 = vunpack.c.l.b16 %v1635
        %v1973 = vunpack.c.h.b16 %v1635
        %v1974 = vunpack.c.l.b16 %v1636
        %v1975 = vunpack.c.h.b16 %v1636
        %v1976 = vunpack.c.l.b16 %v1637
        %v1977 = vunpack.c.h.b16 %v1637
        %v1978 = vunpack.c.l.b16 %v1638
        %v1979 = vunpack.c.h.b16 %v1638
        %v1980 = vunpack.c.l.b16 %v1639
        %v1981 = vunpack.c.h.b16 %v1639
        %v1982 = vunpack.c.l.b16 %v1640
        %v1983 = vunpack.c.h.b16 %v1640
        %v1984 = vunpack.c.l.b16 %v1641
        %v1985 = vunpack.c.h.b16 %v1641
        %v1986 = vunpack.c.l.b16 %v1642
        %v1987 = vunpack.c.h.b16 %v1642
        %v1988 = vunpack.c.l.b16 %v1643
        %v1989 = vunpack.c.h.b16 %v1643
        %v1990 = vunpack.c.l.b16 %v1644
        %v1991 = vunpack.c.h.b16 %v1644
        %v1992 = vunpack.c.l.b16 %v1645
        %v1993 = vunpack.c.h.b16 %v1645
        %v1994 = vunpack.c.l.b16 %v1646
        %v1995 = vunpack.c.h.b16 %v1646
        %v1996 = vunpack.c.l.b16 %v1647
        %v1997 = vunpack.c.h.b16 %v1647
        %v1998 = vunpack.c.l.b16 %v1648
        %v1999 = vunpack.c.h.b16 %v1648
        %v2000 = vunpack.c.l.b16 %v1649
        %v2001 = vunpack.c.h.b16 %v1649
        %v2002 = vunpack.c.l.b16 %v1650
        %v2003 = vunpack.c.h.b16 %v1650
        %v2004 = vunpack.c.l.b16 %v1651
        %v2005 = vunpack.c.h.b16 %v1651
        %v2006 = vunpack.c.l.b16 %v1652
        %v2007 = vunpack.c.h.b16 %v1652
        %v2008 = vunpack.c.l.b16 %v1653
        %v2009 = vunpack.c.h.b16 %v1653
        %v2010 = vunpack.c.l.b16 %v1654
        %v2011 = vunpack.c.h.b16 %v1654
        %v2012 = vunpack.c.l.b16 %v1655
        %v2013 = vunpack.c.h.b16 %v1655
        %v2014 = vunpack.c.l.b16 %v1656
        %v2015 = vunpack.c.h.b16 %v1656
        %v2016 = vunpack.c.l.b16 %v1657
        %v2017 = vunpack.c.h.b16 %v1657
        %v2018 = vunpack.c.l.b16 %v1658
        %v2019 = vunpack.c.h.b16 %v1658
        %v2020 = vunpack.c.l.b16 %v1659
        %v2021 = vunpack.c.h.b16 %v1659
        %v2022 = vunpack.c.l.b16 %v1660
        %v2023 = vunpack.c.h.b16 %v1660
        %v2024 = vunpack.c.l.b16 %v1661
        %v2025 = vunpack.c.h.b16 %v1661
        %v2026 = vunpack.c.l.b16 %v1662
        %v2027 = vunpack.c.h.b16 %v1662
        %v2028 = vunpack.c.l.b16 %v1663
        %v2029 = vunpack.c.h.b16 %v1663
        %v2030 = vunpack.c.l.b16 %v1664
        %v2031 = vunpack.c.h.b16 %v1664
        %v2032 = vunpack.c.l.b16 %v1665
        %v2033 = vunpack.c.h.b16 %v1665
        %v2034 = vunpack.c.l.b16 %v1666
        %v2035 = vunpack.c.h.b16 %v1666
        %v2036 = vunpack.c.l.b16 %v1667
        %v2037 = vunpack.c.h.b16 %v1667
        %v2038 = vunpack.c.l.b16 %v1668
        %v2039 = vunpack.c.h.b16 %v1668
        %v2040 = vunpack.c.l.b16 %v1669
        %v2041 = vunpack.c.h.b16 %v1669
        %v2042 = vunpack.c.l.b16 %v1670
        %v2043 = vunpack.c.h.b16 %v1670
        %v2044 = vunpack.c.l.b16 %v1671
        %v2045 = vunpack.c.h.b16 %v1671
        %v2046 = vunpack.c.l.b16 %v1672
        %v2047 = vunpack.c.h.b16 %v1672
        %v2048 = vunpack.c.l.b16 %v1673
        %v2049 = vunpack.c.h.b16 %v1673
        %v2050 = vunpack.c.l.b16 %v1674
        %v2051 = vunpack.c.h.b16 %v1674
        %v2052 = vunpack.c.l.b16 %v1675
        %v2053 = vunpack.c.h.b16 %v1675
        %v2054 = vunpack.c.l.b16 %v1676
        %v2055 = vunpack.c.h.b16 %v1676
        %v2056 = vunpack.c.l.b16 %v1677
        %v2057 = vunpack.c.h.b16 %v1677
        %v2058 = vunpack.c.l.b16 %v1678
        %v2059 = vunpack.c.h.b16 %v1678
        %v2060 = vunpack.c.l.b16 %v1679
        %v2061 = vunpack.c.h.b16 %v1679
        %v2062 = vunpack.c.l.b16 %v1680
        %v2063 = vunpack.c.h.b16 %v1680
        %v2064 = vunpack.c.l.b16 %v1681
        %v2065 = vunpack.c.h.b16 %v1681
        %v2066 = vpack.c.b16 %v1818, %v1810
        %v2067 = vpack.c.b16 %v1819, %v1811
        %v2068 = vpack.c.b16 %v1820, %v1812
        %v2069 = vpack.c.b16 %v1821, %v1813
        %v2070 = vpack.c.b16 %v1822, %v1814
        %v2071 = vpack.c.b16 %v1823, %v1815
        %v2072 = vpack.c.b16 %v1824, %v1816
        %v2073 = vpack.c.b16 %v1825, %v1817
        %v2074 = vpack.c.b16 %v1834, %v1826
        %v2075 = vpack.c.b16 %v1835, %v1827
        %v2076 = vpack.c.b16 %v1836, %v1828
        %v2077 = vpack.c.b16 %v1837, %v1829
        %v2078 = vpack.c.b16 %v1838, %v1830
        %v2079 = vpack.c.b16 %v1839, %v1831
        %v2080 = vpack.c.b16 %v1840, %v1832
        %v2081 = vpack.c.b16 %v1841, %v1833
        %v2082 = vpack.c.b16 %v1850, %v1842
        %v2083 = vpack.c.b16 %v1851, %v1843
        %v2084 = vpack.c.b16 %v1852, %v1844
        %v2085 = vpack.c.b16 %v1853, %v1845
        %v2086 = vpack.c.b16 %v1854, %v1846
        %v2087 = vpack.c.b16 %v1855, %v1847
        %v2088 = vpack.c.b16 %v1856, %v1848
        %v2089 = vpack.c.b16 %v1857, %v1849
        %v2090 = vpack.c.b16 %v1866, %v1858
        %v2091 = vpack.c.b16 %v1867, %v1859
        %v2092 = vpack.c.b16 %v1868, %v1860
        %v2093 = vpack.c.b16 %v1869, %v1861
        %v2094 = vpack.c.b16 %v1870, %v1862
        %v2095 = vpack.c.b16 %v1871, %v1863
        %v2096 = vpack.c.b16 %v1872, %v1864
        %v2097 = vpack.c.b16 %v1873, %v1865
        %v2098 = vpack.c.b16 %v1882, %v1874
        %v2099 = vpack.c.b16 %v1883, %v1875
        %v2100 = vpack.c.b16 %v1884, %v1876
        %v2101 = vpack.c.b16 %v1885, %v1877
        %v2102 = vpack.c.b16 %v1886, %v1878
        %v2103 = vpack.c.b16 %v1887, %v1879
        %v2104 = vpack.c.b16 %v1888, %v1880
        %v2105 = vpack.c.b16 %v1889, %v1881
        %v2106 = vpack.c.b16 %v1898, %v1890
        %v2107 = vpack.c.b16 %v1899, %v1891
        %v2108 = vpack.c.b16 %v1900, %v1892
        %v2109 = vpack.c.b16 %v1901, %v1893
        %v2110 = vpack.c.b16 %v1902, %v1894
        %v2111 = vpack.c.b16 %v1903, %v1895
        %v2112 = vpack.c.b16 %v1904, %v1896
        %v2113 = vpack.c.b16 %v1905, %v1897
        %v2114 = vpack.c.b16 %v1914, %v1906
        %v2115 = vpack.c.b16 %v1915, %v1907
        %v2116 = vpack.c.b16 %v1916, %v1908
        %v2117 = vpack.c.b16 %v1917, %v1909
        %v2118 = vpack.c.b16 %v1918, %v1910
        %v2119 = vpack.c.b16 %v1919, %v1911
        %v2120 = vpack.c.b16 %v1920, %v1912
        %v2121 = vpack.c.b16 %v1921, %v1913
        %v2122 = vpack.c.b16 %v1930, %v1922
        %v2123 = vpack.c.b16 %v1931, %v1923
        %v2124 = vpack.c.b16 %v1932, %v1924
        %v2125 = vpack.c.b16 %v1933, %v1925
        %v2126 = vpack.c.b16 %v1934, %v1926
        %v2127 = vpack.c.b16 %v1935, %v1927
        %v2128 = vpack.c.b16 %v1936, %v1928
        %v2129 = vpack.c.b16 %v1937, %v1929
        %v2130 = vpack.c.b16 %v1946, %v1938
        %v2131 = vpack.c.b16 %v1947, %v1939
        %v2132 = vpack.c.b16 %v1948, %v1940
        %v2133 = vpack.c.b16 %v1949, %v1941
        %v2134 = vpack.c.b16 %v1950, %v1942
        %v2135 = vpack.c.b16 %v1951, %v1943
        %v2136 = vpack.c.b16 %v1952, %v1944
        %v2137 = vpack.c.b16 %v1953, %v1945
        %v2138 = vpack.c.b16 %v1962, %v1954
        %v2139 = vpack.c.b16 %v1963, %v1955
        %v2140 = vpack.c.b16 %v1964, %v1956
        %v2141 = vpack.c.b16 %v1965, %v1957
        %v2142 = vpack.c.b16 %v1966, %v1958
        %v2143 = vpack.c.b16 %v1967, %v1959
        %v2144 = vpack.c.b16 %v1968, %v1960
        %v2145 = vpack.c.b16 %v1969, %v1961
        %v2146 = vpack.c.b16 %v1978, %v1970
        %v2147 = vpack.c.b16 %v1979, %v1971
        %v2148 = vpack.c.b16 %v1980, %v1972
        %v2149 = vpack.c.b16 %v1981, %v1973
        %v2150 = vpack.c.b16 %v1982, %v1974
        %v2151 = vpack.c.b16 %v1983, %v1975
        %v2152 = vpack.c.b16 %v1984, %v1976
        %v2153 = vpack.c.b16 %v1985, %v1977
        %v2154 = vpack.c.b16 %v1994, %v1986
        %v2155 = vpack.c.b16 %v1995, %v1987
        %v2156 = vpack.c.b16 %v1996, %v1988
        %v2157 = vpack.c.b16 %v1997, %v1989
        %v2158 = vpack.c.b16 %v1998, %v1990
        %v2159 = vpack.c.b16 %v1999, %v1991
        %v2160 = vpack.c.b16 %v2000, %v1992
        %v2161 = vpack.c.b16 %v2001, %v1993
        %v2162 = vpack.c.b16 %v2010, %v2002
        %v2163 = vpack.c.b16 %v2011, %v2003
        %v2164 = vpack.c.b16 %v2012, %v2004
        %v2165 = vpack.c.b16 %v2013, %v2005
        %v2166 = vpack.c.b16 %v2014, %v2006
        %v2167 = vpack.c.b16 %v2015, %v2007
        %v2168 = vpack.c.b16 %v2016, %v2008
        %v2169 = vpack.c.b16 %v2017, %v2009
        %v2170 = vpack.c.b16 %v2026, %v2018
        %v2171 = vpack.c.b16 %v2027, %v2019
        %v2172 = vpack.c.b16 %v2028, %v2020
        %v2173 = vpack.c.b16 %v2029, %v2021
        %v2174 = vpack.c.b16 %v2030, %v2022
        %v2175 = vpack.c.b16 %v2031, %v2023
        %v2176 = vpack.c.b16 %v2032, %v2024
        %v2177 = vpack.c.b16 %v2033, %v2025
        %v2178 = vpack.c.b16 %v2042, %v2034
        %v2179 = vpack.c.b16 %v2043, %v2035
        %v2180 = vpack.c.b16 %v2044, %v2036
        %v2181 = vpack.c.b16 %v2045, %v2037
        %v2182 = vpack.c.b16 %v2046, %v2038
        %v2183 = vpack.c.b16 %v2047, %v2039
        %v2184 = vpack.c.b16 %v2048, %v2040
        %v2185 = vpack.c.b16 %v2049, %v2041
        %v2186 = vpack.c.b16 %v2058, %v2050
        %v2187 = vpack.c.b16 %v2059, %v2051
        %v2188 = vpack.c.b16 %v2060, %v2052
        %v2189 = vpack.c.b16 %v2061, %v2053
        %v2190 = vpack.c.b16 %v2062, %v2054
        %v2191 = vpack.c.b16 %v2063, %v2055
        %v2192 = vpack.c.b16 %v2064, %v2056
        %v2193 = vpack.c.b16 %v2065, %v2057
        %2322 = vmatprep.subr.bf16.mxu0 %v2067
        %2323 = vmatpush1.bf16.msra.mxu0 %v2066
        %2324 = vmatprep.subr.bf16.mxu0 %v2075
        %2325 = vmatpush1.bf16.msra.mxu0 %v2074
        %2326 = vmatprep.subr.bf16.mxu0 %v2083
        %2327 = vmatpush1.bf16.msra.mxu0 %v2082
        %2328 = vmatprep.subr.bf16.mxu0 %v2091
        %2329 = vmatpush1.bf16.msra.mxu0 %v2090
        %2330 = vmatprep.subr.bf16.mxu0 %v2099
        %2331 = vmatpush1.bf16.msra.mxu0 %v2098
        %2332 = vmatprep.subr.bf16.mxu0 %v2107
        %2333 = vmatpush1.bf16.msra.mxu0 %v2106
        %2334 = vmatprep.subr.bf16.mxu0 %v2115
        %2335 = vmatpush1.bf16.msra.mxu0 %v2114
        %2336 = vmatprep.subr.bf16.mxu0 %v2123
        %2337 = vmatpush1.bf16.msra.mxu0 %v2122
        %2338 = vmatprep.subr.bf16.mxu0 %v2131
        %2339 = vmatpush1.bf16.msra.mxu0 %v2130
        %2340 = vmatprep.subr.bf16.mxu0 %v2139
        %2341 = vmatpush1.bf16.msra.mxu0 %v2138
        %2342 = vmatprep.subr.bf16.mxu0 %v2147
        %2343 = vmatpush1.bf16.msra.mxu0 %v2146
        %2344 = vmatprep.subr.bf16.mxu0 %v2155
        %2345 = vmatpush1.bf16.msra.mxu0 %v2154
        %2346 = vmatprep.subr.bf16.mxu0 %v2163
        %2347 = vmatpush1.bf16.msra.mxu0 %v2162
        %2348 = vmatprep.subr.bf16.mxu0 %v2171
        %2349 = vmatpush1.bf16.msra.mxu0 %v2170
        %2350 = vmatprep.subr.bf16.mxu0 %v2179
        %2351 = vmatpush1.bf16.msra.mxu0 %v2178
        %2352 = vmatprep.subr.bf16.mxu0 %v2187
        %2353 = vmatpush1.bf16.msra.mxu0 %v2186
        %2354 = vmatprep.mubr.bf16.mxu0 %v1551
        %2355 = vmatmul.mubr.bf16.gmra.mrb[0].mxu0 %v1550
        %v2356 = vpop.f32.mrb[0].mxu0
        %v2357 = vadd.f32 0.0, %v2356
        %v2358 = vpop.f32.mrb[0].mxu0
        %v2359 = vadd.f32 0.0, %v2358
        %v2360 = vpop.f32.mrb[0].mxu0
        %v2361 = vadd.f32 0.0, %v2360
        %v2362 = vpop.f32.mrb[0].mxu0
        %v2363 = vadd.f32 0.0, %v2362
        %2364 = vmatprep.mubr.bf16.mxu0 %v1553
        %2365 = vmatmul.mubr.bf16.gmra.mrb[0].mxu0 %v1552
        %v2366 = vpop.f32.mrb[0].mxu0
        %v2367 = vadd.f32 0.0, %v2366
        %v2368 = vpop.f32.mrb[0].mxu0
        %v2369 = vadd.f32 0.0, %v2368
        %v2370 = vpop.f32.mrb[0].mxu0
        %v2371 = vadd.f32 0.0, %v2370
        %v2372 = vpop.f32.mrb[0].mxu0
        %v2373 = vadd.f32 0.0, %v2372
        %2374 = vdwg.mxu0
        %2375 = vmatprep.subr.bf16.mxu0 %v2069
        %2376 = vmatpush1.bf16.msra.mxu0 %v2068
        %2377 = vmatprep.subr.bf16.mxu0 %v2077
        %2378 = vmatpush1.bf16.msra.mxu0 %v2076
        %2379 = vmatprep.subr.bf16.mxu0 %v2085
        %2380 = vmatpush1.bf16.msra.mxu0 %v2084
        %2381 = vmatprep.subr.bf16.mxu0 %v2093
        %2382 = vmatpush1.bf16.msra.mxu0 %v2092
        %2383 = vmatprep.subr.bf16.mxu0 %v2101
        %2384 = vmatpush1.bf16.msra.mxu0 %v2100
        %2385 = vmatprep.subr.bf16.mxu0 %v2109
        %2386 = vmatpush1.bf16.msra.mxu0 %v2108
        %2387 = vmatprep.subr.bf16.mxu0 %v2117
        %2388 = vmatpush1.bf16.msra.mxu0 %v2116
        %2389 = vmatprep.subr.bf16.mxu0 %v2125
        %2390 = vmatpush1.bf16.msra.mxu0 %v2124
        %2391 = vmatprep.subr.bf16.mxu0 %v2133
        %2392 = vmatpush1.bf16.msra.mxu0 %v2132
        %2393 = vmatprep.subr.bf16.mxu0 %v2141
        %2394 = vmatpush1.bf16.msra.mxu0 %v2140
        %2395 = vmatprep.subr.bf16.mxu0 %v2149
        %2396 = vmatpush1.bf16.msra.mxu0 %v2148
        %2397 = vmatprep.subr.bf16.mxu0 %v2157
        %2398 = vmatpush1.bf16.msra.mxu0 %v2156
        %2399 = vmatprep.subr.bf16.mxu0 %v2165
        %2400 = vmatpush1.bf16.msra.mxu0 %v2164
        %2401 = vmatprep.subr.bf16.mxu0 %v2173
        %2402 = vmatpush1.bf16.msra.mxu0 %v2172
        %2403 = vmatprep.subr.bf16.mxu0 %v2181
        %2404 = vmatpush1.bf16.msra.mxu0 %v2180
        %2405 = vmatprep.subr.bf16.mxu0 %v2189
        %2406 = vmatpush1.bf16.msra.mxu0 %v2188
        %2407 = vmatprep.mubr.bf16.mxu0 %v1551
        %2408 = vmatmul.mubr.bf16.gmra.mrb[0].mxu0 %v1550
        %v2409 = vpop.f32.mrb[0].mxu0
        %v2410 = vadd.f32 0.0, %v2409
        %v2411 = vpop.f32.mrb[0].mxu0
        %v2412 = vadd.f32 0.0, %v2411
        %v2413 = vpop.f32.mrb[0].mxu0
        %v2414 = vadd.f32 0.0, %v2413
        %v2415 = vpop.f32.mrb[0].mxu0
        %v2416 = vadd.f32 0.0, %v2415
        %2417 = vmatprep.mubr.bf16.mxu0 %v1553
        %2418 = vmatmul.mubr.bf16.gmra.mrb[0].mxu0 %v1552
        %v2419 = vpop.f32.mrb[0].mxu0
        %v2420 = vadd.f32 0.0, %v2419
        %v2421 = vpop.f32.mrb[0].mxu0
        %v2422 = vadd.f32 0.0, %v2421
        %v2423 = vpop.f32.mrb[0].mxu0
        %v2424 = vadd.f32 0.0, %v2423
        %v2425 = vpop.f32.mrb[0].mxu0
        %v2426 = vadd.f32 0.0, %v2425
        %2427 = vdwg.mxu0
        %2428 = vmatprep.subr.bf16.mxu0 %v2071
        %2429 = vmatpush1.bf16.msra.mxu0 %v2070
        %2430 = vmatprep.subr.bf16.mxu0 %v2079
        %2431 = vmatpush1.bf16.msra.mxu0 %v2078
        %2432 = vmatprep.subr.bf16.mxu0 %v2087
        %2433 = vmatpush1.bf16.msra.mxu0 %v2086
        %2434 = vmatprep.subr.bf16.mxu0 %v2095
        %2435 = vmatpush1.bf16.msra.mxu0 %v2094
        %2436 = vmatprep.subr.bf16.mxu0 %v2103
        %2437 = vmatpush1.bf16.msra.mxu0 %v2102
        %2438 = vmatprep.subr.bf16.mxu0 %v2111
        %2439 = vmatpush1.bf16.msra.mxu0 %v2110
        %2440 = vmatprep.subr.bf16.mxu0 %v2119
        %2441 = vmatpush1.bf16.msra.mxu0 %v2118
        %2442 = vmatprep.subr.bf16.mxu0 %v2127
        %2443 = vmatpush1.bf16.msra.mxu0 %v2126
        %2444 = vmatprep.subr.bf16.mxu0 %v2135
        %2445 = vmatpush1.bf16.msra.mxu0 %v2134
        %2446 = vmatprep.subr.bf16.mxu0 %v2143
        %2447 = vmatpush1.bf16.msra.mxu0 %v2142
        %2448 = vmatprep.subr.bf16.mxu0 %v2151
        %2449 = vmatpush1.bf16.msra.mxu0 %v2150
        %2450 = vmatprep.subr.bf16.mxu0 %v2159
        %2451 = vmatpush1.bf16.msra.mxu0 %v2158
        %2452 = vmatprep.subr.bf16.mxu0 %v2167
        %2453 = vmatpush1.bf16.msra.mxu0 %v2166
        %2454 = vmatprep.subr.bf16.mxu0 %v2175
        %2455 = vmatpush1.bf16.msra.mxu0 %v2174
        %2456 = vmatprep.subr.bf16.mxu0 %v2183
        %2457 = vmatpush1.bf16.msra.mxu0 %v2182
        %2458 = vmatprep.subr.bf16.mxu0 %v2191
        %2459 = vmatpush1.bf16.msra.mxu0 %v2190
        %2460 = vmatprep.mubr.bf16.mxu0 %v1551
        %2461 = vmatmul.mubr.bf16.gmra.mrb[0].mxu0 %v1550
        %v2462 = vpop.f32.mrb[0].mxu0
        %v2463 = vadd.f32 0.0, %v2462
        %v2464 = vpop.f32.mrb[0].mxu0
        %v2465 = vadd.f32 0.0, %v2464
        %v2466 = vpop.f32.mrb[0].mxu0
        %v2467 = vadd.f32 0.0, %v2466
        %v2468 = vpop.f32.mrb[0].mxu0
        %v2469 = vadd.f32 0.0, %v2468
        %2470 = vmatprep.mubr.bf16.mxu0 %v1553
        %2471 = vmatmul.mubr.bf16.gmra.mrb[0].mxu0 %v1552
        %v2472 = vpop.f32.mrb[0].mxu0
        %v2473 = vadd.f32 0.0, %v2472
        %v2474 = vpop.f32.mrb[0].mxu0
        %v2475 = vadd.f32 0.0, %v2474
        %v2476 = vpop.f32.mrb[0].mxu0
        %v2477 = vadd.f32 0.0, %v2476
        %v2478 = vpop.f32.mrb[0].mxu0
        %v2479 = vadd.f32 0.0, %v2478
        %2480 = vdwg.mxu0
        %2481 = vmatprep.subr.bf16.mxu0 %v2073
        %2482 = vmatpush1.bf16.msra.mxu0 %v2072
        %2483 = vmatprep.subr.bf16.mxu0 %v2081
        %2484 = vmatpush1.bf16.msra.mxu0 %v2080
        %2485 = vmatprep.subr.bf16.mxu0 %v2089
        %2486 = vmatpush1.bf16.msra.mxu0 %v2088
        %2487 = vmatprep.subr.bf16.mxu0 %v2097
        %2488 = vmatpush1.bf16.msra.mxu0 %v2096
        %2489 = vmatprep.subr.bf16.mxu0 %v2105
        %2490 = vmatpush1.bf16.msra.mxu0 %v2104
        %2491 = vmatprep.subr.bf16.mxu0 %v2113
        %2492 = vmatpush1.bf16.msra.mxu0 %v2112
        %2493 = vmatprep.subr.bf16.mxu0 %v2121
        %2494 = vmatpush1.bf16.msra.mxu0 %v2120
        %2495 = vmatprep.subr.bf16.mxu0 %v2129
        %2496 = vmatpush1.bf16.msra.mxu0 %v2128
        %2497 = vmatprep.subr.bf16.mxu0 %v2137
        %2498 = vmatpush1.bf16.msra.mxu0 %v2136
        %2499 = vmatprep.subr.bf16.mxu0 %v2145
        %2500 = vmatpush1.bf16.msra.mxu0 %v2144
        %2501 = vmatprep.subr.bf16.mxu0 %v2153
        %2502 = vmatpush1.bf16.msra.mxu0 %v2152
        %2503 = vmatprep.subr.bf16.mxu0 %v2161
        %2504 = vmatpush1.bf16.msra.mxu0 %v2160
        %2505 = vmatprep.subr.bf16.mxu0 %v2169
        %2506 = vmatpush1.bf16.msra.mxu0 %v2168
        %2507 = vmatprep.subr.bf16.mxu0 %v2177
        %2508 = vmatpush1.bf16.msra.mxu0 %v2176
        %2509 = vmatprep.subr.bf16.mxu0 %v2185
        %2510 = vmatpush1.bf16.msra.mxu0 %v2184
        %2511 = vmatprep.subr.bf16.mxu0 %v2193
        %2512 = vmatpush1.bf16.msra.mxu0 %v2192
        %2513 = vmatprep.mubr.bf16.mxu0 %v1551
        %2514 = vmatmul.mubr.bf16.gmra.mrb[0].mxu0 %v1550
        %v2515 = vpop.f32.mrb[0].mxu0
        %v2516 = vadd.f32 0.0, %v2515
        %v2517 = vpop.f32.mrb[0].mxu0
        %v2518 = vadd.f32 0.0, %v2517
        %v2519 = vpop.f32.mrb[0].mxu0
        %v2520 = vadd.f32 0.0, %v2519
        %v2521 = vpop.f32.mrb[0].mxu0
        %v2522 = vadd.f32 0.0, %v2521
        %2523 = vmatprep.mubr.bf16.mxu0 %v1553
        %2524 = vmatmul.mubr.bf16.gmra.mrb[0].mxu0 %v1552
        %v2525 = vpop.f32.mrb[0].mxu0
        %v2526 = vadd.f32 0.0, %v2525
        %v2527 = vpop.f32.mrb[0].mxu0
        %v2528 = vadd.f32 0.0, %v2527
        %v2529 = vpop.f32.mrb[0].mxu0
        %v2530 = vadd.f32 0.0, %v2529
        %v2531 = vpop.f32.mrb[0].mxu0
        %v2532 = vadd.f32 0.0, %v2531
        %2533 = vdwg.mxu0
        %v2534 = vadd.f32 %v1518, %v2357
        %v2535 = vadd.f32 %v1519, %v2359
        %v2536 = vadd.f32 %v1520, %v2410
        %v2537 = vadd.f32 %v1521, %v2412
        %v2538 = vadd.f32 %v1522, %v2463
        %v2539 = vadd.f32 %v1523, %v2465
        %v2540 = vadd.f32 %v1524, %v2516
        %v2541 = vadd.f32 %v1525, %v2518
        %v2542 = vadd.f32 %v1526, %v2361
        %v2543 = vadd.f32 %v1527, %v2363
        %v2544 = vadd.f32 %v1528, %v2414
        %v2545 = vadd.f32 %v1529, %v2416
        %v2546 = vadd.f32 %v1530, %v2467
        %v2547 = vadd.f32 %v1531, %v2469
        %v2548 = vadd.f32 %v1532, %v2520
        %v2549 = vadd.f32 %v1533, %v2522
        %v2550 = vadd.f32 %v1534, %v2367
        %v2551 = vadd.f32 %v1535, %v2369
        %v2552 = vadd.f32 %v1536, %v2420
        %v2553 = vadd.f32 %v1537, %v2422
        %v2554 = vadd.f32 %v1538, %v2473
        %v2555 = vadd.f32 %v1539, %v2475
        %v2556 = vadd.f32 %v1540, %v2526
        %v2557 = vadd.f32 %v1541, %v2528
        %v2558 = vadd.f32 %v1542, %v2371
        %v2559 = vadd.f32 %v1543, %v2373
        %v2560 = vadd.f32 %v1544, %v2424
        %v2561 = vadd.f32 %v1545, %v2426
        %v2562 = vadd.f32 %v1546, %v2477
        %v2563 = vadd.f32 %v1547, %v2479
        %v2564 = vadd.f32 %v1548, %v2530
        %v2565 = vadd.f32 %v1549, %v2532
        %2566 = vst [vmem:[#allocation2] sm:$0xff] %v2534
        %2567 = vst [vmem:[#allocation2 + $0x8] sm:$0xff] %v2535
        %2568 = vst [vmem:[#allocation2 + $0x10] sm:$0xff] %v2536
        %2569 = vst [vmem:[#allocation2 + $0x18] sm:$0xff] %v2537
        %2570 = vst [vmem:[#allocation2 + $0x20] sm:$0xff] %v2538
        %2571 = vst [vmem:[#allocation2 + $0x28] sm:$0xff] %v2539
        %2572 = vst [vmem:[#allocation2 + $0x30] sm:$0xff] %v2540
        %2573 = vst [vmem:[#allocation2 + $0x38] sm:$0xff] %v2541
        %2574 = vst [vmem:[#allocation2 + $0x40] sm:$0xff] %v2542
        %2575 = vst [vmem:[#allocation2 + $0x48] sm:$0xff] %v2543
        %2576 = vst [vmem:[#allocation2 + $0x50] sm:$0xff] %v2544
        %2577 = vst [vmem:[#allocation2 + $0x58] sm:$0xff] %v2545
        %2578 = vst [vmem:[#allocation2 + $0x60] sm:$0xff] %v2546
        %2579 = vst [vmem:[#allocation2 + $0x68] sm:$0xff] %v2547
        %2580 = vst [vmem:[#allocation2 + $0x70] sm:$0xff] %v2548
        %2581 = vst [vmem:[#allocation2 + $0x78] sm:$0xff] %v2549
        %2582 = vst [vmem:[#allocation2 + $0x80] sm:$0xff] %v2550
        %2583 = vst [vmem:[#allocation2 + $0x88] sm:$0xff] %v2551
        %2584 = vst [vmem:[#allocation2 + $0x90] sm:$0xff] %v2552
        %2585 = vst [vmem:[#allocation2 + $0x98] sm:$0xff] %v2553
        %2586 = vst [vmem:[#allocation2 + $0xa0] sm:$0xff] %v2554
        %2587 = vst [vmem:[#allocation2 + $0xa8] sm:$0xff] %v2555
        %2588 = vst [vmem:[#allocation2 + $0xb0] sm:$0xff] %v2556
        %2589 = vst [vmem:[#allocation2 + $0xb8] sm:$0xff] %v2557
        %2590 = vst [vmem:[#allocation2 + $0xc0] sm:$0xff] %v2558
        %2591 = vst [vmem:[#allocation2 + $0xc8] sm:$0xff] %v2559
        %2592 = vst [vmem:[#allocation2 + $0xd0] sm:$0xff] %v2560
        %2593 = vst [vmem:[#allocation2 + $0xd8] sm:$0xff] %v2561
        %2594 = vst [vmem:[#allocation2 + $0xe0] sm:$0xff] %v2562
        %2595 = vst [vmem:[#allocation2 + $0xe8] sm:$0xff] %v2563
        %2596 = vst [vmem:[#allocation2 + $0xf0] sm:$0xff] %v2564
        %2597 = vst [vmem:[#allocation2 + $0xf8] sm:$0xff] %v2565
        %p2598 = scmp.eq.s32.totalorder %s59, 3
        // Predicated region
        $region241: #{pointr_forward.1} parent=131 // pred_check
          %p2599 = pneg %p2598
        $region242: #{pointr_forward.1} parent=131 // pred_check_branch
          %2601 = sbr.rel (%p2599) target = $region244
        $region243: #{pointr_forward.1} parent=131 // pred_region
          %v2602 = vld [vmem:[#allocation2] sm:$0xff]
          %v2603 = vld [vmem:[#allocation2 + $0x8] sm:$0xff]
          %v2604 = vld [vmem:[#allocation2 + $0x10] sm:$0xff]
          %v2605 = vld [vmem:[#allocation2 + $0x18] sm:$0xff]
          %v2606 = vld [vmem:[#allocation2 + $0x20] sm:$0xff]
          %v2607 = vld [vmem:[#allocation2 + $0x28] sm:$0xff]
          %v2608 = vld [vmem:[#allocation2 + $0x30] sm:$0xff]
          %v2609 = vld [vmem:[#allocation2 + $0x38] sm:$0xff]
          %v2610 = vld [vmem:[#allocation2 + $0x40] sm:$0xff]
          %v2611 = vld [vmem:[#allocation2 + $0x48] sm:$0xff]
          %v2612 = vld [vmem:[#allocation2 + $0x50] sm:$0xff]
          %v2613 = vld [vmem:[#allocation2 + $0x58] sm:$0xff]
          %v2614 = vld [vmem:[#allocation2 + $0x60] sm:$0xff]
          %v2615 = vld [vmem:[#allocation2 + $0x68] sm:$0xff]
          %v2616 = vld [vmem:[#allocation2 + $0x70] sm:$0xff]
          %v2617 = vld [vmem:[#allocation2 + $0x78] sm:$0xff]
          %v2618 = vld [vmem:[#allocation2 + $0x80] sm:$0xff]
          %v2619 = vld [vmem:[#allocation2 + $0x88] sm:$0xff]
          %v2620 = vld [vmem:[#allocation2 + $0x90] sm:$0xff]
          %v2621 = vld [vmem:[#allocation2 + $0x98] sm:$0xff]
          %v2622 = vld [vmem:[#allocation2 + $0xa0] sm:$0xff]
          %v2623 = vld [vmem:[#allocation2 + $0xa8] sm:$0xff]
          %v2624 = vld [vmem:[#allocation2 + $0xb0] sm:$0xff]
          %v2625 = vld [vmem:[#allocation2 + $0xb8] sm:$0xff]
          %v2626 = vld [vmem:[#allocation2 + $0xc0] sm:$0xff]
          %v2627 = vld [vmem:[#allocation2 + $0xc8] sm:$0xff]
          %v2628 = vld [vmem:[#allocation2 + $0xd0] sm:$0xff]
          %v2629 = vld [vmem:[#allocation2 + $0xd8] sm:$0xff]
          %v2630 = vld [vmem:[#allocation2 + $0xe0] sm:$0xff]
          %v2631 = vld [vmem:[#allocation2 + $0xe8] sm:$0xff]
          %v2632 = vld [vmem:[#allocation2 + $0xf0] sm:$0xff]
          %v2633 = vld [vmem:[#allocation2 + $0xf8] sm:$0xff]
          %v2634 = vld [vmem:[#allocation11] sm:$0xff]
          %v2636 = vlaneseq
          %v2637 = vshrl.u32 %v2636, 7
          %v2638 = vsub.s32 0, %v2637
          %v2639 = vrot.slane %v2634, %v2638
          %v2640 = vlaneseq
          %v2641 = vshrl.u32 %v2640, 7
          %v2642 = vsub.s32 1, %v2641
          %v2643 = vrot.slane %v2634, %v2642
          %v2644 = vlaneseq
          %v2645 = vshrl.u32 %v2644, 7
          %v2646 = vsub.s32 2, %v2645
          %v2647 = vrot.slane %v2634, %v2646
          %v2648 = vlaneseq
          %v2649 = vshrl.u32 %v2648, 7
          %v2650 = vsub.s32 3, %v2649
          %v2651 = vrot.slane %v2634, %v2650
          %v2652 = vlaneseq
          %v2653 = vshrl.u32 %v2652, 7
          %v2654 = vsub.s32 4, %v2653
          %v2655 = vrot.slane %v2634, %v2654
          %v2656 = vlaneseq
          %v2657 = vshrl.u32 %v2656, 7
          %v2658 = vsub.s32 5, %v2657
          %v2659 = vrot.slane %v2634, %v2658
          %v2660 = vlaneseq
          %v2661 = vshrl.u32 %v2660, 7
          %v2662 = vsub.s32 6, %v2661
          %v2663 = vrot.slane %v2634, %v2662
          %v2664 = vlaneseq
          %v2665 = vshrl.u32 %v2664, 7
          %v2666 = vsub.s32 7, %v2665
          %v2667 = vrot.slane %v2634, %v2666
          %v2676 = vadd.f32 %v2602, %v2639
          %v2677 = vadd.f32 %v2603, %v2643
          %v2678 = vadd.f32 %v2604, %v2647
          %v2679 = vadd.f32 %v2605, %v2651
          %v2680 = vadd.f32 %v2606, %v2655
          %v2681 = vadd.f32 %v2607, %v2659
          %v2682 = vadd.f32 %v2608, %v2663
          %v2683 = vadd.f32 %v2609, %v2667
          %v2684 = vadd.f32 %v2610, %v2639
          %v2685 = vadd.f32 %v2611, %v2643
          %v2686 = vadd.f32 %v2612, %v2647
          %v2687 = vadd.f32 %v2613, %v2651
          %v2688 = vadd.f32 %v2614, %v2655
          %v2689 = vadd.f32 %v2615, %v2659
          %v2690 = vadd.f32 %v2616, %v2663
          %v2691 = vadd.f32 %v2617, %v2667
          %v2692 = vadd.f32 %v2618, %v2639
          %v2693 = vadd.f32 %v2619, %v2643
          %v2694 = vadd.f32 %v2620, %v2647
          %v2695 = vadd.f32 %v2621, %v2651
          %v2696 = vadd.f32 %v2622, %v2655
          %v2697 = vadd.f32 %v2623, %v2659
          %v2698 = vadd.f32 %v2624, %v2663
          %v2699 = vadd.f32 %v2625, %v2667
          %v2700 = vadd.f32 %v2626, %v2639
          %v2701 = vadd.f32 %v2627, %v2643
          %v2702 = vadd.f32 %v2628, %v2647
          %v2703 = vadd.f32 %v2629, %v2651
          %v2704 = vadd.f32 %v2630, %v2655
          %v2705 = vadd.f32 %v2631, %v2659
          %v2706 = vadd.f32 %v2632, %v2663
          %v2707 = vadd.f32 %v2633, %v2667
          %v2708 = vmax.f32 %v2676, %v2684
          %v2709 = vrot.slane %v2708, 4
          %v2710 = vmax.f32 %v2708, %v2709
          %v2711 = vrot.slane %v2710, 2
          %v2712 = vmax.f32 %v2710, %v2711
          %v2713 = vrot.slane %v2712, 1
          %v2714 = vmax.f32 %v2712, %v2713
          %v2715 = vmax.f32 %v2677, %v2685
          %v2716 = vrot.slane %v2715, 4
          %v2717 = vmax.f32 %v2715, %v2716
          %v2718 = vrot.slane %v2717, 2
          %v2719 = vmax.f32 %v2717, %v2718
          %v2720 = vrot.slane %v2719, 1
          %v2721 = vmax.f32 %v2719, %v2720
          %v2722 = vmax.f32 %v2678, %v2686
          %v2723 = vrot.slane %v2722, 4
          %v2724 = vmax.f32 %v2722, %v2723
          %v2725 = vrot.slane %v2724, 2
          %v2726 = vmax.f32 %v2724, %v2725
          %v2727 = vrot.slane %v2726, 1
          %v2728 = vmax.f32 %v2726, %v2727
          %v2729 = vmax.f32 %v2679, %v2687
          %v2730 = vrot.slane %v2729, 4
          %v2731 = vmax.f32 %v2729, %v2730
          %v2732 = vrot.slane %v2731, 2
          %v2733 = vmax.f32 %v2731, %v2732
          %v2734 = vrot.slane %v2733, 1
          %v2735 = vmax.f32 %v2733, %v2734
          %v2736 = vmax.f32 %v2680, %v2688
          %v2737 = vrot.slane %v2736, 4
          %v2738 = vmax.f32 %v2736, %v2737
          %v2739 = vrot.slane %v2738, 2
          %v2740 = vmax.f32 %v2738, %v2739
          %v2741 = vrot.slane %v2740, 1
          %v2742 = vmax.f32 %v2740, %v2741
          %v2743 = vmax.f32 %v2681, %v2689
          %v2744 = vrot.slane %v2743, 4
          %v2745 = vmax.f32 %v2743, %v2744
          %v2746 = vrot.slane %v2745, 2
          %v2747 = vmax.f32 %v2745, %v2746
          %v2748 = vrot.slane %v2747, 1
          %v2749 = vmax.f32 %v2747, %v2748
          %v2750 = vmax.f32 %v2682, %v2690
          %v2751 = vrot.slane %v2750, 4
          %v2752 = vmax.f32 %v2750, %v2751
          %v2753 = vrot.slane %v2752, 2
          %v2754 = vmax.f32 %v2752, %v2753
          %v2755 = vrot.slane %v2754, 1
          %v2756 = vmax.f32 %v2754, %v2755
          %v2757 = vmax.f32 %v2683, %v2691
          %v2758 = vrot.slane %v2757, 4
          %v2759 = vmax.f32 %v2757, %v2758
          %v2760 = vrot.slane %v2759, 2
          %v2761 = vmax.f32 %v2759, %v2760
          %v2762 = vrot.slane %v2761, 1
          %v2763 = vmax.f32 %v2761, %v2762
          %v2764 = vmax.f32 %v2692, %v2700
          %v2765 = vrot.slane %v2764, 4
          %v2766 = vmax.f32 %v2764, %v2765
          %v2767 = vrot.slane %v2766, 2
          %v2768 = vmax.f32 %v2766, %v2767
          %v2769 = vrot.slane %v2768, 1
          %v2770 = vmax.f32 %v2768, %v2769
          %v2771 = vmax.f32 %v2693, %v2701
          %v2772 = vrot.slane %v2771, 4
          %v2773 = vmax.f32 %v2771, %v2772
          %v2774 = vrot.slane %v2773, 2
          %v2775 = vmax.f32 %v2773, %v2774
          %v2776 = vrot.slane %v2775, 1
          %v2777 = vmax.f32 %v2775, %v2776
          %v2778 = vmax.f32 %v2694, %v2702
          %v2779 = vrot.slane %v2778, 4
          %v2780 = vmax.f32 %v2778, %v2779
          %v2781 = vrot.slane %v2780, 2
          %v2782 = vmax.f32 %v2780, %v2781
          %v2783 = vrot.slane %v2782, 1
          %v2784 = vmax.f32 %v2782, %v2783
          %v2785 = vmax.f32 %v2695, %v2703
          %v2786 = vrot.slane %v2785, 4
          %v2787 = vmax.f32 %v2785, %v2786
          %v2788 = vrot.slane %v2787, 2
          %v2789 = vmax.f32 %v2787, %v2788
          %v2790 = vrot.slane %v2789, 1
          %v2791 = vmax.f32 %v2789, %v2790
          %v2792 = vmax.f32 %v2696, %v2704
          %v2793 = vrot.slane %v2792, 4
          %v2794 = vmax.f32 %v2792, %v2793
          %v2795 = vrot.slane %v2794, 2
          %v2796 = vmax.f32 %v2794, %v2795
          %v2797 = vrot.slane %v2796, 1
          %v2798 = vmax.f32 %v2796, %v2797
          %v2799 = vmax.f32 %v2697, %v2705
          %v2800 = vrot.slane %v2799, 4
          %v2801 = vmax.f32 %v2799, %v2800
          %v2802 = vrot.slane %v2801, 2
          %v2803 = vmax.f32 %v2801, %v2802
          %v2804 = vrot.slane %v2803, 1
          %v2805 = vmax.f32 %v2803, %v2804
          %v2806 = vmax.f32 %v2698, %v2706
          %v2807 = vrot.slane %v2806, 4
          %v2808 = vmax.f32 %v2806, %v2807
          %v2809 = vrot.slane %v2808, 2
          %v2810 = vmax.f32 %v2808, %v2809
          %v2811 = vrot.slane %v2810, 1
          %v2812 = vmax.f32 %v2810, %v2811
          %v2813 = vmax.f32 %v2699, %v2707
          %v2814 = vrot.slane %v2813, 4
          %v2815 = vmax.f32 %v2813, %v2814
          %v2816 = vrot.slane %v2815, 2
          %v2817 = vmax.f32 %v2815, %v2816
          %v2818 = vrot.slane %v2817, 1
          %v2819 = vmax.f32 %v2817, %v2818
          %v2820 = vpack.c.bf16 %v2714, %v2714
          %v2821 = vpack.c.bf16 %v2721, %v2721
          %v2822 = vpack.c.bf16 %v2728, %v2728
          %v2823 = vpack.c.bf16 %v2735, %v2735
          %v2824 = vpack.c.bf16 %v2742, %v2742
          %v2825 = vpack.c.bf16 %v2749, %v2749
          %v2826 = vpack.c.bf16 %v2756, %v2756
          %v2827 = vpack.c.bf16 %v2763, %v2763
          %v2828 = vpack.c.bf16 %v2770, %v2770
          %v2829 = vpack.c.bf16 %v2777, %v2777
          %v2830 = vpack.c.bf16 %v2784, %v2784
          %v2831 = vpack.c.bf16 %v2791, %v2791
          %v2832 = vpack.c.bf16 %v2798, %v2798
          %v2833 = vpack.c.bf16 %v2805, %v2805
          %v2834 = vpack.c.bf16 %v2812, %v2812
          %v2835 = vpack.c.bf16 %v2819, %v2819
          %v2836 = vld [vmem:[#allocation12] sm:$0xf]
          %v2837 = vld [vmem:[#allocation12 + $0x4] sm:$0xf]
          %v2838 = vld [vmem:[#allocation12 + $0x8] sm:$0xf]
          %v2839 = vld [vmem:[#allocation12 + $0xc] sm:$0xf]
          %v2840 = vld [vmem:[#allocation12 + $0x10] sm:$0xf]
          %v2841 = vld [vmem:[#allocation12 + $0x14] sm:$0xf]
          %v2842 = vld [vmem:[#allocation12 + $0x18] sm:$0xf]
          %v2843 = vld [vmem:[#allocation12 + $0x1c] sm:$0xf]
          %v2844 = vld [vmem:[#allocation12 + $0x20] sm:$0xf]
          %v2845 = vld [vmem:[#allocation12 + $0x24] sm:$0xf]
          %v2846 = vld [vmem:[#allocation12 + $0x28] sm:$0xf]
          %v2847 = vld [vmem:[#allocation12 + $0x2c] sm:$0xf]
          %v2848 = vld [vmem:[#allocation12 + $0x30] sm:$0xf]
          %v2849 = vld [vmem:[#allocation12 + $0x34] sm:$0xf]
          %v2850 = vld [vmem:[#allocation12 + $0x38] sm:$0xf]
          %v2851 = vld [vmem:[#allocation12 + $0x3c] sm:$0xf]
          %v2852 = vld [vmem:[#allocation12 + $0x40] sm:$0xf]
          %v2853 = vld [vmem:[#allocation12 + $0x44] sm:$0xf]
          %v2854 = vld [vmem:[#allocation12 + $0x48] sm:$0xf]
          %v2855 = vld [vmem:[#allocation12 + $0x4c] sm:$0xf]
          %v2856 = vld [vmem:[#allocation12 + $0x50] sm:$0xf]
          %v2857 = vld [vmem:[#allocation12 + $0x54] sm:$0xf]
          %v2858 = vld [vmem:[#allocation12 + $0x58] sm:$0xf]
          %v2859 = vld [vmem:[#allocation12 + $0x5c] sm:$0xf]
          %v2860 = vld [vmem:[#allocation12 + $0x60] sm:$0xf]
          %v2861 = vld [vmem:[#allocation12 + $0x64] sm:$0xf]
          %v2862 = vld [vmem:[#allocation12 + $0x68] sm:$0xf]
          %v2863 = vld [vmem:[#allocation12 + $0x6c] sm:$0xf]
          %v2864 = vld [vmem:[#allocation12 + $0x70] sm:$0xf]
          %v2865 = vld [vmem:[#allocation12 + $0x74] sm:$0xf]
          %v2866 = vld [vmem:[#allocation12 + $0x78] sm:$0xf]
          %v2867 = vld [vmem:[#allocation12 + $0x7c] sm:$0xf]
          %v2868 = vld [vmem:[#allocation12 + $0x80] sm:$0xf]
          %v2869 = vld [vmem:[#allocation12 + $0x84] sm:$0xf]
          %v2870 = vld [vmem:[#allocation12 + $0x88] sm:$0xf]
          %v2871 = vld [vmem:[#allocation12 + $0x8c] sm:$0xf]
          %v2872 = vld [vmem:[#allocation12 + $0x90] sm:$0xf]
          %v2873 = vld [vmem:[#allocation12 + $0x94] sm:$0xf]
          %v2874 = vld [vmem:[#allocation12 + $0x98] sm:$0xf]
          %v2875 = vld [vmem:[#allocation12 + $0x9c] sm:$0xf]
          %v2876 = vld [vmem:[#allocation12 + $0xa0] sm:$0xf]
          %v2877 = vld [vmem:[#allocation12 + $0xa4] sm:$0xf]
          %v2878 = vld [vmem:[#allocation12 + $0xa8] sm:$0xf]
          %v2879 = vld [vmem:[#allocation12 + $0xac] sm:$0xf]
          %v2880 = vld [vmem:[#allocation12 + $0xb0] sm:$0xf]
          %v2881 = vld [vmem:[#allocation12 + $0xb4] sm:$0xf]
          %v2882 = vld [vmem:[#allocation12 + $0xb8] sm:$0xf]
          %v2883 = vld [vmem:[#allocation12 + $0xbc] sm:$0xf]
          %v2884 = vld [vmem:[#allocation12 + $0xc0] sm:$0xf]
          %v2885 = vld [vmem:[#allocation12 + $0xc4] sm:$0xf]
          %v2886 = vld [vmem:[#allocation12 + $0xc8] sm:$0xf]
          %v2887 = vld [vmem:[#allocation12 + $0xcc] sm:$0xf]
          %v2888 = vld [vmem:[#allocation12 + $0xd0] sm:$0xf]
          %v2889 = vld [vmem:[#allocation12 + $0xd4] sm:$0xf]
          %v2890 = vld [vmem:[#allocation12 + $0xd8] sm:$0xf]
          %v2891 = vld [vmem:[#allocation12 + $0xdc] sm:$0xf]
          %v2892 = vld [vmem:[#allocation12 + $0xe0] sm:$0xf]
          %v2893 = vld [vmem:[#allocation12 + $0xe4] sm:$0xf]
          %v2894 = vld [vmem:[#allocation12 + $0xe8] sm:$0xf]
          %v2895 = vld [vmem:[#allocation12 + $0xec] sm:$0xf]
          %v2896 = vld [vmem:[#allocation12 + $0xf0] sm:$0xf]
          %v2897 = vld [vmem:[#allocation12 + $0xf4] sm:$0xf]
          %v2898 = vld [vmem:[#allocation12 + $0xf8] sm:$0xf]
          %v2899 = vld [vmem:[#allocation12 + $0xfc] sm:$0xf]
          %v2900 = vld [vmem:[#allocation12 + $0x100] sm:$0xf]
          %v2901 = vld [vmem:[#allocation12 + $0x104] sm:$0xf]
          %v2902 = vld [vmem:[#allocation12 + $0x108] sm:$0xf]
          %v2903 = vld [vmem:[#allocation12 + $0x10c] sm:$0xf]
          %v2904 = vld [vmem:[#allocation12 + $0x110] sm:$0xf]
          %v2905 = vld [vmem:[#allocation12 + $0x114] sm:$0xf]
          %v2906 = vld [vmem:[#allocation12 + $0x118] sm:$0xf]
          %v2907 = vld [vmem:[#allocation12 + $0x11c] sm:$0xf]
          %v2908 = vld [vmem:[#allocation12 + $0x120] sm:$0xf]
          %v2909 = vld [vmem:[#allocation12 + $0x124] sm:$0xf]
          %v2910 = vld [vmem:[#allocation12 + $0x128] sm:$0xf]
          %v2911 = vld [vmem:[#allocation12 + $0x12c] sm:$0xf]
          %v2912 = vld [vmem:[#allocation12 + $0x130] sm:$0xf]
          %v2913 = vld [vmem:[#allocation12 + $0x134] sm:$0xf]
          %v2914 = vld [vmem:[#allocation12 + $0x138] sm:$0xf]
          %v2915 = vld [vmem:[#allocation12 + $0x13c] sm:$0xf]
          %v2916 = vld [vmem:[#allocation12 + $0x140] sm:$0xf]
          %v2917 = vld [vmem:[#allocation12 + $0x144] sm:$0xf]
          %v2918 = vld [vmem:[#allocation12 + $0x148] sm:$0xf]
          %v2919 = vld [vmem:[#allocation12 + $0x14c] sm:$0xf]
          %v2920 = vld [vmem:[#allocation12 + $0x150] sm:$0xf]
          %v2921 = vld [vmem:[#allocation12 + $0x154] sm:$0xf]
          %v2922 = vld [vmem:[#allocation12 + $0x158] sm:$0xf]
          %v2923 = vld [vmem:[#allocation12 + $0x15c] sm:$0xf]
          %v2924 = vld [vmem:[#allocation12 + $0x160] sm:$0xf]
          %v2925 = vld [vmem:[#allocation12 + $0x164] sm:$0xf]
          %v2926 = vld [vmem:[#allocation12 + $0x168] sm:$0xf]
          %v2927 = vld [vmem:[#allocation12 + $0x16c] sm:$0xf]
          %v2928 = vld [vmem:[#allocation12 + $0x170] sm:$0xf]
          %v2929 = vld [vmem:[#allocation12 + $0x174] sm:$0xf]
          %v2930 = vld [vmem:[#allocation12 + $0x178] sm:$0xf]
          %v2931 = vld [vmem:[#allocation12 + $0x17c] sm:$0xf]
          %v2932 = vld [vmem:[#allocation12 + $0x180] sm:$0xf]
          %v2933 = vld [vmem:[#allocation12 + $0x184] sm:$0xf]
          %v2934 = vld [vmem:[#allocation12 + $0x188] sm:$0xf]
          %v2935 = vld [vmem:[#allocation12 + $0x18c] sm:$0xf]
          %v2936 = vld [vmem:[#allocation12 + $0x190] sm:$0xf]
          %v2937 = vld [vmem:[#allocation12 + $0x194] sm:$0xf]
          %v2938 = vld [vmem:[#allocation12 + $0x198] sm:$0xf]
          %v2939 = vld [vmem:[#allocation12 + $0x19c] sm:$0xf]
          %v2940 = vld [vmem:[#allocation12 + $0x1a0] sm:$0xf]
          %v2941 = vld [vmem:[#allocation12 + $0x1a4] sm:$0xf]
          %v2942 = vld [vmem:[#allocation12 + $0x1a8] sm:$0xf]
          %v2943 = vld [vmem:[#allocation12 + $0x1ac] sm:$0xf]
          %v2944 = vld [vmem:[#allocation12 + $0x1b0] sm:$0xf]
          %v2945 = vld [vmem:[#allocation12 + $0x1b4] sm:$0xf]
          %v2946 = vld [vmem:[#allocation12 + $0x1b8] sm:$0xf]
          %v2947 = vld [vmem:[#allocation12 + $0x1bc] sm:$0xf]
          %v2948 = vld [vmem:[#allocation12 + $0x1c0] sm:$0xf]
          %v2949 = vld [vmem:[#allocation12 + $0x1c4] sm:$0xf]
          %v2950 = vld [vmem:[#allocation12 + $0x1c8] sm:$0xf]
          %v2951 = vld [vmem:[#allocation12 + $0x1cc] sm:$0xf]
          %v2952 = vld [vmem:[#allocation12 + $0x1d0] sm:$0xf]
          %v2953 = vld [vmem:[#allocation12 + $0x1d4] sm:$0xf]
          %v2954 = vld [vmem:[#allocation12 + $0x1d8] sm:$0xf]
          %v2955 = vld [vmem:[#allocation12 + $0x1dc] sm:$0xf]
          %v2956 = vld [vmem:[#allocation12 + $0x1e0] sm:$0xf]
          %v2957 = vld [vmem:[#allocation12 + $0x1e4] sm:$0xf]
          %v2958 = vld [vmem:[#allocation12 + $0x1e8] sm:$0xf]
          %v2959 = vld [vmem:[#allocation12 + $0x1ec] sm:$0xf]
          %v2960 = vld [vmem:[#allocation12 + $0x1f0] sm:$0xf]
          %v2961 = vld [vmem:[#allocation12 + $0x1f4] sm:$0xf]
          %v2962 = vld [vmem:[#allocation12 + $0x1f8] sm:$0xf]
          %v2963 = vld [vmem:[#allocation12 + $0x1fc] sm:$0xf]
          %v2980 = vunpack.c.l.b16 %v2820
          %v2981 = vunpack.c.l.b16 %v2821
          %v2982 = vunpack.c.l.b16 %v2822
          %v2983 = vunpack.c.l.b16 %v2823
          %v2984 = vunpack.c.l.b16 %v2824
          %v2985 = vunpack.c.l.b16 %v2825
          %v2986 = vunpack.c.l.b16 %v2826
          %v2987 = vunpack.c.l.b16 %v2827
          %v2988 = vunpack.c.l.b16 %v2828
          %v2989 = vunpack.c.l.b16 %v2829
          %v2990 = vunpack.c.l.b16 %v2830
          %v2991 = vunpack.c.l.b16 %v2831
          %v2992 = vunpack.c.l.b16 %v2832
          %v2993 = vunpack.c.l.b16 %v2833
          %v2994 = vunpack.c.l.b16 %v2834
          %v2995 = vunpack.c.l.b16 %v2835
          %vm2996 = vcmask 1041409
          %v2997 = vsel %vm2996, %v2988, %v2980
          %v2998 = vsel %vm2996, %v2989, %v2981
          %v2999 = vsel %vm2996, %v2990, %v2982
          %v3000 = vsel %vm2996, %v2991, %v2983
          %v3001 = vsel %vm2996, %v2992, %v2984
          %v3002 = vsel %vm2996, %v2993, %v2985
          %v3003 = vsel %vm2996, %v2994, %v2986
          %v3004 = vsel %vm2996, %v2995, %v2987
          %v3005 = vpack.c.b16 %v2997, %v2997
          %v3006 = vpack.c.b16 %v2998, %v2998
          %v3007 = vpack.c.b16 %v2999, %v2999
          %v3008 = vpack.c.b16 %v3000, %v3000
          %v3009 = vpack.c.b16 %v3001, %v3001
          %v3010 = vpack.c.b16 %v3002, %v3002
          %v3011 = vpack.c.b16 %v3003, %v3003
          %v3012 = vpack.c.b16 %v3004, %v3004
          %v3149 = vunpack.c.l.b16 %v2836
          %v3150 = vunpack.c.l.b16 %v2837
          %v3151 = vunpack.c.l.b16 %v2838
          %v3152 = vunpack.c.l.b16 %v2839
          %v3153 = vunpack.c.l.b16 %v2840
          %v3154 = vunpack.c.l.b16 %v2841
          %v3155 = vunpack.c.l.b16 %v2842
          %v3156 = vunpack.c.l.b16 %v2843
          %v3157 = vunpack.c.l.b16 %v2844
          %v3158 = vunpack.c.l.b16 %v2845
          %v3159 = vunpack.c.l.b16 %v2846
          %v3160 = vunpack.c.l.b16 %v2847
          %v3161 = vunpack.c.l.b16 %v2848
          %v3162 = vunpack.c.l.b16 %v2849
          %v3163 = vunpack.c.l.b16 %v2850
          %v3164 = vunpack.c.l.b16 %v2851
          %v3165 = vunpack.c.l.b16 %v2852
          %v3166 = vunpack.c.l.b16 %v2853
          %v3167 = vunpack.c.l.b16 %v2854
          %v3168 = vunpack.c.l.b16 %v2855
          %v3169 = vunpack.c.l.b16 %v2856
          %v3170 = vunpack.c.l.b16 %v2857
          %v3171 = vunpack.c.l.b16 %v2858
          %v3172 = vunpack.c.l.b16 %v2859
          %v3173 = vunpack.c.l.b16 %v2860
          %v3174 = vunpack.c.l.b16 %v2861
          %v3175 = vunpack.c.l.b16 %v2862
          %v3176 = vunpack.c.l.b16 %v2863
          %v3177 = vunpack.c.l.b16 %v2864
          %v3178 = vunpack.c.l.b16 %v2865
          %v3179 = vunpack.c.l.b16 %v2866
          %v3180 = vunpack.c.l.b16 %v2867
          %v3181 = vunpack.c.l.b16 %v2868
          %v3182 = vunpack.c.l.b16 %v2869
          %v3183 = vunpack.c.l.b16 %v2870
          %v3184 = vunpack.c.l.b16 %v2871
          %v3185 = vunpack.c.l.b16 %v2872
          %v3186 = vunpack.c.l.b16 %v2873
          %v3187 = vunpack.c.l.b16 %v2874
          %v3188 = vunpack.c.l.b16 %v2875
          %v3189 = vunpack.c.l.b16 %v2876
          %v3190 = vunpack.c.l.b16 %v2877
          %v3191 = vunpack.c.l.b16 %v2878
          %v3192 = vunpack.c.l.b16 %v2879
          %v3193 = vunpack.c.l.b16 %v2880
          %v3194 = vunpack.c.l.b16 %v2881
          %v3195 = vunpack.c.l.b16 %v2882
          %v3196 = vunpack.c.l.b16 %v2883
          %v3197 = vunpack.c.l.b16 %v2884
          %v3198 = vunpack.c.l.b16 %v2885
          %v3199 = vunpack.c.l.b16 %v2886
          %v3200 = vunpack.c.l.b16 %v2887
          %v3201 = vunpack.c.l.b16 %v2888
          %v3202 = vunpack.c.l.b16 %v2889
          %v3203 = vunpack.c.l.b16 %v2890
          %v3204 = vunpack.c.l.b16 %v2891
          %v3205 = vunpack.c.l.b16 %v2892
          %v3206 = vunpack.c.l.b16 %v2893
          %v3207 = vunpack.c.l.b16 %v2894
          %v3208 = vunpack.c.l.b16 %v2895
          %v3209 = vunpack.c.l.b16 %v2896
          %v3210 = vunpack.c.l.b16 %v2897
          %v3211 = vunpack.c.l.b16 %v2898
          %v3212 = vunpack.c.l.b16 %v2899
          %v3213 = vunpack.c.l.b16 %v2900
          %v3214 = vunpack.c.l.b16 %v2901
          %v3215 = vunpack.c.l.b16 %v2902
          %v3216 = vunpack.c.l.b16 %v2903
          %v3217 = vunpack.c.l.b16 %v2904
          %v3218 = vunpack.c.l.b16 %v2905
          %v3219 = vunpack.c.l.b16 %v2906
          %v3220 = vunpack.c.l.b16 %v2907
          %v3221 = vunpack.c.l.b16 %v2908
          %v3222 = vunpack.c.l.b16 %v2909
          %v3223 = vunpack.c.l.b16 %v2910
          %v3224 = vunpack.c.l.b16 %v2911
          %v3225 = vunpack.c.l.b16 %v2912
          %v3226 = vunpack.c.l.b16 %v2913
          %v3227 = vunpack.c.l.b16 %v2914
          %v3228 = vunpack.c.l.b16 %v2915
          %v3229 = vunpack.c.l.b16 %v2916
          %v3230 = vunpack.c.l.b16 %v2917
          %v3231 = vunpack.c.l.b16 %v2918
          %v3232 = vunpack.c.l.b16 %v2919
          %v3233 = vunpack.c.l.b16 %v2920
          %v3234 = vunpack.c.l.b16 %v2921
          %v3235 = vunpack.c.l.b16 %v2922
          %v3236 = vunpack.c.l.b16 %v2923
          %v3237 = vunpack.c.l.b16 %v2924
          %v3238 = vunpack.c.l.b16 %v2925
          %v3239 = vunpack.c.l.b16 %v2926
          %v3240 = vunpack.c.l.b16 %v2927
          %v3241 = vunpack.c.l.b16 %v2928
          %v3242 = vunpack.c.l.b16 %v2929
          %v3243 = vunpack.c.l.b16 %v2930
          %v3244 = vunpack.c.l.b16 %v2931
          %v3245 = vunpack.c.l.b16 %v2932
          %v3246 = vunpack.c.l.b16 %v2933
          %v3247 = vunpack.c.l.b16 %v2934
          %v3248 = vunpack.c.l.b16 %v2935
          %v3249 = vunpack.c.l.b16 %v2936
          %v3250 = vunpack.c.l.b16 %v2937
          %v3251 = vunpack.c.l.b16 %v2938
          %v3252 = vunpack.c.l.b16 %v2939
          %v3253 = vunpack.c.l.b16 %v2940
          %v3254 = vunpack.c.l.b16 %v2941
          %v3255 = vunpack.c.l.b16 %v2942
          %v3256 = vunpack.c.l.b16 %v2943
          %v3257 = vunpack.c.l.b16 %v2944
          %v3258 = vunpack.c.l.b16 %v2945
          %v3259 = vunpack.c.l.b16 %v2946
          %v3260 = vunpack.c.l.b16 %v2947
          %v3261 = vunpack.c.l.b16 %v2948
          %v3262 = vunpack.c.l.b16 %v2949
          %v3263 = vunpack.c.l.b16 %v2950
          %v3264 = vunpack.c.l.b16 %v2951
          %v3265 = vunpack.c.l.b16 %v2952
          %v3266 = vunpack.c.l.b16 %v2953
          %v3267 = vunpack.c.l.b16 %v2954
          %v3268 = vunpack.c.l.b16 %v2955
          %v3269 = vunpack.c.l.b16 %v2956
          %v3270 = vunpack.c.l.b16 %v2957
          %v3271 = vunpack.c.l.b16 %v2958
          %v3272 = vunpack.c.l.b16 %v2959
          %v3273 = vunpack.c.l.b16 %v2960
          %v3274 = vunpack.c.l.b16 %v2961
          %v3275 = vunpack.c.l.b16 %v2962
          %v3276 = vunpack.c.l.b16 %v2963
          %v3277 = vpack.c.b16 %v3150, %v3149
          %v3278 = vpack.c.b16 %v3152, %v3151
          %v3279 = vpack.c.b16 %v3154, %v3153
          %v3280 = vpack.c.b16 %v3156, %v3155
          %v3281 = vpack.c.b16 %v3158, %v3157
          %v3282 = vpack.c.b16 %v3160, %v3159
          %v3283 = vpack.c.b16 %v3162, %v3161
          %v3284 = vpack.c.b16 %v3164, %v3163
          %v3285 = vpack.c.b16 %v3166, %v3165
          %v3286 = vpack.c.b16 %v3168, %v3167
          %v3287 = vpack.c.b16 %v3170, %v3169
          %v3288 = vpack.c.b16 %v3172, %v3171
          %v3289 = vpack.c.b16 %v3174, %v3173
          %v3290 = vpack.c.b16 %v3176, %v3175
          %v3291 = vpack.c.b16 %v3178, %v3177
          %v3292 = vpack.c.b16 %v3180, %v3179
          %v3293 = vpack.c.b16 %v3182, %v3181
          %v3294 = vpack.c.b16 %v3184, %v3183
          %v3295 = vpack.c.b16 %v3186, %v3185
          %v3296 = vpack.c.b16 %v3188, %v3187
          %v3297 = vpack.c.b16 %v3190, %v3189
          %v3298 = vpack.c.b16 %v3192, %v3191
          %v3299 = vpack.c.b16 %v3194, %v3193
          %v3300 = vpack.c.b16 %v3196, %v3195
          %v3301 = vpack.c.b16 %v3198, %v3197
          %v3302 = vpack.c.b16 %v3200, %v3199
          %v3303 = vpack.c.b16 %v3202, %v3201
          %v3304 = vpack.c.b16 %v3204, %v3203
          %v3305 = vpack.c.b16 %v3206, %v3205
          %v3306 = vpack.c.b16 %v3208, %v3207
          %v3307 = vpack.c.b16 %v3210, %v3209
          %v3308 = vpack.c.b16 %v3212, %v3211
          %v3309 = vpack.c.b16 %v3214, %v3213
          %v3310 = vpack.c.b16 %v3216, %v3215
          %v3311 = vpack.c.b16 %v3218, %v3217
          %v3312 = vpack.c.b16 %v3220, %v3219
          %v3313 = vpack.c.b16 %v3222, %v3221
          %v3314 = vpack.c.b16 %v3224, %v3223
          %v3315 = vpack.c.b16 %v3226, %v3225
          %v3316 = vpack.c.b16 %v3228, %v3227
          %v3317 = vpack.c.b16 %v3230, %v3229
          %v3318 = vpack.c.b16 %v3232, %v3231
          %v3319 = vpack.c.b16 %v3234, %v3233
          %v3320 = vpack.c.b16 %v3236, %v3235
          %v3321 = vpack.c.b16 %v3238, %v3237
          %v3322 = vpack.c.b16 %v3240, %v3239
          %v3323 = vpack.c.b16 %v3242, %v3241
          %v3324 = vpack.c.b16 %v3244, %v3243
          %v3325 = vpack.c.b16 %v3246, %v3245
          %v3326 = vpack.c.b16 %v3248, %v3247
          %v3327 = vpack.c.b16 %v3250, %v3249
          %v3328 = vpack.c.b16 %v3252, %v3251
          %v3329 = vpack.c.b16 %v3254, %v3253
          %v3330 = vpack.c.b16 %v3256, %v3255
          %v3331 = vpack.c.b16 %v3258, %v3257
          %v3332 = vpack.c.b16 %v3260, %v3259
          %v3333 = vpack.c.b16 %v3262, %v3261
          %v3334 = vpack.c.b16 %v3264, %v3263
          %v3335 = vpack.c.b16 %v3266, %v3265
          %v3336 = vpack.c.b16 %v3268, %v3267
          %v3337 = vpack.c.b16 %v3270, %v3269
          %v3338 = vpack.c.b16 %v3272, %v3271
          %v3339 = vpack.c.b16 %v3274, %v3273
          %v3340 = vpack.c.b16 %v3276, %v3275
          %3405 = vmatprep.subr.bf16.mxu0 0
          %3406 = vmatpush1.bf16.msra.mxu0 %v3277
          %3407 = vmatprep.subr.bf16.mxu0 0
          %3408 = vmatpush1.bf16.msra.mxu0 %v3278
          %3409 = vmatprep.subr.bf16.mxu0 0
          %3410 = vmatpush1.bf16.msra.mxu0 %v3279
          %3411 = vmatprep.subr.bf16.mxu0 0
          %3412 = vmatpush1.bf16.msra.mxu0 %v3280
          %3413 = vmatprep.subr.bf16.mxu0 0
          %3414 = vmatpush1.bf16.msra.mxu0 %v3281
          %3415 = vmatprep.subr.bf16.mxu0 0
          %3416 = vmatpush1.bf16.msra.mxu0 %v3282
          %3417 = vmatprep.subr.bf16.mxu0 0
          %3418 = vmatpush1.bf16.msra.mxu0 %v3283
          %3419 = vmatprep.subr.bf16.mxu0 0
          %3420 = vmatpush1.bf16.msra.mxu0 %v3284
          %3421 = vmatprep.subr.bf16.mxu0 0
          %3422 = vmatpush1.bf16.msra.mxu0 %v3285
          %3423 = vmatprep.subr.bf16.mxu0 0
          %3424 = vmatpush1.bf16.msra.mxu0 %v3286
          %3425 = vmatprep.subr.bf16.mxu0 0
          %3426 = vmatpush1.bf16.msra.mxu0 %v3287
          %3427 = vmatprep.subr.bf16.mxu0 0
          %3428 = vmatpush1.bf16.msra.mxu0 %v3288
          %3429 = vmatprep.subr.bf16.mxu0 0
          %3430 = vmatpush1.bf16.msra.mxu0 %v3289
          %3431 = vmatprep.subr.bf16.mxu0 0
          %3432 = vmatpush1.bf16.msra.mxu0 %v3290
          %3433 = vmatprep.subr.bf16.mxu0 0
          %3434 = vmatpush1.bf16.msra.mxu0 %v3291
          %3435 = vmatprep.subr.bf16.mxu0 0
          %3436 = vmatpush1.bf16.msra.mxu0 %v3292
          %3437 = vmatprep.mubr.bf16.mxu0 %v3006
          %3438 = vmatmul.mubr.bf16.gmra.mrb[0].mxu0 %v3005
          %v3439 = vpop.f32.mrb[0].mxu0
          %v3440 = vadd.f32 0.0, %v3439
          %v3441 = vpop.f32.mrb[0].mxu0
          %v3442 = vpop.f32.mrb[0].mxu0
          %v3443 = vpop.f32.mrb[0].mxu0
          %3444 = vdwg.mxu0
          %3445 = vmatprep.subr.bf16.mxu0 0
          %3446 = vmatpush1.bf16.msra.mxu0 %v3293
          %3447 = vmatprep.subr.bf16.mxu0 0
          %3448 = vmatpush1.bf16.msra.mxu0 %v3294
          %3449 = vmatprep.subr.bf16.mxu0 0
          %3450 = vmatpush1.bf16.msra.mxu0 %v3295
          %3451 = vmatprep.subr.bf16.mxu0 0
          %3452 = vmatpush1.bf16.msra.mxu0 %v3296
          %3453 = vmatprep.subr.bf16.mxu0 0
          %3454 = vmatpush1.bf16.msra.mxu0 %v3297
          %3455 = vmatprep.subr.bf16.mxu0 0
          %3456 = vmatpush1.bf16.msra.mxu0 %v3298
          %3457 = vmatprep.subr.bf16.mxu0 0
          %3458 = vmatpush1.bf16.msra.mxu0 %v3299
          %3459 = vmatprep.subr.bf16.mxu0 0
          %3460 = vmatpush1.bf16.msra.mxu0 %v3300
          %3461 = vmatprep.subr.bf16.mxu0 0
          %3462 = vmatpush1.bf16.msra.mxu0 %v3301
          %3463 = vmatprep.subr.bf16.mxu0 0
          %3464 = vmatpush1.bf16.msra.mxu0 %v3302
          %3465 = vmatprep.subr.bf16.mxu0 0
          %3466 = vmatpush1.bf16.msra.mxu0 %v3303
          %3467 = vmatprep.subr.bf16.mxu0 0
          %3468 = vmatpush1.bf16.msra.mxu0 %v3304
          %3469 = vmatprep.subr.bf16.mxu0 0
          %3470 = vmatpush1.bf16.msra.mxu0 %v3305
          %3471 = vmatprep.subr.bf16.mxu0 0
          %3472 = vmatpush1.bf16.msra.mxu0 %v3306
          %3473 = vmatprep.subr.bf16.mxu0 0
          %3474 = vmatpush1.bf16.msra.mxu0 %v3307
          %3475 = vmatprep.subr.bf16.mxu0 0
          %3476 = vmatpush1.bf16.msra.mxu0 %v3308
          %3477 = vmatprep.mubr.bf16.mxu0 %v3008
          %3478 = vmatmul.mubr.bf16.gmra.mrb[0].mxu0 %v3007
          %v3479 = vpop.f32.mrb[0].mxu0
          %v3480 = vadd.f32 %v3440, %v3479
          %v3481 = vpop.f32.mrb[0].mxu0
          %v3482 = vpop.f32.mrb[0].mxu0
          %v3483 = vpop.f32.mrb[0].mxu0
          %3484 = vdwg.mxu0
          %3485 = vmatprep.subr.bf16.mxu0 0
          %3486 = vmatpush1.bf16.msra.mxu0 %v3309
          %3487 = vmatprep.subr.bf16.mxu0 0
          %3488 = vmatpush1.bf16.msra.mxu0 %v3310
          %3489 = vmatprep.subr.bf16.mxu0 0
          %3490 = vmatpush1.bf16.msra.mxu0 %v3311
          %3491 = vmatprep.subr.bf16.mxu0 0
          %3492 = vmatpush1.bf16.msra.mxu0 %v3312
          %3493 = vmatprep.subr.bf16.mxu0 0
          %3494 = vmatpush1.bf16.msra.mxu0 %v3313
          %3495 = vmatprep.subr.bf16.mxu0 0
          %3496 = vmatpush1.bf16.msra.mxu0 %v3314
          %3497 = vmatprep.subr.bf16.mxu0 0
          %3498 = vmatpush1.bf16.msra.mxu0 %v3315
          %3499 = vmatprep.subr.bf16.mxu0 0
          %3500 = vmatpush1.bf16.msra.mxu0 %v3316
          %3501 = vmatprep.subr.bf16.mxu0 0
          %3502 = vmatpush1.bf16.msra.mxu0 %v3317
          %3503 = vmatprep.subr.bf16.mxu0 0
          %3504 = vmatpush1.bf16.msra.mxu0 %v3318
          %3505 = vmatprep.subr.bf16.mxu0 0
          %3506 = vmatpush1.bf16.msra.mxu0 %v3319
          %3507 = vmatprep.subr.bf16.mxu0 0
          %3508 = vmatpush1.bf16.msra.mxu0 %v3320
          %3509 = vmatprep.subr.bf16.mxu0 0
          %3510 = vmatpush1.bf16.msra.mxu0 %v3321
          %3511 = vmatprep.subr.bf16.mxu0 0
          %3512 = vmatpush1.bf16.msra.mxu0 %v3322
          %3513 = vmatprep.subr.bf16.mxu0 0
          %3514 = vmatpush1.bf16.msra.mxu0 %v3323
          %3515 = vmatprep.subr.bf16.mxu0 0
          %3516 = vmatpush1.bf16.msra.mxu0 %v3324
          %3517 = vmatprep.mubr.bf16.mxu0 %v3010
          %3518 = vmatmul.mubr.bf16.gmra.mrb[0].mxu0 %v3009
          %v3519 = vpop.f32.mrb[0].mxu0
          %v3520 = vadd.f32 %v3480, %v3519
          %v3521 = vpop.f32.mrb[0].mxu0
          %v3522 = vpop.f32.mrb[0].mxu0
          %v3523 = vpop.f32.mrb[0].mxu0
          %3524 = vdwg.mxu0
          %3525 = vmatprep.subr.bf16.mxu0 0
          %3526 = vmatpush1.bf16.msra.mxu0 %v3325
          %3527 = vmatprep.subr.bf16.mxu0 0
          %3528 = vmatpush1.bf16.msra.mxu0 %v3326
          %3529 = vmatprep.subr.bf16.mxu0 0
          %3530 = vmatpush1.bf16.msra.mxu0 %v3327
          %3531 = vmatprep.subr.bf16.mxu0 0
          %3532 = vmatpush1.bf16.msra.mxu0 %v3328
          %3533 = vmatprep.subr.bf16.mxu0 0
          %3534 = vmatpush1.bf16.msra.mxu0 %v3329
          %3535 = vmatprep.subr.bf16.mxu0 0
          %3536 = vmatpush1.bf16.msra.mxu0 %v3330
          %3537 = vmatprep.subr.bf16.mxu0 0
          %3538 = vmatpush1.bf16.msra.mxu0 %v3331
          %3539 = vmatprep.subr.bf16.mxu0 0
          %3540 = vmatpush1.bf16.msra.mxu0 %v3332
          %3541 = vmatprep.subr.bf16.mxu0 0
          %3542 = vmatpush1.bf16.msra.mxu0 %v3333
          %3543 = vmatprep.subr.bf16.mxu0 0
          %3544 = vmatpush1.bf16.msra.mxu0 %v3334
          %3545 = vmatprep.subr.bf16.mxu0 0
          %3546 = vmatpush1.bf16.msra.mxu0 %v3335
          %3547 = vmatprep.subr.bf16.mxu0 0
          %3548 = vmatpush1.bf16.msra.mxu0 %v3336
          %3549 = vmatprep.subr.bf16.mxu0 0
          %3550 = vmatpush1.bf16.msra.mxu0 %v3337
          %3551 = vmatprep.subr.bf16.mxu0 0
          %3552 = vmatpush1.bf16.msra.mxu0 %v3338
          %3553 = vmatprep.subr.bf16.mxu0 0
          %3554 = vmatpush1.bf16.msra.mxu0 %v3339
          %3555 = vmatprep.subr.bf16.mxu0 0
          %3556 = vmatpush1.bf16.msra.mxu0 %v3340
          %3557 = vmatprep.mubr.bf16.mxu0 %v3012
          %3558 = vmatmul.mubr.bf16.gmra.mrb[0].mxu0 %v3011
          %v3559 = vpop.f32.mrb[0].mxu0
          %v3560 = vadd.f32 %v3520, %v3559
          %v3561 = vpop.f32.mrb[0].mxu0
          %v3562 = vpop.f32.mrb[0].mxu0
          %v3563 = vpop.f32.mrb[0].mxu0
          %3564 = vdwg.mxu0
          %v3567 = vunpack.c.l.s4 1966171168
          %v3568 = vunpack.c.0.s8 %v3567
          %v3569 = vlaneseq
          %v3570 = vshrl.u32 %v3569, 7
          %v3571 = vsub.s32 %v3568, %v3570
          %v3572 = vrot.slane %v3560, %v3571
          %v3573 = vcombine.high %v3572, %v3572
          %v3575 = vunpack.c.l.s4 1966171168
          %v3576 = vunpack.c.0.s8 %v3575
          %v3577 = vlaneseq
          %v3578 = vshrl.u32 %v3577, 7
          %v3579 = vsub.s32 %v3576, %v3578
          %v3580 = vrot.slane %v3572, %v3579
          %v3582 = vunpack.c.l.s4 1966171168
          %v3583 = vunpack.c.0.s8 %v3582
          %v3584 = vlaneseq
          %v3585 = vshrl.u32 %v3584, 7
          %v3586 = vsub.s32 %v3583, %v3585
          %v3587 = vrot.slane %v3573, %v3586
          %v3588 = vlaneseq
          %v3589 = vshrl.u32 %v3588, 7
          %v3590 = vsub.s32 0, %v3589
          %v3591 = vrot.slane %v3580, %v3590
          %v3592 = vlaneseq
          %v3593 = vshrl.u32 %v3592, 7
          %v3594 = vsub.s32 0, %v3593
          %v3595 = vrot.slane %v3587, %v3594
          %v3598 = vld [vmem:[%s1] sm:$0xff]
          %v3599 = vld [vmem:[%s1 + $0x8] sm:$0xff]
          %v3600 = vld [vmem:[%s1 + $0x10] sm:$0xff]
          %v3601 = vld [vmem:[%s1 + $0x18] sm:$0xff]
          %v3602 = vld [vmem:[#allocation15] sm:$0x7]
          %3604 = vset.pattern.permute.xlu0 0
          %3605 = vperm.xlu0 %3604, %v3598
          %v3606 = vpop.permute.xlu0 %3605
          %3609 = vset.pattern.permute.xlu0 0
          %3610 = vperm.xlu0 %3609, %v3599
          %v3611 = vpop.permute.xlu0 %3610
          %3614 = vset.pattern.permute.xlu0 0
          %3615 = vperm.xlu0 %3614, %v3600
          %v3616 = vpop.permute.xlu0 %3615
          %3619 = vset.pattern.permute.xlu0 0
          %3620 = vperm.xlu0 %3619, %v3601
          %v3621 = vpop.permute.xlu0 %3620
          %v3623 = vlaneseq
          %v3624 = vshrl.u32 %v3623, 7
          %v3625 = vsub.s32 0, %v3624
          %v3626 = vrot.slane %v3602, %v3625
          %v3627 = vmul.f32 %v3606, %v3626
          %v3628 = vmul.f32 %v3611, %v3626
          %v3629 = vmul.f32 %v3616, %v3626
          %v3630 = vmul.f32 %v3621, %v3626
          %3631 = vset.pattern.permute.xlu0 1
          %3632 = vperm.xlu0 %3631, %v3598
          %v3633 = vpop.permute.xlu0 %3632
          %3635 = vset.pattern.permute.xlu0 1
          %3636 = vperm.xlu0 %3635, %v3599
          %v3637 = vpop.permute.xlu0 %3636
          %3639 = vset.pattern.permute.xlu0 1
          %3640 = vperm.xlu0 %3639, %v3600
          %v3641 = vpop.permute.xlu0 %3640
          %3643 = vset.pattern.permute.xlu0 1
          %3644 = vperm.xlu0 %3643, %v3601
          %v3645 = vpop.permute.xlu0 %3644
          %v3647 = vlaneseq
          %v3648 = vshrl.u32 %v3647, 7
          %v3649 = vsub.s32 1, %v3648
          %v3650 = vrot.slane %v3602, %v3649
          %v3651 = vmul.f32 %v3633, %v3650
          %v3652 = vmul.f32 %v3637, %v3650
          %v3653 = vmul.f32 %v3641, %v3650
          %v3654 = vmul.f32 %v3645, %v3650
          %v3655 = vadd.f32 %v3627, %v3651
          %v3656 = vadd.f32 %v3628, %v3652
          %v3657 = vadd.f32 %v3629, %v3653
          %v3658 = vadd.f32 %v3630, %v3654
          %3659 = vset.pattern.permute.xlu0 2
          %3660 = vperm.xlu0 %3659, %v3598
          %v3661 = vpop.permute.xlu0 %3660
          %3663 = vset.pattern.permute.xlu0 2
          %3664 = vperm.xlu0 %3663, %v3599
          %v3665 = vpop.permute.xlu0 %3664
          %3667 = vset.pattern.permute.xlu0 2
          %3668 = vperm.xlu0 %3667, %v3600
          %v3669 = vpop.permute.xlu0 %3668
          %3671 = vset.pattern.permute.xlu0 2
          %3672 = vperm.xlu0 %3671, %v3601
          %v3673 = vpop.permute.xlu0 %3672
          %v3675 = vlaneseq
          %v3676 = vshrl.u32 %v3675, 7
          %v3677 = vsub.s32 2, %v3676
          %v3678 = vrot.slane %v3602, %v3677
          %v3679 = vmul.f32 %v3661, %v3678
          %v3680 = vmul.f32 %v3665, %v3678
          %v3681 = vmul.f32 %v3669, %v3678
          %v3682 = vmul.f32 %v3673, %v3678
          %v3683 = vadd.f32 %v3655, %v3679
          %v3684 = vadd.f32 %v3656, %v3680
          %v3685 = vadd.f32 %v3657, %v3681
          %v3686 = vadd.f32 %v3658, %v3682
          %v3687 = vld [vmem:[#allocation14] sm:$0xf]
          %v3688 = vld [vmem:[#allocation14 + $0x4] sm:$0xf]
          %v3689 = vld [vmem:[#allocation14 + $0x8] sm:$0xf]
          %v3690 = vld [vmem:[#allocation14 + $0xc] sm:$0xf]
          %v3691 = vld [vmem:[#allocation14 + $0x10] sm:$0xf]
          %v3692 = vld [vmem:[#allocation14 + $0x14] sm:$0xf]
          %v3693 = vld [vmem:[#allocation14 + $0x18] sm:$0xf]
          %v3694 = vld [vmem:[#allocation14 + $0x1c] sm:$0xf]
          %v3695 = vld [vmem:[#allocation14 + $0x20] sm:$0xf]
          %v3696 = vld [vmem:[#allocation14 + $0x24] sm:$0xf]
          %v3697 = vld [vmem:[#allocation14 + $0x28] sm:$0xf]
          %v3698 = vld [vmem:[#allocation14 + $0x2c] sm:$0xf]
          %v3699 = vld [vmem:[#allocation14 + $0x30] sm:$0xf]
          %v3700 = vld [vmem:[#allocation14 + $0x34] sm:$0xf]
          %v3701 = vld [vmem:[#allocation14 + $0x38] sm:$0xf]
          %v3702 = vld [vmem:[#allocation14 + $0x3c] sm:$0xf]
          %v3719 = vunpack.c.l.b16 %v3687
          %v3720 = vunpack.c.l.b16 %v3688
          %v3721 = vunpack.c.l.b16 %v3689
          %v3722 = vunpack.c.l.b16 %v3690
          %v3723 = vunpack.c.l.b16 %v3691
          %v3724 = vunpack.c.l.b16 %v3692
          %v3725 = vunpack.c.l.b16 %v3693
          %v3726 = vunpack.c.l.b16 %v3694
          %v3727 = vunpack.c.l.b16 %v3695
          %v3728 = vunpack.c.l.b16 %v3696
          %v3729 = vunpack.c.l.b16 %v3697
          %v3730 = vunpack.c.l.b16 %v3698
          %v3731 = vunpack.c.l.b16 %v3699
          %v3732 = vunpack.c.l.b16 %v3700
          %v3733 = vunpack.c.l.b16 %v3701
          %v3734 = vunpack.c.l.b16 %v3702
          %v3735 = vpack.c.b16 %v3720, %v3719
          %v3736 = vpack.c.b16 %v3722, %v3721
          %v3737 = vpack.c.b16 %v3724, %v3723
          %v3738 = vpack.c.b16 %v3726, %v3725
          %v3739 = vpack.c.b16 %v3728, %v3727
          %v3740 = vpack.c.b16 %v3730, %v3729
          %v3741 = vpack.c.b16 %v3732, %v3731
          %v3742 = vpack.c.b16 %v3734, %v3733
          %3751 = vmatprep.subr.bf16.mxu0 0
          %3752 = vmatpush1.bf16.msra.mxu0 %v3735
          %3753 = vmatprep.subr.bf16.mxu0 0
          %3754 = vmatpush1.bf16.msra.mxu0 %v3736
          %3755 = vmatprep.subr.bf16.mxu0 0
          %3756 = vmatpush1.bf16.msra.mxu0 %v3737
          %3757 = vmatprep.subr.bf16.mxu0 0
          %3758 = vmatpush1.bf16.msra.mxu0 %v3738
          %3759 = vmatprep.subr.bf16.mxu0 0
          %3760 = vmatpush1.bf16.msra.mxu0 %v3739
          %3761 = vmatprep.subr.bf16.mxu0 0
          %3762 = vmatpush1.bf16.msra.mxu0 %v3740
          %3763 = vmatprep.subr.bf16.mxu0 0
          %3764 = vmatpush1.bf16.msra.mxu0 %v3741
          %3765 = vmatprep.subr.bf16.mxu0 0
          %3766 = vmatpush1.bf16.msra.mxu0 %v3742
          %3767 = vmatprep.subr.bf16.mxu0 0
          %3768 = vmatpush1.bf16.msra.mxu0 0
          %3769 = vmatprep.subr.bf16.mxu0 0
          %3770 = vmatpush1.bf16.msra.mxu0 0
          %3771 = vmatprep.subr.bf16.mxu0 0
          %3772 = vmatpush1.bf16.msra.mxu0 0
          %3773 = vmatprep.subr.bf16.mxu0 0
          %3774 = vmatpush1.bf16.msra.mxu0 0
          %3775 = vmatprep.subr.bf16.mxu0 0
          %3776 = vmatpush1.bf16.msra.mxu0 0
          %3777 = vmatprep.subr.bf16.mxu0 0
          %3778 = vmatpush1.bf16.msra.mxu0 0
          %3779 = vmatprep.subr.bf16.mxu0 0
          %3780 = vmatpush1.bf16.msra.mxu0 0
          %3781 = vmatprep.subr.bf16.mxu0 0
          %3782 = vmatpush1.bf16.msra.mxu0 0
          %3783 = vmatprep.mubr.bf16.mxu0 0
          %3784 = vmatmul.mubr.bf16.gmra.mrb[0].mxu0 %v1267
          %v3785 = vpop.f32.mrb[0].mxu0
          %v3786 = vadd.f32 0.0, %v3785
          %v3787 = vpop.f32.mrb[0].mxu0
          %v3788 = vpop.f32.mrb[0].mxu0
          %v3789 = vadd.f32 0.0, %v3788
          %v3790 = vpop.f32.mrb[0].mxu0
          %3791 = vmatprep.mubr.bf16.mxu0 0
          %3792 = vmatmul.mubr.bf16.gmra.mrb[0].mxu0 %v1268
          %v3793 = vpop.f32.mrb[0].mxu0
          %v3794 = vadd.f32 0.0, %v3793
          %v3795 = vpop.f32.mrb[0].mxu0
          %v3796 = vpop.f32.mrb[0].mxu0
          %v3797 = vadd.f32 0.0, %v3796
          %v3798 = vpop.f32.mrb[0].mxu0
          %3799 = vdwg.mxu0
          %v3800 = vadd.f32 %v3591, %v3786
          %v3801 = vadd.f32 %v3591, %v3789
          %v3802 = vadd.f32 %v3595, %v3794
          %v3803 = vadd.f32 %v3595, %v3797
          %v3804 = vadd.f32 %v3800, %v3683
          %v3805 = vadd.f32 %v3801, %v3684
          %v3806 = vadd.f32 %v3802, %v3685
          %v3807 = vadd.f32 %v3803, %v3686
          %v3808 = vld [vmem:[#allocation17] sm:$0x1]
          %v3810 = vlaneseq
          %v3811 = vshrl.u32 %v3810, 7
          %v3812 = vsub.s32 0, %v3811
          %v3813 = vrot.slane %v3808, %v3812
          %v3815 = vadd.f32 %v3804, %v3813
          %v3816 = vadd.f32 %v3805, %v3813
          %v3817 = vadd.f32 %v3806, %v3813
          %v3818 = vadd.f32 %v3807, %v3813
          %v3819 = vpack.c.bf16 %v3816, %v3815
          %v3820 = vpack.c.bf16 %v3818, %v3817
          %v3821 = vld [vmem:[#allocation18] sm:$0xff]
          %v3822 = vld [vmem:[#allocation18 + $0x8] sm:$0xff]
          %v3823 = vld [vmem:[#allocation18 + $0x10] sm:$0xff]
          %v3824 = vld [vmem:[#allocation18 + $0x18] sm:$0xff]
          %v3825 = vld [vmem:[#allocation18 + $0x20] sm:$0xff]
          %v3826 = vld [vmem:[#allocation18 + $0x28] sm:$0xff]
          %v3827 = vld [vmem:[#allocation18 + $0x30] sm:$0xff]
          %v3828 = vld [vmem:[#allocation18 + $0x38] sm:$0xff]
          %v3829 = vld [vmem:[#allocation18 + $0x40] sm:$0xff]
          %v3830 = vld [vmem:[#allocation18 + $0x48] sm:$0xff]
          %v3831 = vld [vmem:[#allocation18 + $0x50] sm:$0xff]
          %v3832 = vld [vmem:[#allocation18 + $0x58] sm:$0xff]
          %v3833 = vld [vmem:[#allocation18 + $0x60] sm:$0xff]
          %v3834 = vld [vmem:[#allocation18 + $0x68] sm:$0xff]
          %v3835 = vld [vmem:[#allocation18 + $0x70] sm:$0xff]
          %v3836 = vld [vmem:[#allocation18 + $0x78] sm:$0xff]
          %v3853 = vunpack.c.l.b16 %v3821
          %v3854 = vunpack.c.h.b16 %v3821
          %v3855 = vunpack.c.l.b16 %v3822
          %v3856 = vunpack.c.h.b16 %v3822
          %v3857 = vunpack.c.l.b16 %v3823
          %v3858 = vunpack.c.h.b16 %v3823
          %v3859 = vunpack.c.l.b16 %v3824
          %v3860 = vunpack.c.h.b16 %v3824
          %v3861 = vunpack.c.l.b16 %v3825
          %v3862 = vunpack.c.h.b16 %v3825
          %v3863 = vunpack.c.l.b16 %v3826
          %v3864 = vunpack.c.h.b16 %v3826
          %v3865 = vunpack.c.l.b16 %v3827
          %v3866 = vunpack.c.h.b16 %v3827
          %v3867 = vunpack.c.l.b16 %v3828
          %v3868 = vunpack.c.h.b16 %v3828
          %v3869 = vunpack.c.l.b16 %v3829
          %v3870 = vunpack.c.h.b16 %v3829
          %v3871 = vunpack.c.l.b16 %v3830
          %v3872 = vunpack.c.h.b16 %v3830
          %v3873 = vunpack.c.l.b16 %v3831
          %v3874 = vunpack.c.h.b16 %v3831
          %v3875 = vunpack.c.l.b16 %v3832
          %v3876 = vunpack.c.h.b16 %v3832
          %v3877 = vunpack.c.l.b16 %v3833
          %v3878 = vunpack.c.h.b16 %v3833
          %v3879 = vunpack.c.l.b16 %v3834
          %v3880 = vunpack.c.h.b16 %v3834
          %v3881 = vunpack.c.l.b16 %v3835
          %v3882 = vunpack.c.h.b16 %v3835
          %v3883 = vunpack.c.l.b16 %v3836
          %v3884 = vunpack.c.h.b16 %v3836
          %v3885 = vpack.c.b16 %v3855, %v3853
          %v3886 = vpack.c.b16 %v3856, %v3854
          %v3887 = vpack.c.b16 %v3859, %v3857
          %v3888 = vpack.c.b16 %v3860, %v3858
          %v3889 = vpack.c.b16 %v3863, %v3861
          %v3890 = vpack.c.b16 %v3864, %v3862
          %v3891 = vpack.c.b16 %v3867, %v3865
          %v3892 = vpack.c.b16 %v3868, %v3866
          %v3893 = vpack.c.b16 %v3871, %v3869
          %v3894 = vpack.c.b16 %v3872, %v3870
          %v3895 = vpack.c.b16 %v3875, %v3873
          %v3896 = vpack.c.b16 %v3876, %v3874
          %v3897 = vpack.c.b16 %v3879, %v3877
          %v3898 = vpack.c.b16 %v3880, %v3878
          %v3899 = vpack.c.b16 %v3883, %v3881
          %v3900 = vpack.c.b16 %v3884, %v3882
          %3917 = vmatprep.subr.bf16.mxu0 %v3886
          %3918 = vmatpush1.bf16.msra.mxu0 %v3885
          %3919 = vmatprep.subr.bf16.mxu0 %v3888
          %3920 = vmatpush1.bf16.msra.mxu0 %v3887
          %3921 = vmatprep.subr.bf16.mxu0 %v3890
          %3922 = vmatpush1.bf16.msra.mxu0 %v3889
          %3923 = vmatprep.subr.bf16.mxu0 %v3892
          %3924 = vmatpush1.bf16.msra.mxu0 %v3891
          %3925 = vmatprep.subr.bf16.mxu0 %v3894
          %3926 = vmatpush1.bf16.msra.mxu0 %v3893
          %3927 = vmatprep.subr.bf16.mxu0 %v3896
          %3928 = vmatpush1.bf16.msra.mxu0 %v3895
          %3929 = vmatprep.subr.bf16.mxu0 %v3898
          %3930 = vmatpush1.bf16.msra.mxu0 %v3897
          %3931 = vmatprep.subr.bf16.mxu0 %v3900
          %3932 = vmatpush1.bf16.msra.mxu0 %v3899
          %3933 = vmatprep.subr.bf16.mxu0 0
          %3934 = vmatpush1.bf16.msra.mxu0 0
          %3935 = vmatprep.subr.bf16.mxu0 0
          %3936 = vmatpush1.bf16.msra.mxu0 0
          %3937 = vmatprep.subr.bf16.mxu0 0
          %3938 = vmatpush1.bf16.msra.mxu0 0
          %3939 = vmatprep.subr.bf16.mxu0 0
          %3940 = vmatpush1.bf16.msra.mxu0 0
          %3941 = vmatprep.subr.bf16.mxu0 0
          %3942 = vmatpush1.bf16.msra.mxu0 0
          %3943 = vmatprep.subr.bf16.mxu0 0
          %3944 = vmatpush1.bf16.msra.mxu0 0
          %3945 = vmatprep.subr.bf16.mxu0 0
          %3946 = vmatpush1.bf16.msra.mxu0 0
          %3947 = vmatprep.subr.bf16.mxu0 0
          %3948 = vmatpush1.bf16.msra.mxu0 0
          %3949 = vmatprep.mubr.bf16.mxu0 0
          %3950 = vmatmul.mubr.bf16.gmra.mrb[0].mxu0 %v3819
          %v3951 = vpop.f32.mrb[0].mxu0
          %v3952 = vadd.f32 0.0, %v3951
          %v3953 = vpop.f32.mrb[0].mxu0
          %v3954 = vadd.f32 0.0, %v3953
          %v3955 = vpop.f32.mrb[0].mxu0
          %v3956 = vadd.f32 0.0, %v3955
          %v3957 = vpop.f32.mrb[0].mxu0
          %v3958 = vadd.f32 0.0, %v3957
          %3959 = vmatprep.mubr.bf16.mxu0 0
          %3960 = vmatmul.mubr.bf16.gmra.mrb[0].mxu0 %v3820
          %v3961 = vpop.f32.mrb[0].mxu0
          %v3962 = vadd.f32 0.0, %v3961
          %v3963 = vpop.f32.mrb[0].mxu0
          %v3964 = vadd.f32 0.0, %v3963
          %v3965 = vpop.f32.mrb[0].mxu0
          %v3966 = vadd.f32 0.0, %v3965
          %v3967 = vpop.f32.mrb[0].mxu0
          %v3968 = vadd.f32 0.0, %v3967
          %3969 = vdwg.mxu0
          %v3970 = vld [vmem:[#allocation32] sm:$0xff]
          %v3971 = vld [vmem:[#allocation32 + $0x8] sm:$0xff]
          %v3972 = vld [vmem:[#allocation32 + $0x10] sm:$0xff]
          %v3973 = vld [vmem:[#allocation32 + $0x18] sm:$0xff]
          %v3974 = vld [vmem:[#allocation32 + $0x20] sm:$0xff]
          %v3975 = vld [vmem:[#allocation32 + $0x28] sm:$0xff]
          %v3976 = vld [vmem:[#allocation32 + $0x30] sm:$0xff]
          %v3977 = vld [vmem:[#allocation32 + $0x38] sm:$0xff]
          %v3978 = vld [vmem:[#allocation32 + $0x40] sm:$0xff]
          %v3979 = vld [vmem:[#allocation32 + $0x48] sm:$0xff]
          %v3980 = vld [vmem:[#allocation32 + $0x50] sm:$0xff]
          %v3981 = vld [vmem:[#allocation32 + $0x58] sm:$0xff]
          %v3982 = vld [vmem:[#allocation32 + $0x60] sm:$0xff]
          %v3983 = vld [vmem:[#allocation32 + $0x68] sm:$0xff]
          %v3984 = vld [vmem:[#allocation32 + $0x70] sm:$0xff]
          %v3985 = vld [vmem:[#allocation32 + $0x78] sm:$0xff]
          %v4002 = vunpack.c.l.b16 %v3970
          %v4003 = vunpack.c.h.b16 %v3970
          %v4004 = vunpack.c.l.b16 %v3971
          %v4005 = vunpack.c.h.b16 %v3971
          %v4006 = vunpack.c.l.b16 %v3972
          %v4007 = vunpack.c.h.b16 %v3972
          %v4008 = vunpack.c.l.b16 %v3973
          %v4009 = vunpack.c.h.b16 %v3973
          %v4010 = vunpack.c.l.b16 %v3974
          %v4011 = vunpack.c.h.b16 %v3974
          %v4012 = vunpack.c.l.b16 %v3975
          %v4013 = vunpack.c.h.b16 %v3975
          %v4014 = vunpack.c.l.b16 %v3976
          %v4015 = vunpack.c.h.b16 %v3976
          %v4016 = vunpack.c.l.b16 %v3977
          %v4017 = vunpack.c.h.b16 %v3977
          %v4018 = vunpack.c.l.b16 %v3978
          %v4019 = vunpack.c.h.b16 %v3978
          %v4020 = vunpack.c.l.b16 %v3979
          %v4021 = vunpack.c.h.b16 %v3979
          %v4022 = vunpack.c.l.b16 %v3980
          %v4023 = vunpack.c.h.b16 %v3980
          %v4024 = vunpack.c.l.b16 %v3981
          %v4025 = vunpack.c.h.b16 %v3981
          %v4026 = vunpack.c.l.b16 %v3982
          %v4027 = vunpack.c.h.b16 %v3982
          %v4028 = vunpack.c.l.b16 %v3983
          %v4029 = vunpack.c.h.b16 %v3983
          %v4030 = vunpack.c.l.b16 %v3984
          %v4031 = vunpack.c.h.b16 %v3984
          %v4032 = vunpack.c.l.b16 %v3985
          %v4033 = vunpack.c.h.b16 %v3985
          %v4034 = vpack.c.b16 %v4004, %v4002
          %v4035 = vpack.c.b16 %v4005, %v4003
          %v4036 = vpack.c.b16 %v4008, %v4006
          %v4037 = vpack.c.b16 %v4009, %v4007
          %v4038 = vpack.c.b16 %v4012, %v4010
          %v4039 = vpack.c.b16 %v4013, %v4011
          %v4040 = vpack.c.b16 %v4016, %v4014
          %v4041 = vpack.c.b16 %v4017, %v4015
          %v4042 = vpack.c.b16 %v4020, %v4018
          %v4043 = vpack.c.b16 %v4021, %v4019
          %v4044 = vpack.c.b16 %v4024, %v4022
          %v4045 = vpack.c.b16 %v4025, %v4023
          %v4046 = vpack.c.b16 %v4028, %v4026
          %v4047 = vpack.c.b16 %v4029, %v4027
          %v4048 = vpack.c.b16 %v4032, %v4030
          %v4049 = vpack.c.b16 %v4033, %v4031
          %4066 = vmatprep.subr.bf16.mxu0 %v4035
          %4067 = vmatpush1.bf16.msra.mxu0 %v4034
          %4068 = vmatprep.subr.bf16.mxu0 %v4037
          %4069 = vmatpush1.bf16.msra.mxu0 %v4036
          %4070 = vmatprep.subr.bf16.mxu0 %v4039
          %4071 = vmatpush1.bf16.msra.mxu0 %v4038
          %4072 = vmatprep.subr.bf16.mxu0 %v4041
          %4073 = vmatpush1.bf16.msra.mxu0 %v4040
          %4074 = vmatprep.subr.bf16.mxu0 %v4043
          %4075 = vmatpush1.bf16.msra.mxu0 %v4042
          %4076 = vmatprep.subr.bf16.mxu0 %v4045
          %4077 = vmatpush1.bf16.msra.mxu0 %v4044
          %4078 = vmatprep.subr.bf16.mxu0 %v4047
          %4079 = vmatpush1.bf16.msra.mxu0 %v4046
          %4080 = vmatprep.subr.bf16.mxu0 %v4049
          %4081 = vmatpush1.bf16.msra.mxu0 %v4048
          %4082 = vmatprep.subr.bf16.mxu0 0
          %4083 = vmatpush1.bf16.msra.mxu0 0
          %4084 = vmatprep.subr.bf16.mxu0 0
          %4085 = vmatpush1.bf16.msra.mxu0 0
          %4086 = vmatprep.subr.bf16.mxu0 0
          %4087 = vmatpush1.bf16.msra.mxu0 0
          %4088 = vmatprep.subr.bf16.mxu0 0
          %4089 = vmatpush1.bf16.msra.mxu0 0
          %4090 = vmatprep.subr.bf16.mxu0 0
          %4091 = vmatpush1.bf16.msra.mxu0 0
          %4092 = vmatprep.subr.bf16.mxu0 0
          %4093 = vmatpush1.bf16.msra.mxu0 0
          %4094 = vmatprep.subr.bf16.mxu0 0
          %4095 = vmatpush1.bf16.msra.mxu0 0
          %4096 = vmatprep.subr.bf16.mxu0 0
          %4097 = vmatpush1.bf16.msra.mxu0 0
          %4098 = vmatprep.mubr.bf16.mxu0 0
          %4099 = vmatmul.mubr.bf16.gmra.mrb[0].mxu0 %v3819
          %v4100 = vpop.f32.mrb[0].mxu0
          %v4101 = vadd.f32 0.0, %v4100
          %v4102 = vpop.f32.mrb[0].mxu0
          %v4103 = vadd.f32 0.0, %v4102
          %v4104 = vpop.f32.mrb[0].mxu0
          %v4105 = vadd.f32 0.0, %v4104
          %v4106 = vpop.f32.mrb[0].mxu0
          %v4107 = vadd.f32 0.0, %v4106
          %4108 = vmatprep.mubr.bf16.mxu0 0
          %4109 = vmatmul.mubr.bf16.gmra.mrb[0].mxu0 %v3820
          %v4110 = vpop.f32.mrb[0].mxu0
          %v4111 = vadd.f32 0.0, %v4110
          %v4112 = vpop.f32.mrb[0].mxu0
          %v4113 = vadd.f32 0.0, %v4112
          %v4114 = vpop.f32.mrb[0].mxu0
          %v4115 = vadd.f32 0.0, %v4114
          %v4116 = vpop.f32.mrb[0].mxu0
          %v4117 = vadd.f32 0.0, %v4116
          %4118 = vdwg.mxu0
          %v4119 = vld [vmem:[#allocation20] sm:$0x3]
          %v4121 = vlaneseq
          %v4122 = vshrl.u32 %v4121, 7
          %v4123 = vsub.s32 0, %v4122
          %v4124 = vrot.slane %v4119, %v4123
          %v4125 = vlaneseq
          %v4126 = vshrl.u32 %v4125, 7
          %v4127 = vsub.s32 1, %v4126
          %v4128 = vrot.slane %v4119, %v4127
          %v4131 = vmul.f32 %v3952, %v4124
          %v4132 = vmul.f32 %v3954, %v4128
          %v4133 = vmul.f32 %v3956, %v4124
          %v4134 = vmul.f32 %v3958, %v4128
          %v4135 = vmul.f32 %v3962, %v4124
          %v4136 = vmul.f32 %v3964, %v4128
          %v4137 = vmul.f32 %v3966, %v4124
          %v4138 = vmul.f32 %v3968, %v4128
          %v4139 = vld [vmem:[#allocation21] ss:$4 sm:$0x3]
          %v4141 = vlaneseq
          %v4142 = vshrl.u32 %v4141, 7
          %v4143 = vsub.s32 0, %v4142
          %v4144 = vrot.slane %v4139, %v4143
          %v4145 = vlaneseq
          %v4146 = vshrl.u32 %v4145, 7
          %v4147 = vsub.s32 1, %v4146
          %v4148 = vrot.slane %v4139, %v4147
          %v4151 = vadd.f32 %v4131, %v4144
          %v4152 = vadd.f32 %v4132, %v4148
          %v4153 = vadd.f32 %v4133, %v4144
          %v4154 = vadd.f32 %v4134, %v4148
          %v4155 = vadd.f32 %v4135, %v4144
          %v4156 = vadd.f32 %v4136, %v4148
          %v4157 = vadd.f32 %v4137, %v4144
          %v4158 = vadd.f32 %v4138, %v4148
          %v4159 = vmax.f32 %v4151, 0.0
          %v4160 = vmax.f32 %v4152, 0.0
          %v4161 = vmax.f32 %v4153, 0.0
          %v4162 = vmax.f32 %v4154, 0.0
          %v4163 = vmax.f32 %v4155, 0.0
          %v4164 = vmax.f32 %v4156, 0.0
          %v4165 = vmax.f32 %v4157, 0.0
          %v4166 = vmax.f32 %v4158, 0.0
          %4167 = vst [vmem:[#allocation3] sm:$0xff] %v4159
          %4168 = vst [vmem:[#allocation3 + $0x8] sm:$0xff] %v4160
          %4169 = vst [vmem:[#allocation3 + $0x10] sm:$0xff] %v4161
          %4170 = vst [vmem:[#allocation3 + $0x18] sm:$0xff] %v4162
          %4171 = vst [vmem:[#allocation3 + $0x20] sm:$0xff] %v4163
          %4172 = vst [vmem:[#allocation3 + $0x28] sm:$0xff] %v4164
          %4173 = vst [vmem:[#allocation3 + $0x30] sm:$0xff] %v4165
          %4174 = vst [vmem:[#allocation3 + $0x38] sm:$0xff] %v4166
          %s4175 = scalar_lea.vmem [#allocation21], 1
          %v4176 = vld [vmem:[%s4175] ss:$4 sm:$0x3]
          %v4178 = vlaneseq
          %v4179 = vshrl.u32 %v4178, 7
          %v4180 = vsub.s32 0, %v4179
          %v4181 = vrot.slane %v4176, %v4180
          %v4182 = vlaneseq
          %v4183 = vshrl.u32 %v4182, 7
          %v4184 = vsub.s32 1, %v4183
          %v4185 = vrot.slane %v4176, %v4184
          %v4188 = vadd.f32 %v4131, %v4181
          %v4189 = vadd.f32 %v4132, %v4185
          %v4190 = vadd.f32 %v4133, %v4181
          %v4191 = vadd.f32 %v4134, %v4185
          %v4192 = vadd.f32 %v4135, %v4181
          %v4193 = vadd.f32 %v4136, %v4185
          %v4194 = vadd.f32 %v4137, %v4181
          %v4195 = vadd.f32 %v4138, %v4185
          %v4196 = vmax.f32 %v4188, 0.0
          %v4197 = vmax.f32 %v4189, 0.0
          %v4198 = vmax.f32 %v4190, 0.0
          %v4199 = vmax.f32 %v4191, 0.0
          %v4200 = vmax.f32 %v4192, 0.0
          %v4201 = vmax.f32 %v4193, 0.0
          %v4202 = vmax.f32 %v4194, 0.0
          %v4203 = vmax.f32 %v4195, 0.0
          %4204 = vst [vmem:[#allocation3 + $0x40] sm:$0xff] %v4196
          %4205 = vst [vmem:[#allocation3 + $0x48] sm:$0xff] %v4197
          %4206 = vst [vmem:[#allocation3 + $0x50] sm:$0xff] %v4198
          %4207 = vst [vmem:[#allocation3 + $0x58] sm:$0xff] %v4199
          %4208 = vst [vmem:[#allocation3 + $0x60] sm:$0xff] %v4200
          %4209 = vst [vmem:[#allocation3 + $0x68] sm:$0xff] %v4201
          %4210 = vst [vmem:[#allocation3 + $0x70] sm:$0xff] %v4202
          %4211 = vst [vmem:[#allocation3 + $0x78] sm:$0xff] %v4203
          %s4212 = scalar_lea.vmem [#allocation21], 2
          %v4213 = vld [vmem:[%s4212] ss:$4 sm:$0x3]
          %v4215 = vlaneseq
          %v4216 = vshrl.u32 %v4215, 7
          %v4217 = vsub.s32 0, %v4216
          %v4218 = vrot.slane %v4213, %v4217
          %v4219 = vlaneseq
          %v4220 = vshrl.u32 %v4219, 7
          %v4221 = vsub.s32 1, %v4220
          %v4222 = vrot.slane %v4213, %v4221
          %v4225 = vadd.f32 %v4131, %v4218
          %v4226 = vadd.f32 %v4132, %v4222
          %v4227 = vadd.f32 %v4133, %v4218
          %v4228 = vadd.f32 %v4134, %v4222
          %v4229 = vadd.f32 %v4135, %v4218
          %v4230 = vadd.f32 %v4136, %v4222
          %v4231 = vadd.f32 %v4137, %v4218
          %v4232 = vadd.f32 %v4138, %v4222
          %v4233 = vmax.f32 %v4225, 0.0
          %v4234 = vmax.f32 %v4226, 0.0
          %v4235 = vmax.f32 %v4227, 0.0
          %v4236 = vmax.f32 %v4228, 0.0
          %v4237 = vmax.f32 %v4229, 0.0
          %v4238 = vmax.f32 %v4230, 0.0
          %v4239 = vmax.f32 %v4231, 0.0
          %v4240 = vmax.f32 %v4232, 0.0
          %4241 = vst [vmem:[#allocation3 + $0x80] sm:$0xff] %v4233
          %4242 = vst [vmem:[#allocation3 + $0x88] sm:$0xff] %v4234
          %4243 = vst [vmem:[#allocation3 + $0x90] sm:$0xff] %v4235
          %4244 = vst [vmem:[#allocation3 + $0x98] sm:$0xff] %v4236
          %4245 = vst [vmem:[#allocation3 + $0xa0] sm:$0xff] %v4237
          %4246 = vst [vmem:[#allocation3 + $0xa8] sm:$0xff] %v4238
          %4247 = vst [vmem:[#allocation3 + $0xb0] sm:$0xff] %v4239
          %4248 = vst [vmem:[#allocation3 + $0xb8] sm:$0xff] %v4240
          %s4249 = scalar_lea.vmem [#allocation21], 3
          %v4250 = vld [vmem:[%s4249] ss:$4 sm:$0x3]
          %v4252 = vlaneseq
          %v4253 = vshrl.u32 %v4252, 7
          %v4254 = vsub.s32 0, %v4253
          %v4255 = vrot.slane %v4250, %v4254
          %v4256 = vlaneseq
          %v4257 = vshrl.u32 %v4256, 7
          %v4258 = vsub.s32 1, %v4257
          %v4259 = vrot.slane %v4250, %v4258
          %v4262 = vadd.f32 %v4131, %v4255
          %v4263 = vadd.f32 %v4132, %v4259
          %v4264 = vadd.f32 %v4133, %v4255
          %v4265 = vadd.f32 %v4134, %v4259
          %v4266 = vadd.f32 %v4135, %v4255
          %v4267 = vadd.f32 %v4136, %v4259
          %v4268 = vadd.f32 %v4137, %v4255
          %v4269 = vadd.f32 %v4138, %v4259
          %v4270 = vmax.f32 %v4262, 0.0
          %v4271 = vmax.f32 %v4263, 0.0
          %v4272 = vmax.f32 %v4264, 0.0
          %v4273 = vmax.f32 %v4265, 0.0
          %v4274 = vmax.f32 %v4266, 0.0
          %v4275 = vmax.f32 %v4267, 0.0
          %v4276 = vmax.f32 %v4268, 0.0
          %v4277 = vmax.f32 %v4269, 0.0
          %4278 = vst [vmem:[#allocation3 + $0xc0] sm:$0xff] %v4270
          %4279 = vst [vmem:[#allocation3 + $0xc8] sm:$0xff] %v4271
          %4280 = vst [vmem:[#allocation3 + $0xd0] sm:$0xff] %v4272
          %4281 = vst [vmem:[#allocation3 + $0xd8] sm:$0xff] %v4273
          %4282 = vst [vmem:[#allocation3 + $0xe0] sm:$0xff] %v4274
          %4283 = vst [vmem:[#allocation3 + $0xe8] sm:$0xff] %v4275
          %4284 = vst [vmem:[#allocation3 + $0xf0] sm:$0xff] %v4276
          %4285 = vst [vmem:[#allocation3 + $0xf8] sm:$0xff] %v4277
          %v4286 = vld [vmem:[#allocation3] sm:$0xff]
          %v4287 = vld [vmem:[#allocation3 + $0x8] sm:$0xff]
          %v4288 = vld [vmem:[#allocation3 + $0x10] sm:$0xff]
          %v4289 = vld [vmem:[#allocation3 + $0x18] sm:$0xff]
          %v4290 = vld [vmem:[#allocation3 + $0x20] sm:$0xff]
          %v4291 = vld [vmem:[#allocation3 + $0x28] sm:$0xff]
          %v4292 = vld [vmem:[#allocation3 + $0x30] sm:$0xff]
          %v4293 = vld [vmem:[#allocation3 + $0x38] sm:$0xff]
          %v4294 = vld [vmem:[#allocation3 + $0x40] sm:$0xff]
          %v4295 = vld [vmem:[#allocation3 + $0x48] sm:$0xff]
          %v4296 = vld [vmem:[#allocation3 + $0x50] sm:$0xff]
          %v4297 = vld [vmem:[#allocation3 + $0x58] sm:$0xff]
          %v4298 = vld [vmem:[#allocation3 + $0x60] sm:$0xff]
          %v4299 = vld [vmem:[#allocation3 + $0x68] sm:$0xff]
          %v4300 = vld [vmem:[#allocation3 + $0x70] sm:$0xff]
          %v4301 = vld [vmem:[#allocation3 + $0x78] sm:$0xff]
          %v4302 = vld [vmem:[#allocation3 + $0x80] sm:$0xff]
          %v4303 = vld [vmem:[#allocation3 + $0x88] sm:$0xff]
          %v4304 = vld [vmem:[#allocation3 + $0x90] sm:$0xff]
          %v4305 = vld [vmem:[#allocation3 + $0x98] sm:$0xff]
          %v4306 = vld [vmem:[#allocation3 + $0xa0] sm:$0xff]
          %v4307 = vld [vmem:[#allocation3 + $0xa8] sm:$0xff]
          %v4308 = vld [vmem:[#allocation3 + $0xb0] sm:$0xff]
          %v4309 = vld [vmem:[#allocation3 + $0xb8] sm:$0xff]
          %v4310 = vld [vmem:[#allocation3 + $0xc0] sm:$0xff]
          %v4311 = vld [vmem:[#allocation3 + $0xc8] sm:$0xff]
          %v4312 = vld [vmem:[#allocation3 + $0xd0] sm:$0xff]
          %v4313 = vld [vmem:[#allocation3 + $0xd8] sm:$0xff]
          %v4314 = vld [vmem:[#allocation3 + $0xe0] sm:$0xff]
          %v4315 = vld [vmem:[#allocation3 + $0xe8] sm:$0xff]
          %v4316 = vld [vmem:[#allocation3 + $0xf0] sm:$0xff]
          %v4317 = vld [vmem:[#allocation3 + $0xf8] sm:$0xff]
          %v4318 = vpack.c.bf16 %v4288, %v4286
          %v4319 = vpack.c.bf16 %v4289, %v4287
          %v4320 = vpack.c.bf16 %v4292, %v4290
          %v4321 = vpack.c.bf16 %v4293, %v4291
          %v4322 = vpack.c.bf16 %v4296, %v4294
          %v4323 = vpack.c.bf16 %v4297, %v4295
          %v4324 = vpack.c.bf16 %v4300, %v4298
          %v4325 = vpack.c.bf16 %v4301, %v4299
          %v4326 = vpack.c.bf16 %v4304, %v4302
          %v4327 = vpack.c.bf16 %v4305, %v4303
          %v4328 = vpack.c.bf16 %v4308, %v4306
          %v4329 = vpack.c.bf16 %v4309, %v4307
          %v4330 = vpack.c.bf16 %v4312, %v4310
          %v4331 = vpack.c.bf16 %v4313, %v4311
          %v4332 = vpack.c.bf16 %v4316, %v4314
          %v4333 = vpack.c.bf16 %v4317, %v4315
          %v4334 = vld [vmem:[#allocation23] sm:$0xf]
          %v4335 = vld [vmem:[#allocation23 + $0x4] sm:$0xf]
          %v4336 = vld [vmem:[#allocation23 + $0x8] sm:$0xf]
          %v4337 = vld [vmem:[#allocation23 + $0xc] sm:$0xf]
          %v4338 = vld [vmem:[#allocation23 + $0x10] sm:$0xf]
          %v4339 = vld [vmem:[#allocation23 + $0x14] sm:$0xf]
          %v4340 = vld [vmem:[#allocation23 + $0x18] sm:$0xf]
          %v4341 = vld [vmem:[#allocation23 + $0x1c] sm:$0xf]
          %v4342 = vld [vmem:[#allocation23 + $0x20] sm:$0xf]
          %v4343 = vld [vmem:[#allocation23 + $0x24] sm:$0xf]
          %v4344 = vld [vmem:[#allocation23 + $0x28] sm:$0xf]
          %v4345 = vld [vmem:[#allocation23 + $0x2c] sm:$0xf]
          %v4346 = vld [vmem:[#allocation23 + $0x30] sm:$0xf]
          %v4347 = vld [vmem:[#allocation23 + $0x34] sm:$0xf]
          %v4348 = vld [vmem:[#allocation23 + $0x38] sm:$0xf]
          %v4349 = vld [vmem:[#allocation23 + $0x3c] sm:$0xf]
          %v4350 = vld [vmem:[#allocation23 + $0x40] sm:$0xf]
          %v4351 = vld [vmem:[#allocation23 + $0x44] sm:$0xf]
          %v4352 = vld [vmem:[#allocation23 + $0x48] sm:$0xf]
          %v4353 = vld [vmem:[#allocation23 + $0x4c] sm:$0xf]
          %v4354 = vld [vmem:[#allocation23 + $0x50] sm:$0xf]
          %v4355 = vld [vmem:[#allocation23 + $0x54] sm:$0xf]
          %v4356 = vld [vmem:[#allocation23 + $0x58] sm:$0xf]
          %v4357 = vld [vmem:[#allocation23 + $0x5c] sm:$0xf]
          %v4358 = vld [vmem:[#allocation23 + $0x60] sm:$0xf]
          %v4359 = vld [vmem:[#allocation23 + $0x64] sm:$0xf]
          %v4360 = vld [vmem:[#allocation23 + $0x68] sm:$0xf]
          %v4361 = vld [vmem:[#allocation23 + $0x6c] sm:$0xf]
          %v4362 = vld [vmem:[#allocation23 + $0x70] sm:$0xf]
          %v4363 = vld [vmem:[#allocation23 + $0x74] sm:$0xf]
          %v4364 = vld [vmem:[#allocation23 + $0x78] sm:$0xf]
          %v4365 = vld [vmem:[#allocation23 + $0x7c] sm:$0xf]
          %v4398 = vunpack.c.l.b16 %v4334
          %v4399 = vunpack.c.l.b16 %v4335
          %v4400 = vunpack.c.l.b16 %v4336
          %v4401 = vunpack.c.l.b16 %v4337
          %v4402 = vunpack.c.l.b16 %v4338
          %v4403 = vunpack.c.l.b16 %v4339
          %v4404 = vunpack.c.l.b16 %v4340
          %v4405 = vunpack.c.l.b16 %v4341
          %v4406 = vunpack.c.l.b16 %v4342
          %v4407 = vunpack.c.l.b16 %v4343
          %v4408 = vunpack.c.l.b16 %v4344
          %v4409 = vunpack.c.l.b16 %v4345
          %v4410 = vunpack.c.l.b16 %v4346
          %v4411 = vunpack.c.l.b16 %v4347
          %v4412 = vunpack.c.l.b16 %v4348
          %v4413 = vunpack.c.l.b16 %v4349
          %v4414 = vunpack.c.l.b16 %v4350
          %v4415 = vunpack.c.l.b16 %v4351
          %v4416 = vunpack.c.l.b16 %v4352
          %v4417 = vunpack.c.l.b16 %v4353
          %v4418 = vunpack.c.l.b16 %v4354
          %v4419 = vunpack.c.l.b16 %v4355
          %v4420 = vunpack.c.l.b16 %v4356
          %v4421 = vunpack.c.l.b16 %v4357
          %v4422 = vunpack.c.l.b16 %v4358
          %v4423 = vunpack.c.l.b16 %v4359
          %v4424 = vunpack.c.l.b16 %v4360
          %v4425 = vunpack.c.l.b16 %v4361
          %v4426 = vunpack.c.l.b16 %v4362
          %v4427 = vunpack.c.l.b16 %v4363
          %v4428 = vunpack.c.l.b16 %v4364
          %v4429 = vunpack.c.l.b16 %v4365
          %v4430 = vpack.c.b16 %v4399, %v4398
          %v4431 = vpack.c.b16 %v4401, %v4400
          %v4432 = vpack.c.b16 %v4403, %v4402
          %v4433 = vpack.c.b16 %v4405, %v4404
          %v4434 = vpack.c.b16 %v4407, %v4406
          %v4435 = vpack.c.b16 %v4409, %v4408
          %v4436 = vpack.c.b16 %v4411, %v4410
          %v4437 = vpack.c.b16 %v4413, %v4412
          %v4438 = vpack.c.b16 %v4415, %v4414
          %v4439 = vpack.c.b16 %v4417, %v4416
          %v4440 = vpack.c.b16 %v4419, %v4418
          %v4441 = vpack.c.b16 %v4421, %v4420
          %v4442 = vpack.c.b16 %v4423, %v4422
          %v4443 = vpack.c.b16 %v4425, %v4424
          %v4444 = vpack.c.b16 %v4427, %v4426
          %v4445 = vpack.c.b16 %v4429, %v4428
          %4462 = vmatprep.subr.bf16.mxu0 0
          %4463 = vmatpush1.bf16.msra.mxu0 %v4430
          %4464 = vmatprep.subr.bf16.mxu0 0
          %4465 = vmatpush1.bf16.msra.mxu0 %v4431
          %4466 = vmatprep.subr.bf16.mxu0 0
          %4467 = vmatpush1.bf16.msra.mxu0 %v4432
          %4468 = vmatprep.subr.bf16.mxu0 0
          %4469 = vmatpush1.bf16.msra.mxu0 %v4433
          %4470 = vmatprep.subr.bf16.mxu0 0
          %4471 = vmatpush1.bf16.msra.mxu0 %v4434
          %4472 = vmatprep.subr.bf16.mxu0 0
          %4473 = vmatpush1.bf16.msra.mxu0 %v4435
          %4474 = vmatprep.subr.bf16.mxu0 0
          %4475 = vmatpush1.bf16.msra.mxu0 %v4436
          %4476 = vmatprep.subr.bf16.mxu0 0
          %4477 = vmatpush1.bf16.msra.mxu0 %v4437
          %4478 = vmatprep.subr.bf16.mxu0 0
          %4479 = vmatpush1.bf16.msra.mxu0 %v4438
          %4480 = vmatprep.subr.bf16.mxu0 0
          %4481 = vmatpush1.bf16.msra.mxu0 %v4439
          %4482 = vmatprep.subr.bf16.mxu0 0
          %4483 = vmatpush1.bf16.msra.mxu0 %v4440
          %4484 = vmatprep.subr.bf16.mxu0 0
          %4485 = vmatpush1.bf16.msra.mxu0 %v4441
          %4486 = vmatprep.subr.bf16.mxu0 0
          %4487 = vmatpush1.bf16.msra.mxu0 %v4442
          %4488 = vmatprep.subr.bf16.mxu0 0
          %4489 = vmatpush1.bf16.msra.mxu0 %v4443
          %4490 = vmatprep.subr.bf16.mxu0 0
          %4491 = vmatpush1.bf16.msra.mxu0 %v4444
          %4492 = vmatprep.subr.bf16.mxu0 0
          %4493 = vmatpush1.bf16.msra.mxu0 %v4445
          %4494 = vmatprep.mubr.bf16.mxu0 %v4319
          %4495 = vmatmul.mubr.bf16.gmra.mrb[0].mxu0 %v4318
          %v4496 = vpop.f32.mrb[0].mxu0
          %v4497 = vadd.f32 0.0, %v4496
          %v4498 = vpop.f32.mrb[0].mxu0
          %v4499 = vpop.f32.mrb[0].mxu0
          %v4500 = vadd.f32 0.0, %v4499
          %v4501 = vpop.f32.mrb[0].mxu0
          %4502 = vmatprep.mubr.bf16.mxu0 %v4321
          %4503 = vmatmul.mubr.bf16.gmra.mrb[0].mxu0 %v4320
          %v4504 = vpop.f32.mrb[0].mxu0
          %v4505 = vadd.f32 0.0, %v4504
          %v4506 = vpop.f32.mrb[0].mxu0
          %v4507 = vpop.f32.mrb[0].mxu0
          %v4508 = vadd.f32 0.0, %v4507
          %v4509 = vpop.f32.mrb[0].mxu0
          %4510 = vmatprep.mubr.bf16.mxu0 %v4323
          %4511 = vmatmul.mubr.bf16.gmra.mrb[0].mxu0 %v4322
          %v4512 = vpop.f32.mrb[0].mxu0
          %v4513 = vadd.f32 0.0, %v4512
          %v4514 = vpop.f32.mrb[0].mxu0
          %v4515 = vpop.f32.mrb[0].mxu0
          %v4516 = vadd.f32 0.0, %v4515
          %v4517 = vpop.f32.mrb[0].mxu0
          %4518 = vmatprep.mubr.bf16.mxu0 %v4325
          %4519 = vmatmul.mubr.bf16.gmra.mrb[0].mxu0 %v4324
          %v4520 = vpop.f32.mrb[0].mxu0
          %v4521 = vadd.f32 0.0, %v4520
          %v4522 = vpop.f32.mrb[0].mxu0
          %v4523 = vpop.f32.mrb[0].mxu0
          %v4524 = vadd.f32 0.0, %v4523
          %v4525 = vpop.f32.mrb[0].mxu0
          %4526 = vmatprep.mubr.bf16.mxu0 %v4327
          %4527 = vmatmul.mubr.bf16.gmra.mrb[0].mxu0 %v4326
          %v4528 = vpop.f32.mrb[0].mxu0
          %v4529 = vadd.f32 0.0, %v4528
          %v4530 = vpop.f32.mrb[0].mxu0
          %v4531 = vpop.f32.mrb[0].mxu0
          %v4532 = vadd.f32 0.0, %v4531
          %v4533 = vpop.f32.mrb[0].mxu0
          %4534 = vmatprep.mubr.bf16.mxu0 %v4329
          %4535 = vmatmul.mubr.bf16.gmra.mrb[0].mxu0 %v4328
          %v4536 = vpop.f32.mrb[0].mxu0
          %v4537 = vadd.f32 0.0, %v4536
          %v4538 = vpop.f32.mrb[0].mxu0
          %v4539 = vpop.f32.mrb[0].mxu0
          %v4540 = vadd.f32 0.0, %v4539
          %v4541 = vpop.f32.mrb[0].mxu0
          %4542 = vmatprep.mubr.bf16.mxu0 %v4331
          %4543 = vmatmul.mubr.bf16.gmra.mrb[0].mxu0 %v4330
          %v4544 = vpop.f32.mrb[0].mxu0
          %v4545 = vadd.f32 0.0, %v4544
          %v4546 = vpop.f32.mrb[0].mxu0
          %v4547 = vpop.f32.mrb[0].mxu0
          %v4548 = vadd.f32 0.0, %v4547
          %v4549 = vpop.f32.mrb[0].mxu0
          %4550 = vmatprep.mubr.bf16.mxu0 %v4333
          %4551 = vmatmul.mubr.bf16.gmra.mrb[0].mxu0 %v4332
          %v4552 = vpop.f32.mrb[0].mxu0
          %v4553 = vadd.f32 0.0, %v4552
          %v4554 = vpop.f32.mrb[0].mxu0
          %v4555 = vpop.f32.mrb[0].mxu0
          %v4556 = vadd.f32 0.0, %v4555
          %v4557 = vpop.f32.mrb[0].mxu0
          %4558 = vdwg.mxu0
          %v4559 = vld [vmem:[#allocation24] sm:$0x1]
          %v4561 = vlaneseq
          %v4562 = vshrl.u32 %v4561, 7
          %v4563 = vsub.s32 0, %v4562
          %v4564 = vrot.slane %v4559, %v4563
          %v4566 = vmul.f32 %v4497, %v4564
          %v4567 = vmul.f32 %v4500, %v4564
          %v4568 = vmul.f32 %v4505, %v4564
          %v4569 = vmul.f32 %v4508, %v4564
          %v4570 = vmul.f32 %v4513, %v4564
          %v4571 = vmul.f32 %v4516, %v4564
          %v4572 = vmul.f32 %v4521, %v4564
          %v4573 = vmul.f32 %v4524, %v4564
          %v4574 = vmul.f32 %v4529, %v4564
          %v4575 = vmul.f32 %v4532, %v4564
          %v4576 = vmul.f32 %v4537, %v4564
          %v4577 = vmul.f32 %v4540, %v4564
          %v4578 = vmul.f32 %v4545, %v4564
          %v4579 = vmul.f32 %v4548, %v4564
          %v4580 = vmul.f32 %v4553, %v4564
          %v4581 = vmul.f32 %v4556, %v4564
          %v4582 = vld [vmem:[#allocation26] sm:$0x1]
          %v4584 = vlaneseq
          %v4585 = vshrl.u32 %v4584, 7
          %v4586 = vsub.s32 0, %v4585
          %v4587 = vrot.slane %v4582, %v4586
          %v4589 = vadd.f32 %v4566, %v4587
          %v4590 = vadd.f32 %v4567, %v4587
          %v4591 = vadd.f32 %v4568, %v4587
          %v4592 = vadd.f32 %v4569, %v4587
          %v4593 = vadd.f32 %v4570, %v4587
          %v4594 = vadd.f32 %v4571, %v4587
          %v4595 = vadd.f32 %v4572, %v4587
          %v4596 = vadd.f32 %v4573, %v4587
          %v4597 = vadd.f32 %v4574, %v4587
          %v4598 = vadd.f32 %v4575, %v4587
          %v4599 = vadd.f32 %v4576, %v4587
          %v4600 = vadd.f32 %v4577, %v4587
          %v4601 = vadd.f32 %v4578, %v4587
          %v4602 = vadd.f32 %v4579, %v4587
          %v4603 = vadd.f32 %v4580, %v4587
          %v4604 = vadd.f32 %v4581, %v4587
          %v4605 = vmax.f32 %v4589, 0.0
          %v4606 = vmax.f32 %v4590, 0.0
          %v4607 = vmax.f32 %v4591, 0.0
          %v4608 = vmax.f32 %v4592, 0.0
          %v4609 = vmax.f32 %v4593, 0.0
          %v4610 = vmax.f32 %v4594, 0.0
          %v4611 = vmax.f32 %v4595, 0.0
          %v4612 = vmax.f32 %v4596, 0.0
          %v4613 = vmax.f32 %v4597, 0.0
          %v4614 = vmax.f32 %v4598, 0.0
          %v4615 = vmax.f32 %v4599, 0.0
          %v4616 = vmax.f32 %v4600, 0.0
          %v4617 = vmax.f32 %v4601, 0.0
          %v4618 = vmax.f32 %v4602, 0.0
          %v4619 = vmax.f32 %v4603, 0.0
          %v4620 = vmax.f32 %v4604, 0.0
          %v4621 = vpack.c.bf16 %v4606, %v4605
          %v4622 = vpack.c.bf16 %v4608, %v4607
          %v4623 = vpack.c.bf16 %v4610, %v4609
          %v4624 = vpack.c.bf16 %v4612, %v4611
          %v4625 = vpack.c.bf16 %v4614, %v4613
          %v4626 = vpack.c.bf16 %v4616, %v4615
          %v4627 = vpack.c.bf16 %v4618, %v4617
          %v4628 = vpack.c.bf16 %v4620, %v4619
          %v4629 = vld [vmem:[#allocation27] sm:$0xf]
          %v4630 = vld [vmem:[#allocation27 + $0x4] sm:$0xf]
          %v4631 = vld [vmem:[#allocation27 + $0x8] sm:$0xf]
          %v4632 = vld [vmem:[#allocation27 + $0xc] sm:$0xf]
          %v4633 = vld [vmem:[#allocation27 + $0x10] sm:$0xf]
          %v4634 = vld [vmem:[#allocation27 + $0x14] sm:$0xf]
          %v4635 = vld [vmem:[#allocation27 + $0x18] sm:$0xf]
          %v4636 = vld [vmem:[#allocation27 + $0x1c] sm:$0xf]
          %v4637 = vld [vmem:[#allocation27 + $0x20] sm:$0xf]
          %v4638 = vld [vmem:[#allocation27 + $0x24] sm:$0xf]
          %v4639 = vld [vmem:[#allocation27 + $0x28] sm:$0xf]
          %v4640 = vld [vmem:[#allocation27 + $0x2c] sm:$0xf]
          %v4641 = vld [vmem:[#allocation27 + $0x30] sm:$0xf]
          %v4642 = vld [vmem:[#allocation27 + $0x34] sm:$0xf]
          %v4643 = vld [vmem:[#allocation27 + $0x38] sm:$0xf]
          %v4644 = vld [vmem:[#allocation27 + $0x3c] sm:$0xf]
          %v4645 = vld [vmem:[#allocation29] sm:$0x1]
          %v4647 = vlaneseq
          %v4648 = vshrl.u32 %v4647, 7
          %v4649 = vsub.s32 0, %v4648
          %v4650 = vrot.slane %v4645, %v4649
          %v4668 = vunpack.c.l.b16 %v4629
          %v4669 = vunpack.c.l.b16 %v4630
          %v4670 = vunpack.c.l.b16 %v4631
          %v4671 = vunpack.c.l.b16 %v4632
          %v4672 = vunpack.c.l.b16 %v4633
          %v4673 = vunpack.c.l.b16 %v4634
          %v4674 = vunpack.c.l.b16 %v4635
          %v4675 = vunpack.c.l.b16 %v4636
          %v4676 = vunpack.c.l.b16 %v4637
          %v4677 = vunpack.c.l.b16 %v4638
          %v4678 = vunpack.c.l.b16 %v4639
          %v4679 = vunpack.c.l.b16 %v4640
          %v4680 = vunpack.c.l.b16 %v4641
          %v4681 = vunpack.c.l.b16 %v4642
          %v4682 = vunpack.c.l.b16 %v4643
          %v4683 = vunpack.c.l.b16 %v4644
          %v4684 = vpack.c.b16 %v4669, %v4668
          %v4685 = vpack.c.b16 %v4671, %v4670
          %v4686 = vpack.c.b16 %v4673, %v4672
          %v4687 = vpack.c.b16 %v4675, %v4674
          %v4688 = vpack.c.b16 %v4677, %v4676
          %v4689 = vpack.c.b16 %v4679, %v4678
          %v4690 = vpack.c.b16 %v4681, %v4680
          %v4691 = vpack.c.b16 %v4683, %v4682
          %4700 = vmatprep.subr.bf16.mxu0 0
          %4701 = vmatpush1.bf16.msra.mxu0 %v4684
          %4702 = vmatprep.subr.bf16.mxu0 0
          %4703 = vmatpush1.bf16.msra.mxu0 %v4685
          %4704 = vmatprep.subr.bf16.mxu0 0
          %4705 = vmatpush1.bf16.msra.mxu0 %v4686
          %4706 = vmatprep.subr.bf16.mxu0 0
          %4707 = vmatpush1.bf16.msra.mxu0 %v4687
          %4708 = vmatprep.subr.bf16.mxu0 0
          %4709 = vmatpush1.bf16.msra.mxu0 %v4688
          %4710 = vmatprep.subr.bf16.mxu0 0
          %4711 = vmatpush1.bf16.msra.mxu0 %v4689
          %4712 = vmatprep.subr.bf16.mxu0 0
          %4713 = vmatpush1.bf16.msra.mxu0 %v4690
          %4714 = vmatprep.subr.bf16.mxu0 0
          %4715 = vmatpush1.bf16.msra.mxu0 %v4691
          %4716 = vmatprep.subr.bf16.mxu0 0
          %4717 = vmatpush1.bf16.msra.mxu0 0
          %4718 = vmatprep.subr.bf16.mxu0 0
          %4719 = vmatpush1.bf16.msra.mxu0 0
          %4720 = vmatprep.subr.bf16.mxu0 0
          %4721 = vmatpush1.bf16.msra.mxu0 0
          %4722 = vmatprep.subr.bf16.mxu0 0
          %4723 = vmatpush1.bf16.msra.mxu0 0
          %4724 = vmatprep.subr.bf16.mxu0 0
          %4725 = vmatpush1.bf16.msra.mxu0 0
          %4726 = vmatprep.subr.bf16.mxu0 0
          %4727 = vmatpush1.bf16.msra.mxu0 0
          %4728 = vmatprep.subr.bf16.mxu0 0
          %4729 = vmatpush1.bf16.msra.mxu0 0
          %4730 = vmatprep.subr.bf16.mxu0 0
          %4731 = vmatpush1.bf16.msra.mxu0 0
          %4732 = vmatprep.mubr.bf16.mxu0 0
          %4733 = vmatmul.mubr.bf16.gmra.mrb[0].mxu0 %v4621
          %v4734 = vpop.f32.mrb[0].mxu0
          %v4735 = vadd.f32 %v4650, %v4734
          %v4736 = vpop.f32.mrb[0].mxu0
          %v4737 = vpop.f32.mrb[0].mxu0
          %v4738 = vadd.f32 %v4650, %v4737
          %v4739 = vpop.f32.mrb[0].mxu0
          %4740 = vmatprep.mubr.bf16.mxu0 0
          %4741 = vmatmul.mubr.bf16.gmra.mrb[0].mxu0 %v4622
          %v4742 = vpop.f32.mrb[0].mxu0
          %v4743 = vadd.f32 %v4650, %v4742
          %v4744 = vpop.f32.mrb[0].mxu0
          %v4745 = vpop.f32.mrb[0].mxu0
          %v4746 = vadd.f32 %v4650, %v4745
          %v4747 = vpop.f32.mrb[0].mxu0
          %4748 = vmatprep.mubr.bf16.mxu0 0
          %4749 = vmatmul.mubr.bf16.gmra.mrb[0].mxu0 %v4623
          %v4750 = vpop.f32.mrb[0].mxu0
          %v4751 = vadd.f32 %v4650, %v4750
          %v4752 = vpop.f32.mrb[0].mxu0
          %v4753 = vpop.f32.mrb[0].mxu0
          %v4754 = vadd.f32 %v4650, %v4753
          %v4755 = vpop.f32.mrb[0].mxu0
          %4756 = vmatprep.mubr.bf16.mxu0 0
          %4757 = vmatmul.mubr.bf16.gmra.mrb[0].mxu0 %v4624
          %v4758 = vpop.f32.mrb[0].mxu0
          %v4759 = vadd.f32 %v4650, %v4758
          %v4760 = vpop.f32.mrb[0].mxu0
          %v4761 = vpop.f32.mrb[0].mxu0
          %v4762 = vadd.f32 %v4650, %v4761
          %v4763 = vpop.f32.mrb[0].mxu0
          %4764 = vmatprep.mubr.bf16.mxu0 0
          %4765 = vmatmul.mubr.bf16.gmra.mrb[0].mxu0 %v4625
          %v4766 = vpop.f32.mrb[0].mxu0
          %v4767 = vadd.f32 %v4650, %v4766
          %v4768 = vpop.f32.mrb[0].mxu0
          %v4769 = vpop.f32.mrb[0].mxu0
          %v4770 = vadd.f32 %v4650, %v4769
          %v4771 = vpop.f32.mrb[0].mxu0
          %4772 = vmatprep.mubr.bf16.mxu0 0
          %4773 = vmatmul.mubr.bf16.gmra.mrb[0].mxu0 %v4626
          %v4774 = vpop.f32.mrb[0].mxu0
          %v4775 = vadd.f32 %v4650, %v4774
          %v4776 = vpop.f32.mrb[0].mxu0
          %v4777 = vpop.f32.mrb[0].mxu0
          %v4778 = vadd.f32 %v4650, %v4777
          %v4779 = vpop.f32.mrb[0].mxu0
          %4780 = vmatprep.mubr.bf16.mxu0 0
          %4781 = vmatmul.mubr.bf16.gmra.mrb[0].mxu0 %v4627
          %v4782 = vpop.f32.mrb[0].mxu0
          %v4783 = vadd.f32 %v4650, %v4782
          %v4784 = vpop.f32.mrb[0].mxu0
          %v4785 = vpop.f32.mrb[0].mxu0
          %v4786 = vadd.f32 %v4650, %v4785
          %v4787 = vpop.f32.mrb[0].mxu0
          %4788 = vmatprep.mubr.bf16.mxu0 0
          %4789 = vmatmul.mubr.bf16.gmra.mrb[0].mxu0 %v4628
          %v4790 = vpop.f32.mrb[0].mxu0
          %v4791 = vadd.f32 %v4650, %v4790
          %v4792 = vpop.f32.mrb[0].mxu0
          %v4793 = vpop.f32.mrb[0].mxu0
          %v4794 = vadd.f32 %v4650, %v4793
          %v4795 = vpop.f32.mrb[0].mxu0
          %4796 = vdwg.mxu0
          %v4797 = vpack.c.bf16 %v4738, %v4735
          %v4798 = vpack.c.bf16 %v4746, %v4743
          %v4799 = vpack.c.bf16 %v4754, %v4751
          %v4800 = vpack.c.bf16 %v4762, %v4759
          %v4801 = vpack.c.bf16 %v4770, %v4767
          %v4802 = vpack.c.bf16 %v4778, %v4775
          %v4803 = vpack.c.bf16 %v4786, %v4783
          %v4804 = vpack.c.bf16 %v4794, %v4791
          %v4805 = vld [vmem:[#allocation30] sm:$0xff]
          %v4806 = vld [vmem:[#allocation30 + $0x8] sm:$0xff]
          %v4807 = vld [vmem:[#allocation30 + $0x10] sm:$0xff]
          %v4808 = vld [vmem:[#allocation30 + $0x18] sm:$0xff]
          %v4809 = vld [vmem:[#allocation30 + $0x20] sm:$0xff]
          %v4810 = vld [vmem:[#allocation30 + $0x28] sm:$0xff]
          %v4811 = vld [vmem:[#allocation30 + $0x30] sm:$0xff]
          %v4812 = vld [vmem:[#allocation30 + $0x38] sm:$0xff]
          %v4813 = vld [vmem:[#allocation30 + $0x40] sm:$0xff]
          %v4814 = vld [vmem:[#allocation30 + $0x48] sm:$0xff]
          %v4815 = vld [vmem:[#allocation30 + $0x50] sm:$0xff]
          %v4816 = vld [vmem:[#allocation30 + $0x58] sm:$0xff]
          %v4817 = vld [vmem:[#allocation30 + $0x60] sm:$0xff]
          %v4818 = vld [vmem:[#allocation30 + $0x68] sm:$0xff]
          %v4819 = vld [vmem:[#allocation30 + $0x70] sm:$0xff]
          %v4820 = vld [vmem:[#allocation30 + $0x78] sm:$0xff]
          %v4837 = vunpack.c.l.b16 %v4805
          %v4838 = vunpack.c.h.b16 %v4805
          %v4839 = vunpack.c.l.b16 %v4806
          %v4840 = vunpack.c.h.b16 %v4806
          %v4841 = vunpack.c.l.b16 %v4807
          %v4842 = vunpack.c.h.b16 %v4807
          %v4843 = vunpack.c.l.b16 %v4808
          %v4844 = vunpack.c.h.b16 %v4808
          %v4845 = vunpack.c.l.b16 %v4809
          %v4846 = vunpack.c.h.b16 %v4809
          %v4847 = vunpack.c.l.b16 %v4810
          %v4848 = vunpack.c.h.b16 %v4810
          %v4849 = vunpack.c.l.b16 %v4811
          %v4850 = vunpack.c.h.b16 %v4811
          %v4851 = vunpack.c.l.b16 %v4812
          %v4852 = vunpack.c.h.b16 %v4812
          %v4853 = vunpack.c.l.b16 %v4813
          %v4854 = vunpack.c.h.b16 %v4813
          %v4855 = vunpack.c.l.b16 %v4814
          %v4856 = vunpack.c.h.b16 %v4814
          %v4857 = vunpack.c.l.b16 %v4815
          %v4858 = vunpack.c.h.b16 %v4815
          %v4859 = vunpack.c.l.b16 %v4816
          %v4860 = vunpack.c.h.b16 %v4816
          %v4861 = vunpack.c.l.b16 %v4817
          %v4862 = vunpack.c.h.b16 %v4817
          %v4863 = vunpack.c.l.b16 %v4818
          %v4864 = vunpack.c.h.b16 %v4818
          %v4865 = vunpack.c.l.b16 %v4819
          %v4866 = vunpack.c.h.b16 %v4819
          %v4867 = vunpack.c.l.b16 %v4820
          %v4868 = vunpack.c.h.b16 %v4820
          %v4869 = vpack.c.b16 %v4839, %v4837
          %v4870 = vpack.c.b16 %v4840, %v4838
          %v4871 = vpack.c.b16 %v4843, %v4841
          %v4872 = vpack.c.b16 %v4844, %v4842
          %v4873 = vpack.c.b16 %v4847, %v4845
          %v4874 = vpack.c.b16 %v4848, %v4846
          %v4875 = vpack.c.b16 %v4851, %v4849
          %v4876 = vpack.c.b16 %v4852, %v4850
          %v4877 = vpack.c.b16 %v4855, %v4853
          %v4878 = vpack.c.b16 %v4856, %v4854
          %v4879 = vpack.c.b16 %v4859, %v4857
          %v4880 = vpack.c.b16 %v4860, %v4858
          %v4881 = vpack.c.b16 %v4863, %v4861
          %v4882 = vpack.c.b16 %v4864, %v4862
          %v4883 = vpack.c.b16 %v4867, %v4865
          %v4884 = vpack.c.b16 %v4868, %v4866
          %4901 = vmatprep.subr.bf16.mxu0 %v4870
          %4902 = vmatpush1.bf16.msra.mxu0 %v4869
          %4903 = vmatprep.subr.bf16.mxu0 %v4872
          %4904 = vmatpush1.bf16.msra.mxu0 %v4871
          %4905 = vmatprep.subr.bf16.mxu0 %v4874
          %4906 = vmatpush1.bf16.msra.mxu0 %v4873
          %4907 = vmatprep.subr.bf16.mxu0 %v4876
          %4908 = vmatpush1.bf16.msra.mxu0 %v4875
          %4909 = vmatprep.subr.bf16.mxu0 %v4878
          %4910 = vmatpush1.bf16.msra.mxu0 %v4877
          %4911 = vmatprep.subr.bf16.mxu0 %v4880
          %4912 = vmatpush1.bf16.msra.mxu0 %v4879
          %4913 = vmatprep.subr.bf16.mxu0 %v4882
          %4914 = vmatpush1.bf16.msra.mxu0 %v4881
          %4915 = vmatprep.subr.bf16.mxu0 %v4884
          %4916 = vmatpush1.bf16.msra.mxu0 %v4883
          %4917 = vmatprep.subr.bf16.mxu0 0
          %4918 = vmatpush1.bf16.msra.mxu0 0
          %4919 = vmatprep.subr.bf16.mxu0 0
          %4920 = vmatpush1.bf16.msra.mxu0 0
          %4921 = vmatprep.subr.bf16.mxu0 0
          %4922 = vmatpush1.bf16.msra.mxu0 0
          %4923 = vmatprep.subr.bf16.mxu0 0
          %4924 = vmatpush1.bf16.msra.mxu0 0
          %4925 = vmatprep.subr.bf16.mxu0 0
          %4926 = vmatpush1.bf16.msra.mxu0 0
          %4927 = vmatprep.subr.bf16.mxu0 0
          %4928 = vmatpush1.bf16.msra.mxu0 0
          %4929 = vmatprep.subr.bf16.mxu0 0
          %4930 = vmatpush1.bf16.msra.mxu0 0
          %4931 = vmatprep.subr.bf16.mxu0 0
          %4932 = vmatpush1.bf16.msra.mxu0 0
          %4933 = vmatprep.mubr.bf16.mxu0 0
          %4934 = vmatmul.mubr.bf16.gmra.mrb[0].mxu0 %v4797
          %v4935 = vpop.f32.mrb[0].mxu0
          %v4936 = vadd.f32 0.0, %v4935
          %v4937 = vpop.f32.mrb[0].mxu0
          %v4938 = vadd.f32 0.0, %v4937
          %v4939 = vpop.f32.mrb[0].mxu0
          %v4940 = vadd.f32 0.0, %v4939
          %v4941 = vpop.f32.mrb[0].mxu0
          %v4942 = vadd.f32 0.0, %v4941
          %4943 = vmatprep.mubr.bf16.mxu0 0
          %4944 = vmatmul.mubr.bf16.gmra.mrb[0].mxu0 %v4798
          %v4945 = vpop.f32.mrb[0].mxu0
          %v4946 = vadd.f32 0.0, %v4945
          %v4947 = vpop.f32.mrb[0].mxu0
          %v4948 = vadd.f32 0.0, %v4947
          %v4949 = vpop.f32.mrb[0].mxu0
          %v4950 = vadd.f32 0.0, %v4949
          %v4951 = vpop.f32.mrb[0].mxu0
          %v4952 = vadd.f32 0.0, %v4951
          %4953 = vmatprep.mubr.bf16.mxu0 0
          %4954 = vmatmul.mubr.bf16.gmra.mrb[0].mxu0 %v4799
          %v4955 = vpop.f32.mrb[0].mxu0
          %v4956 = vadd.f32 0.0, %v4955
          %v4957 = vpop.f32.mrb[0].mxu0
          %v4958 = vadd.f32 0.0, %v4957
          %v4959 = vpop.f32.mrb[0].mxu0
          %v4960 = vadd.f32 0.0, %v4959
          %v4961 = vpop.f32.mrb[0].mxu0
          %v4962 = vadd.f32 0.0, %v4961
          %4963 = vmatprep.mubr.bf16.mxu0 0
          %4964 = vmatmul.mubr.bf16.gmra.mrb[0].mxu0 %v4800
          %v4965 = vpop.f32.mrb[0].mxu0
          %v4966 = vadd.f32 0.0, %v4965
          %v4967 = vpop.f32.mrb[0].mxu0
          %v4968 = vadd.f32 0.0, %v4967
          %v4969 = vpop.f32.mrb[0].mxu0
          %v4970 = vadd.f32 0.0, %v4969
          %v4971 = vpop.f32.mrb[0].mxu0
          %v4972 = vadd.f32 0.0, %v4971
          %4973 = vmatprep.mubr.bf16.mxu0 0
          %4974 = vmatmul.mubr.bf16.gmra.mrb[0].mxu0 %v4801
          %v4975 = vpop.f32.mrb[0].mxu0
          %v4976 = vadd.f32 0.0, %v4975
          %v4977 = vpop.f32.mrb[0].mxu0
          %v4978 = vadd.f32 0.0, %v4977
          %v4979 = vpop.f32.mrb[0].mxu0
          %v4980 = vadd.f32 0.0, %v4979
          %v4981 = vpop.f32.mrb[0].mxu0
          %v4982 = vadd.f32 0.0, %v4981
          %4983 = vmatprep.mubr.bf16.mxu0 0
          %4984 = vmatmul.mubr.bf16.gmra.mrb[0].mxu0 %v4802
          %v4985 = vpop.f32.mrb[0].mxu0
          %v4986 = vadd.f32 0.0, %v4985
          %v4987 = vpop.f32.mrb[0].mxu0
          %v4988 = vadd.f32 0.0, %v4987
          %v4989 = vpop.f32.mrb[0].mxu0
          %v4990 = vadd.f32 0.0, %v4989
          %v4991 = vpop.f32.mrb[0].mxu0
          %v4992 = vadd.f32 0.0, %v4991
          %4993 = vmatprep.mubr.bf16.mxu0 0
          %4994 = vmatmul.mubr.bf16.gmra.mrb[0].mxu0 %v4803
          %v4995 = vpop.f32.mrb[0].mxu0
          %v4996 = vadd.f32 0.0, %v4995
          %v4997 = vpop.f32.mrb[0].mxu0
          %v4998 = vadd.f32 0.0, %v4997
          %v4999 = vpop.f32.mrb[0].mxu0
          %v5000 = vadd.f32 0.0, %v4999
          %v5001 = vpop.f32.mrb[0].mxu0
          %v5002 = vadd.f32 0.0, %v5001
          %5003 = vmatprep.mubr.bf16.mxu0 0
          %5004 = vmatmul.mubr.bf16.gmra.mrb[0].mxu0 %v4804
          %v5005 = vpop.f32.mrb[0].mxu0
          %v5006 = vadd.f32 0.0, %v5005
          %v5007 = vpop.f32.mrb[0].mxu0
          %v5008 = vadd.f32 0.0, %v5007
          %v5009 = vpop.f32.mrb[0].mxu0
          %v5010 = vadd.f32 0.0, %v5009
          %v5011 = vpop.f32.mrb[0].mxu0
          %v5012 = vadd.f32 0.0, %v5011
          %5013 = vdwg.mxu0
          %v5014 = vld [vmem:[#allocation33] sm:$0x3]
          %v5015 = vld [vmem:[#allocation35] sm:$0x3]
          %v5016 = vadd.f32 %v4936, %v4101
          %v5017 = vadd.f32 %v4938, %v4103
          %v5018 = vadd.f32 %v4940, %v4105
          %v5019 = vadd.f32 %v4942, %v4107
          %v5020 = vadd.f32 %v4946, %v4111
          %v5021 = vadd.f32 %v4948, %v4113
          %v5022 = vadd.f32 %v4950, %v4115
          %v5023 = vadd.f32 %v4952, %v4117
          %v5025 = vlaneseq
          %v5026 = vshrl.u32 %v5025, 7
          %v5027 = vsub.s32 0, %v5026
          %v5028 = vrot.slane %v5014, %v5027
          %v5029 = vlaneseq
          %v5030 = vshrl.u32 %v5029, 7
          %v5031 = vsub.s32 1, %v5030
          %v5032 = vrot.slane %v5014, %v5031
          %v5035 = vmul.f32 %v5016, %v5028
          %v5036 = vmul.f32 %v5017, %v5032
          %v5037 = vmul.f32 %v5018, %v5028
          %v5038 = vmul.f32 %v5019, %v5032
          %v5039 = vmul.f32 %v5020, %v5028
          %v5040 = vmul.f32 %v5021, %v5032
          %v5041 = vmul.f32 %v5022, %v5028
          %v5042 = vmul.f32 %v5023, %v5032
          %v5044 = vlaneseq
          %v5045 = vshrl.u32 %v5044, 7
          %v5046 = vsub.s32 0, %v5045
          %v5047 = vrot.slane %v5015, %v5046
          %v5048 = vlaneseq
          %v5049 = vshrl.u32 %v5048, 7
          %v5050 = vsub.s32 1, %v5049
          %v5051 = vrot.slane %v5015, %v5050
          %v5054 = vadd.f32 %v5035, %v5047
          %v5055 = vadd.f32 %v5036, %v5051
          %v5056 = vadd.f32 %v5037, %v5047
          %v5057 = vadd.f32 %v5038, %v5051
          %v5058 = vadd.f32 %v5039, %v5047
          %v5059 = vadd.f32 %v5040, %v5051
          %v5060 = vadd.f32 %v5041, %v5047
          %v5061 = vadd.f32 %v5042, %v5051
          %v5062 = vmax.f32 %v5054, 0.0
          %v5063 = vmax.f32 %v5055, 0.0
          %v5064 = vmax.f32 %v5056, 0.0
          %v5065 = vmax.f32 %v5057, 0.0
          %v5066 = vmax.f32 %v5058, 0.0
          %v5067 = vmax.f32 %v5059, 0.0
          %v5068 = vmax.f32 %v5060, 0.0
          %v5069 = vmax.f32 %v5061, 0.0
          %5070 = vst [vmem:[#allocation3] sm:$0xff] %v5062
          %5071 = vst [vmem:[#allocation3 + $0x8] sm:$0xff] %v5063
          %5072 = vst [vmem:[#allocation3 + $0x10] sm:$0xff] %v5064
          %5073 = vst [vmem:[#allocation3 + $0x18] sm:$0xff] %v5065
          %5074 = vst [vmem:[#allocation3 + $0x20] sm:$0xff] %v5066
          %5075 = vst [vmem:[#allocation3 + $0x28] sm:$0xff] %v5067
          %5076 = vst [vmem:[#allocation3 + $0x30] sm:$0xff] %v5068
          %5077 = vst [vmem:[#allocation3 + $0x38] sm:$0xff] %v5069
          %v5078 = vadd.f32 %v4956, %v4101
          %v5079 = vadd.f32 %v4958, %v4103
          %v5080 = vadd.f32 %v4960, %v4105
          %v5081 = vadd.f32 %v4962, %v4107
          %v5082 = vadd.f32 %v4966, %v4111
          %v5083 = vadd.f32 %v4968, %v4113
          %v5084 = vadd.f32 %v4970, %v4115
          %v5085 = vadd.f32 %v4972, %v4117
          %v5086 = vmul.f32 %v5078, %v5028
          %v5087 = vmul.f32 %v5079, %v5032
          %v5088 = vmul.f32 %v5080, %v5028
          %v5089 = vmul.f32 %v5081, %v5032
          %v5090 = vmul.f32 %v5082, %v5028
          %v5091 = vmul.f32 %v5083, %v5032
          %v5092 = vmul.f32 %v5084, %v5028
          %v5093 = vmul.f32 %v5085, %v5032
          %v5094 = vadd.f32 %v5086, %v5047
          %v5095 = vadd.f32 %v5087, %v5051
          %v5096 = vadd.f32 %v5088, %v5047
          %v5097 = vadd.f32 %v5089, %v5051
          %v5098 = vadd.f32 %v5090, %v5047
          %v5099 = vadd.f32 %v5091, %v5051
          %v5100 = vadd.f32 %v5092, %v5047
          %v5101 = vadd.f32 %v5093, %v5051
          %v5102 = vmax.f32 %v5094, 0.0
          %v5103 = vmax.f32 %v5095, 0.0
          %v5104 = vmax.f32 %v5096, 0.0
          %v5105 = vmax.f32 %v5097, 0.0
          %v5106 = vmax.f32 %v5098, 0.0
          %v5107 = vmax.f32 %v5099, 0.0
          %v5108 = vmax.f32 %v5100, 0.0
          %v5109 = vmax.f32 %v5101, 0.0
          %5110 = vst [vmem:[#allocation3 + $0x40] sm:$0xff] %v5102
          %5111 = vst [vmem:[#allocation3 + $0x48] sm:$0xff] %v5103
          %5112 = vst [vmem:[#allocation3 + $0x50] sm:$0xff] %v5104
          %5113 = vst [vmem:[#allocation3 + $0x58] sm:$0xff] %v5105
          %5114 = vst [vmem:[#allocation3 + $0x60] sm:$0xff] %v5106
          %5115 = vst [vmem:[#allocation3 + $0x68] sm:$0xff] %v5107
          %5116 = vst [vmem:[#allocation3 + $0x70] sm:$0xff] %v5108
          %5117 = vst [vmem:[#allocation3 + $0x78] sm:$0xff] %v5109
          %v5118 = vadd.f32 %v4976, %v4101
          %v5119 = vadd.f32 %v4978, %v4103
          %v5120 = vadd.f32 %v4980, %v4105
          %v5121 = vadd.f32 %v4982, %v4107
          %v5122 = vadd.f32 %v4986, %v4111
          %v5123 = vadd.f32 %v4988, %v4113
          %v5124 = vadd.f32 %v4990, %v4115
          %v5125 = vadd.f32 %v4992, %v4117
          %v5126 = vmul.f32 %v5118, %v5028
          %v5127 = vmul.f32 %v5119, %v5032
          %v5128 = vmul.f32 %v5120, %v5028
          %v5129 = vmul.f32 %v5121, %v5032
          %v5130 = vmul.f32 %v5122, %v5028
          %v5131 = vmul.f32 %v5123, %v5032
          %v5132 = vmul.f32 %v5124, %v5028
          %v5133 = vmul.f32 %v5125, %v5032
          %v5134 = vadd.f32 %v5126, %v5047
          %v5135 = vadd.f32 %v5127, %v5051
          %v5136 = vadd.f32 %v5128, %v5047
          %v5137 = vadd.f32 %v5129, %v5051
          %v5138 = vadd.f32 %v5130, %v5047
          %v5139 = vadd.f32 %v5131, %v5051
          %v5140 = vadd.f32 %v5132, %v5047
          %v5141 = vadd.f32 %v5133, %v5051
          %v5142 = vmax.f32 %v5134, 0.0
          %v5143 = vmax.f32 %v5135, 0.0
          %v5144 = vmax.f32 %v5136, 0.0
          %v5145 = vmax.f32 %v5137, 0.0
          %v5146 = vmax.f32 %v5138, 0.0
          %v5147 = vmax.f32 %v5139, 0.0
          %v5148 = vmax.f32 %v5140, 0.0
          %v5149 = vmax.f32 %v5141, 0.0
          %5150 = vst [vmem:[#allocation3 + $0x80] sm:$0xff] %v5142
          %5151 = vst [vmem:[#allocation3 + $0x88] sm:$0xff] %v5143
          %5152 = vst [vmem:[#allocation3 + $0x90] sm:$0xff] %v5144
          %5153 = vst [vmem:[#allocation3 + $0x98] sm:$0xff] %v5145
          %5154 = vst [vmem:[#allocation3 + $0xa0] sm:$0xff] %v5146
          %5155 = vst [vmem:[#allocation3 + $0xa8] sm:$0xff] %v5147
          %5156 = vst [vmem:[#allocation3 + $0xb0] sm:$0xff] %v5148
          %5157 = vst [vmem:[#allocation3 + $0xb8] sm:$0xff] %v5149
          %v5158 = vadd.f32 %v4996, %v4101
          %v5159 = vadd.f32 %v4998, %v4103
          %v5160 = vadd.f32 %v5000, %v4105
          %v5161 = vadd.f32 %v5002, %v4107
          %v5162 = vadd.f32 %v5006, %v4111
          %v5163 = vadd.f32 %v5008, %v4113
          %v5164 = vadd.f32 %v5010, %v4115
          %v5165 = vadd.f32 %v5012, %v4117
          %v5166 = vmul.f32 %v5158, %v5028
          %v5167 = vmul.f32 %v5159, %v5032
          %v5168 = vmul.f32 %v5160, %v5028
          %v5169 = vmul.f32 %v5161, %v5032
          %v5170 = vmul.f32 %v5162, %v5028
          %v5171 = vmul.f32 %v5163, %v5032
          %v5172 = vmul.f32 %v5164, %v5028
          %v5173 = vmul.f32 %v5165, %v5032
          %v5174 = vadd.f32 %v5166, %v5047
          %v5175 = vadd.f32 %v5167, %v5051
          %v5176 = vadd.f32 %v5168, %v5047
          %v5177 = vadd.f32 %v5169, %v5051
          %v5178 = vadd.f32 %v5170, %v5047
          %v5179 = vadd.f32 %v5171, %v5051
          %v5180 = vadd.f32 %v5172, %v5047
          %v5181 = vadd.f32 %v5173, %v5051
          %v5182 = vmax.f32 %v5174, 0.0
          %v5183 = vmax.f32 %v5175, 0.0
          %v5184 = vmax.f32 %v5176, 0.0
          %v5185 = vmax.f32 %v5177, 0.0
          %v5186 = vmax.f32 %v5178, 0.0
          %v5187 = vmax.f32 %v5179, 0.0
          %v5188 = vmax.f32 %v5180, 0.0
          %v5189 = vmax.f32 %v5181, 0.0
          %5190 = vst [vmem:[#allocation3 + $0xc0] sm:$0xff] %v5182
          %5191 = vst [vmem:[#allocation3 + $0xc8] sm:$0xff] %v5183
          %5192 = vst [vmem:[#allocation3 + $0xd0] sm:$0xff] %v5184
          %5193 = vst [vmem:[#allocation3 + $0xd8] sm:$0xff] %v5185
          %5194 = vst [vmem:[#allocation3 + $0xe0] sm:$0xff] %v5186
          %5195 = vst [vmem:[#allocation3 + $0xe8] sm:$0xff] %v5187
          %5196 = vst [vmem:[#allocation3 + $0xf0] sm:$0xff] %v5188
          %5197 = vst [vmem:[#allocation3 + $0xf8] sm:$0xff] %v5189
          %v5198 = vld [vmem:[#allocation3] sm:$0xff]
          %v5199 = vld [vmem:[#allocation3 + $0x8] sm:$0xff]
          %v5200 = vld [vmem:[#allocation3 + $0x10] sm:$0xff]
          %v5201 = vld [vmem:[#allocation3 + $0x18] sm:$0xff]
          %v5202 = vld [vmem:[#allocation3 + $0x20] sm:$0xff]
          %v5203 = vld [vmem:[#allocation3 + $0x28] sm:$0xff]
          %v5204 = vld [vmem:[#allocation3 + $0x30] sm:$0xff]
          %v5205 = vld [vmem:[#allocation3 + $0x38] sm:$0xff]
          %v5206 = vld [vmem:[#allocation3 + $0x40] sm:$0xff]
          %v5207 = vld [vmem:[#allocation3 + $0x48] sm:$0xff]
          %v5208 = vld [vmem:[#allocation3 + $0x50] sm:$0xff]
          %v5209 = vld [vmem:[#allocation3 + $0x58] sm:$0xff]
          %v5210 = vld [vmem:[#allocation3 + $0x60] sm:$0xff]
          %v5211 = vld [vmem:[#allocation3 + $0x68] sm:$0xff]
          %v5212 = vld [vmem:[#allocation3 + $0x70] sm:$0xff]
          %v5213 = vld [vmem:[#allocation3 + $0x78] sm:$0xff]
          %v5214 = vld [vmem:[#allocation3 + $0x80] sm:$0xff]
          %v5215 = vld [vmem:[#allocation3 + $0x88] sm:$0xff]
          %v5216 = vld [vmem:[#allocation3 + $0x90] sm:$0xff]
          %v5217 = vld [vmem:[#allocation3 + $0x98] sm:$0xff]
          %v5218 = vld [vmem:[#allocation3 + $0xa0] sm:$0xff]
          %v5219 = vld [vmem:[#allocation3 + $0xa8] sm:$0xff]
          %v5220 = vld [vmem:[#allocation3 + $0xb0] sm:$0xff]
          %v5221 = vld [vmem:[#allocation3 + $0xb8] sm:$0xff]
          %v5222 = vld [vmem:[#allocation3 + $0xc0] sm:$0xff]
          %v5223 = vld [vmem:[#allocation3 + $0xc8] sm:$0xff]
          %v5224 = vld [vmem:[#allocation3 + $0xd0] sm:$0xff]
          %v5225 = vld [vmem:[#allocation3 + $0xd8] sm:$0xff]
          %v5226 = vld [vmem:[#allocation3 + $0xe0] sm:$0xff]
          %v5227 = vld [vmem:[#allocation3 + $0xe8] sm:$0xff]
          %v5228 = vld [vmem:[#allocation3 + $0xf0] sm:$0xff]
          %v5229 = vld [vmem:[#allocation3 + $0xf8] sm:$0xff]
          %v5230 = vpack.c.bf16 %v5200, %v5198
          %v5231 = vpack.c.bf16 %v5201, %v5199
          %v5232 = vpack.c.bf16 %v5204, %v5202
          %v5233 = vpack.c.bf16 %v5205, %v5203
          %v5234 = vpack.c.bf16 %v5208, %v5206
          %v5235 = vpack.c.bf16 %v5209, %v5207
          %v5236 = vpack.c.bf16 %v5212, %v5210
          %v5237 = vpack.c.bf16 %v5213, %v5211
          %v5238 = vpack.c.bf16 %v5216, %v5214
          %v5239 = vpack.c.bf16 %v5217, %v5215
          %v5240 = vpack.c.bf16 %v5220, %v5218
          %v5241 = vpack.c.bf16 %v5221, %v5219
          %v5242 = vpack.c.bf16 %v5224, %v5222
          %v5243 = vpack.c.bf16 %v5225, %v5223
          %v5244 = vpack.c.bf16 %v5228, %v5226
          %v5245 = vpack.c.bf16 %v5229, %v5227
          %v5246 = vld [vmem:[#allocation36] sm:$0xf]
          %v5247 = vld [vmem:[#allocation36 + $0x4] sm:$0xf]
          %v5248 = vld [vmem:[#allocation36 + $0x8] sm:$0xf]
          %v5249 = vld [vmem:[#allocation36 + $0xc] sm:$0xf]
          %v5250 = vld [vmem:[#allocation36 + $0x10] sm:$0xf]
          %v5251 = vld [vmem:[#allocation36 + $0x14] sm:$0xf]
          %v5252 = vld [vmem:[#allocation36 + $0x18] sm:$0xf]
          %v5253 = vld [vmem:[#allocation36 + $0x1c] sm:$0xf]
          %v5254 = vld [vmem:[#allocation36 + $0x20] sm:$0xf]
          %v5255 = vld [vmem:[#allocation36 + $0x24] sm:$0xf]
          %v5256 = vld [vmem:[#allocation36 + $0x28] sm:$0xf]
          %v5257 = vld [vmem:[#allocation36 + $0x2c] sm:$0xf]
          %v5258 = vld [vmem:[#allocation36 + $0x30] sm:$0xf]
          %v5259 = vld [vmem:[#allocation36 + $0x34] sm:$0xf]
          %v5260 = vld [vmem:[#allocation36 + $0x38] sm:$0xf]
          %v5261 = vld [vmem:[#allocation36 + $0x3c] sm:$0xf]
          %v5262 = vld [vmem:[#allocation36 + $0x40] sm:$0xf]
          %v5263 = vld [vmem:[#allocation36 + $0x44] sm:$0xf]
          %v5264 = vld [vmem:[#allocation36 + $0x48] sm:$0xf]
          %v5265 = vld [vmem:[#allocation36 + $0x4c] sm:$0xf]
          %v5266 = vld [vmem:[#allocation36 + $0x50] sm:$0xf]
          %v5267 = vld [vmem:[#allocation36 + $0x54] sm:$0xf]
          %v5268 = vld [vmem:[#allocation36 + $0x58] sm:$0xf]
          %v5269 = vld [vmem:[#allocation36 + $0x5c] sm:$0xf]
          %v5270 = vld [vmem:[#allocation36 + $0x60] sm:$0xf]
          %v5271 = vld [vmem:[#allocation36 + $0x64] sm:$0xf]
          %v5272 = vld [vmem:[#allocation36 + $0x68] sm:$0xf]
          %v5273 = vld [vmem:[#allocation36 + $0x6c] sm:$0xf]
          %v5274 = vld [vmem:[#allocation36 + $0x70] sm:$0xf]
          %v5275 = vld [vmem:[#allocation36 + $0x74] sm:$0xf]
          %v5276 = vld [vmem:[#allocation36 + $0x78] sm:$0xf]
          %v5277 = vld [vmem:[#allocation36 + $0x7c] sm:$0xf]
          %v5310 = vunpack.c.l.b16 %v5246
          %v5311 = vunpack.c.l.b16 %v5247
          %v5312 = vunpack.c.l.b16 %v5248
          %v5313 = vunpack.c.l.b16 %v5249
          %v5314 = vunpack.c.l.b16 %v5250
          %v5315 = vunpack.c.l.b16 %v5251
          %v5316 = vunpack.c.l.b16 %v5252
          %v5317 = vunpack.c.l.b16 %v5253
          %v5318 = vunpack.c.l.b16 %v5254
          %v5319 = vunpack.c.l.b16 %v5255
          %v5320 = vunpack.c.l.b16 %v5256
          %v5321 = vunpack.c.l.b16 %v5257
          %v5322 = vunpack.c.l.b16 %v5258
          %v5323 = vunpack.c.l.b16 %v5259
          %v5324 = vunpack.c.l.b16 %v5260
          %v5325 = vunpack.c.l.b16 %v5261
          %v5326 = vunpack.c.l.b16 %v5262
          %v5327 = vunpack.c.l.b16 %v5263
          %v5328 = vunpack.c.l.b16 %v5264
          %v5329 = vunpack.c.l.b16 %v5265
          %v5330 = vunpack.c.l.b16 %v5266
          %v5331 = vunpack.c.l.b16 %v5267
          %v5332 = vunpack.c.l.b16 %v5268
          %v5333 = vunpack.c.l.b16 %v5269
          %v5334 = vunpack.c.l.b16 %v5270
          %v5335 = vunpack.c.l.b16 %v5271
          %v5336 = vunpack.c.l.b16 %v5272
          %v5337 = vunpack.c.l.b16 %v5273
          %v5338 = vunpack.c.l.b16 %v5274
          %v5339 = vunpack.c.l.b16 %v5275
          %v5340 = vunpack.c.l.b16 %v5276
          %v5341 = vunpack.c.l.b16 %v5277
          %v5342 = vpack.c.b16 %v5311, %v5310
          %v5343 = vpack.c.b16 %v5313, %v5312
          %v5344 = vpack.c.b16 %v5315, %v5314
          %v5345 = vpack.c.b16 %v5317, %v5316
          %v5346 = vpack.c.b16 %v5319, %v5318
          %v5347 = vpack.c.b16 %v5321, %v5320
          %v5348 = vpack.c.b16 %v5323, %v5322
          %v5349 = vpack.c.b16 %v5325, %v5324
          %v5350 = vpack.c.b16 %v5327, %v5326
          %v5351 = vpack.c.b16 %v5329, %v5328
          %v5352 = vpack.c.b16 %v5331, %v5330
          %v5353 = vpack.c.b16 %v5333, %v5332
          %v5354 = vpack.c.b16 %v5335, %v5334
          %v5355 = vpack.c.b16 %v5337, %v5336
          %v5356 = vpack.c.b16 %v5339, %v5338
          %v5357 = vpack.c.b16 %v5341, %v5340
          %5374 = vmatprep.subr.bf16.mxu0 0
          %5375 = vmatpush1.bf16.msra.mxu0 %v5342
          %5376 = vmatprep.subr.bf16.mxu0 0
          %5377 = vmatpush1.bf16.msra.mxu0 %v5343
          %5378 = vmatprep.subr.bf16.mxu0 0
          %5379 = vmatpush1.bf16.msra.mxu0 %v5344
          %5380 = vmatprep.subr.bf16.mxu0 0
          %5381 = vmatpush1.bf16.msra.mxu0 %v5345
          %5382 = vmatprep.subr.bf16.mxu0 0
          %5383 = vmatpush1.bf16.msra.mxu0 %v5346
          %5384 = vmatprep.subr.bf16.mxu0 0
          %5385 = vmatpush1.bf16.msra.mxu0 %v5347
          %5386 = vmatprep.subr.bf16.mxu0 0
          %5387 = vmatpush1.bf16.msra.mxu0 %v5348
          %5388 = vmatprep.subr.bf16.mxu0 0
          %5389 = vmatpush1.bf16.msra.mxu0 %v5349
          %5390 = vmatprep.subr.bf16.mxu0 0
          %5391 = vmatpush1.bf16.msra.mxu0 %v5350
          %5392 = vmatprep.subr.bf16.mxu0 0
          %5393 = vmatpush1.bf16.msra.mxu0 %v5351
          %5394 = vmatprep.subr.bf16.mxu0 0
          %5395 = vmatpush1.bf16.msra.mxu0 %v5352
          %5396 = vmatprep.subr.bf16.mxu0 0
          %5397 = vmatpush1.bf16.msra.mxu0 %v5353
          %5398 = vmatprep.subr.bf16.mxu0 0
          %5399 = vmatpush1.bf16.msra.mxu0 %v5354
          %5400 = vmatprep.subr.bf16.mxu0 0
          %5401 = vmatpush1.bf16.msra.mxu0 %v5355
          %5402 = vmatprep.subr.bf16.mxu0 0
          %5403 = vmatpush1.bf16.msra.mxu0 %v5356
          %5404 = vmatprep.subr.bf16.mxu0 0
          %5405 = vmatpush1.bf16.msra.mxu0 %v5357
          %5406 = vmatprep.mubr.bf16.mxu0 %v5231
          %5407 = vmatmul.mubr.bf16.gmra.mrb[0].mxu0 %v5230
          %v5408 = vpop.f32.mrb[0].mxu0
          %v5409 = vadd.f32 0.0, %v5408
          %v5410 = vpop.f32.mrb[0].mxu0
          %v5411 = vpop.f32.mrb[0].mxu0
          %v5412 = vadd.f32 0.0, %v5411
          %v5413 = vpop.f32.mrb[0].mxu0
          %5414 = vmatprep.mubr.bf16.mxu0 %v5233
          %5415 = vmatmul.mubr.bf16.gmra.mrb[0].mxu0 %v5232
          %v5416 = vpop.f32.mrb[0].mxu0
          %v5417 = vadd.f32 0.0, %v5416
          %v5418 = vpop.f32.mrb[0].mxu0
          %v5419 = vpop.f32.mrb[0].mxu0
          %v5420 = vadd.f32 0.0, %v5419
          %v5421 = vpop.f32.mrb[0].mxu0
          %5422 = vmatprep.mubr.bf16.mxu0 %v5235
          %5423 = vmatmul.mubr.bf16.gmra.mrb[0].mxu0 %v5234
          %v5424 = vpop.f32.mrb[0].mxu0
          %v5425 = vadd.f32 0.0, %v5424
          %v5426 = vpop.f32.mrb[0].mxu0
          %v5427 = vpop.f32.mrb[0].mxu0
          %v5428 = vadd.f32 0.0, %v5427
          %v5429 = vpop.f32.mrb[0].mxu0
          %5430 = vmatprep.mubr.bf16.mxu0 %v5237
          %5431 = vmatmul.mubr.bf16.gmra.mrb[0].mxu0 %v5236
          %v5432 = vpop.f32.mrb[0].mxu0
          %v5433 = vadd.f32 0.0, %v5432
          %v5434 = vpop.f32.mrb[0].mxu0
          %v5435 = vpop.f32.mrb[0].mxu0
          %v5436 = vadd.f32 0.0, %v5435
          %v5437 = vpop.f32.mrb[0].mxu0
          %5438 = vmatprep.mubr.bf16.mxu0 %v5239
          %5439 = vmatmul.mubr.bf16.gmra.mrb[0].mxu0 %v5238
          %v5440 = vpop.f32.mrb[0].mxu0
          %v5441 = vadd.f32 0.0, %v5440
          %v5442 = vpop.f32.mrb[0].mxu0
          %v5443 = vpop.f32.mrb[0].mxu0
          %v5444 = vadd.f32 0.0, %v5443
          %v5445 = vpop.f32.mrb[0].mxu0
          %5446 = vmatprep.mubr.bf16.mxu0 %v5241
          %5447 = vmatmul.mubr.bf16.gmra.mrb[0].mxu0 %v5240
          %v5448 = vpop.f32.mrb[0].mxu0
          %v5449 = vadd.f32 0.0, %v5448
          %v5450 = vpop.f32.mrb[0].mxu0
          %v5451 = vpop.f32.mrb[0].mxu0
          %v5452 = vadd.f32 0.0, %v5451
          %v5453 = vpop.f32.mrb[0].mxu0
          %5454 = vmatprep.mubr.bf16.mxu0 %v5243
          %5455 = vmatmul.mubr.bf16.gmra.mrb[0].mxu0 %v5242
          %v5456 = vpop.f32.mrb[0].mxu0
          %v5457 = vadd.f32 0.0, %v5456
          %v5458 = vpop.f32.mrb[0].mxu0
          %v5459 = vpop.f32.mrb[0].mxu0
          %v5460 = vadd.f32 0.0, %v5459
          %v5461 = vpop.f32.mrb[0].mxu0
          %5462 = vmatprep.mubr.bf16.mxu0 %v5245
          %5463 = vmatmul.mubr.bf16.gmra.mrb[0].mxu0 %v5244
          %v5464 = vpop.f32.mrb[0].mxu0
          %v5465 = vadd.f32 0.0, %v5464
          %v5466 = vpop.f32.mrb[0].mxu0
          %v5467 = vpop.f32.mrb[0].mxu0
          %v5468 = vadd.f32 0.0, %v5467
          %v5469 = vpop.f32.mrb[0].mxu0
          %5470 = vdwg.mxu0
          %v5471 = vld [vmem:[#allocation38] sm:$0x1]
          %v5473 = vlaneseq
          %v5474 = vshrl.u32 %v5473, 7
          %v5475 = vsub.s32 0, %v5474
          %v5476 = vrot.slane %v5471, %v5475
          %v5478 = vmul.f32 %v5409, %v5476
          %v5479 = vmul.f32 %v5412, %v5476
          %v5480 = vmul.f32 %v5417, %v5476
          %v5481 = vmul.f32 %v5420, %v5476
          %v5482 = vmul.f32 %v5425, %v5476
          %v5483 = vmul.f32 %v5428, %v5476
          %v5484 = vmul.f32 %v5433, %v5476
          %v5485 = vmul.f32 %v5436, %v5476
          %v5486 = vmul.f32 %v5441, %v5476
          %v5487 = vmul.f32 %v5444, %v5476
          %v5488 = vmul.f32 %v5449, %v5476
          %v5489 = vmul.f32 %v5452, %v5476
          %v5490 = vmul.f32 %v5457, %v5476
          %v5491 = vmul.f32 %v5460, %v5476
          %v5492 = vmul.f32 %v5465, %v5476
          %v5493 = vmul.f32 %v5468, %v5476
          %v5494 = vld [vmem:[#allocation39] sm:$0x1]
          %v5496 = vlaneseq
          %v5497 = vshrl.u32 %v5496, 7
          %v5498 = vsub.s32 0, %v5497
          %v5499 = vrot.slane %v5494, %v5498
          %v5501 = vadd.f32 %v5478, %v5499
          %v5502 = vadd.f32 %v5479, %v5499
          %v5503 = vadd.f32 %v5480, %v5499
          %v5504 = vadd.f32 %v5481, %v5499
          %v5505 = vadd.f32 %v5482, %v5499
          %v5506 = vadd.f32 %v5483, %v5499
          %v5507 = vadd.f32 %v5484, %v5499
          %v5508 = vadd.f32 %v5485, %v5499
          %v5509 = vadd.f32 %v5486, %v5499
          %v5510 = vadd.f32 %v5487, %v5499
          %v5511 = vadd.f32 %v5488, %v5499
          %v5512 = vadd.f32 %v5489, %v5499
          %v5513 = vadd.f32 %v5490, %v5499
          %v5514 = vadd.f32 %v5491, %v5499
          %v5515 = vadd.f32 %v5492, %v5499
          %v5516 = vadd.f32 %v5493, %v5499
          %v5517 = vmax.f32 %v5501, 0.0
          %v5518 = vmax.f32 %v5502, 0.0
          %v5519 = vmax.f32 %v5503, 0.0
          %v5520 = vmax.f32 %v5504, 0.0
          %v5521 = vmax.f32 %v5505, 0.0
          %v5522 = vmax.f32 %v5506, 0.0
          %v5523 = vmax.f32 %v5507, 0.0
          %v5524 = vmax.f32 %v5508, 0.0
          %v5525 = vmax.f32 %v5509, 0.0
          %v5526 = vmax.f32 %v5510, 0.0
          %v5527 = vmax.f32 %v5511, 0.0
          %v5528 = vmax.f32 %v5512, 0.0
          %v5529 = vmax.f32 %v5513, 0.0
          %v5530 = vmax.f32 %v5514, 0.0
          %v5531 = vmax.f32 %v5515, 0.0
          %v5532 = vmax.f32 %v5516, 0.0
          %v5533 = vpack.c.bf16 %v5518, %v5517
          %v5534 = vpack.c.bf16 %v5520, %v5519
          %v5535 = vpack.c.bf16 %v5522, %v5521
          %v5536 = vpack.c.bf16 %v5524, %v5523
          %v5537 = vpack.c.bf16 %v5526, %v5525
          %v5538 = vpack.c.bf16 %v5528, %v5527
          %v5539 = vpack.c.bf16 %v5530, %v5529
          %v5540 = vpack.c.bf16 %v5532, %v5531
          %v5541 = vld [vmem:[#allocation41] sm:$0xf]
          %v5542 = vld [vmem:[#allocation41 + $0x4] sm:$0xf]
          %v5543 = vld [vmem:[#allocation41 + $0x8] sm:$0xf]
          %v5544 = vld [vmem:[#allocation41 + $0xc] sm:$0xf]
          %v5545 = vld [vmem:[#allocation41 + $0x10] sm:$0xf]
          %v5546 = vld [vmem:[#allocation41 + $0x14] sm:$0xf]
          %v5547 = vld [vmem:[#allocation41 + $0x18] sm:$0xf]
          %v5548 = vld [vmem:[#allocation41 + $0x1c] sm:$0xf]
          %v5549 = vld [vmem:[#allocation41 + $0x20] sm:$0xf]
          %v5550 = vld [vmem:[#allocation41 + $0x24] sm:$0xf]
          %v5551 = vld [vmem:[#allocation41 + $0x28] sm:$0xf]
          %v5552 = vld [vmem:[#allocation41 + $0x2c] sm:$0xf]
          %v5553 = vld [vmem:[#allocation41 + $0x30] sm:$0xf]
          %v5554 = vld [vmem:[#allocation41 + $0x34] sm:$0xf]
          %v5555 = vld [vmem:[#allocation41 + $0x38] sm:$0xf]
          %v5556 = vld [vmem:[#allocation41 + $0x3c] sm:$0xf]
          %v5557 = vld [vmem:[#allocation42] sm:$0x1]
          %v5559 = vlaneseq
          %v5560 = vshrl.u32 %v5559, 7
          %v5561 = vsub.s32 0, %v5560
          %v5562 = vrot.slane %v5557, %v5561
          %v5580 = vunpack.c.l.b16 %v5541
          %v5581 = vunpack.c.l.b16 %v5542
          %v5582 = vunpack.c.l.b16 %v5543
          %v5583 = vunpack.c.l.b16 %v5544
          %v5584 = vunpack.c.l.b16 %v5545
          %v5585 = vunpack.c.l.b16 %v5546
          %v5586 = vunpack.c.l.b16 %v5547
          %v5587 = vunpack.c.l.b16 %v5548
          %v5588 = vunpack.c.l.b16 %v5549
          %v5589 = vunpack.c.l.b16 %v5550
          %v5590 = vunpack.c.l.b16 %v5551
          %v5591 = vunpack.c.l.b16 %v5552
          %v5592 = vunpack.c.l.b16 %v5553
          %v5593 = vunpack.c.l.b16 %v5554
          %v5594 = vunpack.c.l.b16 %v5555
          %v5595 = vunpack.c.l.b16 %v5556
          %v5596 = vpack.c.b16 %v5581, %v5580
          %v5597 = vpack.c.b16 %v5583, %v5582
          %v5598 = vpack.c.b16 %v5585, %v5584
          %v5599 = vpack.c.b16 %v5587, %v5586
          %v5600 = vpack.c.b16 %v5589, %v5588
          %v5601 = vpack.c.b16 %v5591, %v5590
          %v5602 = vpack.c.b16 %v5593, %v5592
          %v5603 = vpack.c.b16 %v5595, %v5594
          %5612 = vmatprep.subr.bf16.mxu0 0
          %5613 = vmatpush1.bf16.msra.mxu0 %v5596
          %5614 = vmatprep.subr.bf16.mxu0 0
          %5615 = vmatpush1.bf16.msra.mxu0 %v5597
          %5616 = vmatprep.subr.bf16.mxu0 0
          %5617 = vmatpush1.bf16.msra.mxu0 %v5598
          %5618 = vmatprep.subr.bf16.mxu0 0
          %5619 = vmatpush1.bf16.msra.mxu0 %v5599
          %5620 = vmatprep.subr.bf16.mxu0 0
          %5621 = vmatpush1.bf16.msra.mxu0 %v5600
          %5622 = vmatprep.subr.bf16.mxu0 0
          %5623 = vmatpush1.bf16.msra.mxu0 %v5601
          %5624 = vmatprep.subr.bf16.mxu0 0
          %5625 = vmatpush1.bf16.msra.mxu0 %v5602
          %5626 = vmatprep.subr.bf16.mxu0 0
          %5627 = vmatpush1.bf16.msra.mxu0 %v5603
          %5628 = vmatprep.subr.bf16.mxu0 0
          %5629 = vmatpush1.bf16.msra.mxu0 0
          %5630 = vmatprep.subr.bf16.mxu0 0
          %5631 = vmatpush1.bf16.msra.mxu0 0
          %5632 = vmatprep.subr.bf16.mxu0 0
          %5633 = vmatpush1.bf16.msra.mxu0 0
          %5634 = vmatprep.subr.bf16.mxu0 0
          %5635 = vmatpush1.bf16.msra.mxu0 0
          %5636 = vmatprep.subr.bf16.mxu0 0
          %5637 = vmatpush1.bf16.msra.mxu0 0
          %5638 = vmatprep.subr.bf16.mxu0 0
          %5639 = vmatpush1.bf16.msra.mxu0 0
          %5640 = vmatprep.subr.bf16.mxu0 0
          %5641 = vmatpush1.bf16.msra.mxu0 0
          %5642 = vmatprep.subr.bf16.mxu0 0
          %5643 = vmatpush1.bf16.msra.mxu0 0
          %5644 = vmatprep.mubr.bf16.mxu0 0
          %5645 = vmatmul.mubr.bf16.gmra.mrb[0].mxu0 %v5533
          %v5646 = vpop.f32.mrb[0].mxu0
          %v5647 = vadd.f32 %v5562, %v5646
          %v5648 = vpop.f32.mrb[0].mxu0
          %v5649 = vpop.f32.mrb[0].mxu0
          %v5650 = vadd.f32 %v5562, %v5649
          %v5651 = vpop.f32.mrb[0].mxu0
          %5652 = vmatprep.mubr.bf16.mxu0 0
          %5653 = vmatmul.mubr.bf16.gmra.mrb[0].mxu0 %v5534
          %v5654 = vpop.f32.mrb[0].mxu0
          %v5655 = vadd.f32 %v5562, %v5654
          %v5656 = vpop.f32.mrb[0].mxu0
          %v5657 = vpop.f32.mrb[0].mxu0
          %v5658 = vadd.f32 %v5562, %v5657
          %v5659 = vpop.f32.mrb[0].mxu0
          %5660 = vmatprep.mubr.bf16.mxu0 0
          %5661 = vmatmul.mubr.bf16.gmra.mrb[0].mxu0 %v5535
          %v5662 = vpop.f32.mrb[0].mxu0
          %v5663 = vadd.f32 %v5562, %v5662
          %v5664 = vpop.f32.mrb[0].mxu0
          %v5665 = vpop.f32.mrb[0].mxu0
          %v5666 = vadd.f32 %v5562, %v5665
          %v5667 = vpop.f32.mrb[0].mxu0
          %5668 = vmatprep.mubr.bf16.mxu0 0
          %5669 = vmatmul.mubr.bf16.gmra.mrb[0].mxu0 %v5536
          %v5670 = vpop.f32.mrb[0].mxu0
          %v5671 = vadd.f32 %v5562, %v5670
          %v5672 = vpop.f32.mrb[0].mxu0
          %v5673 = vpop.f32.mrb[0].mxu0
          %v5674 = vadd.f32 %v5562, %v5673
          %v5675 = vpop.f32.mrb[0].mxu0
          %5676 = vmatprep.mubr.bf16.mxu0 0
          %5677 = vmatmul.mubr.bf16.gmra.mrb[0].mxu0 %v5537
          %v5678 = vpop.f32.mrb[0].mxu0
          %v5679 = vadd.f32 %v5562, %v5678
          %v5680 = vpop.f32.mrb[0].mxu0
          %v5681 = vpop.f32.mrb[0].mxu0
          %v5682 = vadd.f32 %v5562, %v5681
          %v5683 = vpop.f32.mrb[0].mxu0
          %5684 = vmatprep.mubr.bf16.mxu0 0
          %5685 = vmatmul.mubr.bf16.gmra.mrb[0].mxu0 %v5538
          %v5686 = vpop.f32.mrb[0].mxu0
          %v5687 = vadd.f32 %v5562, %v5686
          %v5688 = vpop.f32.mrb[0].mxu0
          %v5689 = vpop.f32.mrb[0].mxu0
          %v5690 = vadd.f32 %v5562, %v5689
          %v5691 = vpop.f32.mrb[0].mxu0
          %5692 = vmatprep.mubr.bf16.mxu0 0
          %5693 = vmatmul.mubr.bf16.gmra.mrb[0].mxu0 %v5539
          %v5694 = vpop.f32.mrb[0].mxu0
          %v5695 = vadd.f32 %v5562, %v5694
          %v5696 = vpop.f32.mrb[0].mxu0
          %v5697 = vpop.f32.mrb[0].mxu0
          %v5698 = vadd.f32 %v5562, %v5697
          %v5699 = vpop.f32.mrb[0].mxu0
          %5700 = vmatprep.mubr.bf16.mxu0 0
          %5701 = vmatmul.mubr.bf16.gmra.mrb[0].mxu0 %v5540
          %v5702 = vpop.f32.mrb[0].mxu0
          %v5703 = vadd.f32 %v5562, %v5702
          %v5704 = vpop.f32.mrb[0].mxu0
          %v5705 = vpop.f32.mrb[0].mxu0
          %v5706 = vadd.f32 %v5562, %v5705
          %v5707 = vpop.f32.mrb[0].mxu0
          %5708 = vdwg.mxu0
          %5709 = vst [vmem:[%s28] sm:$0xff] %v5647
          %5710 = vst [vmem:[%s28 + $0x8] sm:$0xff] %v5650
          %5711 = vst [vmem:[%s28 + $0x10] sm:$0xff] %v5655
          %5712 = vst [vmem:[%s28 + $0x18] sm:$0xff] %v5658
          %5713 = vst [vmem:[%s28 + $0x20] sm:$0xff] %v5663
          %5714 = vst [vmem:[%s28 + $0x28] sm:$0xff] %v5666
          %5715 = vst [vmem:[%s28 + $0x30] sm:$0xff] %v5671
          %5716 = vst [vmem:[%s28 + $0x38] sm:$0xff] %v5674
          %5717 = vst [vmem:[%s28 + $0x40] sm:$0xff] %v5679
          %5718 = vst [vmem:[%s28 + $0x48] sm:$0xff] %v5682
          %5719 = vst [vmem:[%s28 + $0x50] sm:$0xff] %v5687
          %5720 = vst [vmem:[%s28 + $0x58] sm:$0xff] %v5690
          %5721 = vst [vmem:[%s28 + $0x60] sm:$0xff] %v5695
          %5722 = vst [vmem:[%s28 + $0x68] sm:$0xff] %v5698
          %5723 = vst [vmem:[%s28 + $0x70] sm:$0xff] %v5703
          %5724 = vst [vmem:[%s28 + $0x78] sm:$0xff] %v5706
        $region244: #{pointr_forward.1} parent=131 // pred_fallthru
          _
        // Predicated region
        $region245: #{pointr_forward.1} parent=131 // pred_check
          %p5725 = pneg %p680
        $region246: #{pointr_forward.1} parent=131 // pred_check_branch
          %5727 = sbr.rel (%p5725) target = $region248
        $region247: #{pointr_forward.1} parent=131 // pred_region
          _
        $region248: #{pointr_forward.1} parent=131 // pred_fallthru
          _
        // Predicated region
        $region249: #{pointr_forward.1} parent=131 // pred_check
          %p5728 = pneg %p680
        $region250: #{pointr_forward.1} parent=131 // pred_check_branch
          %5730 = sbr.rel (%p5728) target = $region252
        $region251: #{pointr_forward.1} parent=131 // pred_region
          _
        $region252: #{pointr_forward.1} parent=131 // pred_fallthru
          _
      $region132: #{pointr_forward.1} parent=5 // pred_fallthru
        _
      %p5731 = scmp.le.s32.totalorder 2, %s54
      // Predicated region
      $region253: #{pointr_forward.1} parent=5 // pred_check
        %p5732 = pneg %p5731
      $region254: #{pointr_forward.1} parent=5 // pred_check_branch
        %5734 = sbr.rel (%p5732) target = $region256
      $region255: #{pointr_forward.1} parent=5 // pred_region
        %s5735 = ssub.s32 %s54, 2
      $region256: #{pointr_forward.1} parent=5 // pred_fallthru
        _
    $region6: #{pointr_forward.1} parent=1 // loop_footer
      %s58 = sadd.s32 1, %s54
    $region7: #{pointr_forward.1} parent=1 // loop_footer_branch
      %53 = sbr.rel target = $region3
    $region8: #{pointr_forward.1} parent=1 // loop_exit
      _
    %5736 = vsyncpa [#allocation5], 1
    %s5737 = scalar_lea.sflag [#allocation5], 1
    %5738 = vsyncpa %s5737, 1
    %5739 = vsyncpa [#allocation7], 1
    %s5740 = scalar_lea.sflag [#allocation7], 1
    %5741 = vsyncpa %s5740, 1
    %5742 = vsyncpa [#allocation10], 1
    %s5743 = scalar_lea.sflag [#allocation10], 1
    %5744 = vsyncpa %s5743, 1
    %5745 = vsyncpa [#allocation13], 1
    %5746 = vsyncpa [#allocation16], 1
    %5747 = vsyncpa [#allocation19], 1
    %5748 = vsyncpa [#allocation22], 1
    %5749 = vsyncpa [#allocation25], 1
    %5750 = vsyncpa [#allocation28], 1
    %5751 = vsyncpa [#allocation31], 1
    %5752 = vsyncpa [#allocation34], 1
    %5753 = vsyncpa [#allocation37], 1
    %5754 = vsyncpa [#allocation40], 1
    %5755 = vsyncpa [#allocation43], 1

</llo_original>
